<compile_context>
chip_gen: v5e
topology: v5e:2x2
jax: 0.10.0
libtpu: 0.0.40
codegen_flags: <defaults>
</compile_context>

<pallas_src>
import functools

import jax
import jax.numpy as jnp
from jax import lax
from jax.experimental import pallas as pl
from jax.experimental.pallas import tpu as pltpu


# ----------------------------- fused kernel ---------------------------------
def _dqn_fused_kernel(x_ref, w1_ref, b1_ref, w2_ref, b2_ref,
                      wf_ref, bf_ref, wo_ref, bo_ref, o_ref,
                      xp_ref, a1p_ref, patches_ref, flat_ref, *, H, W):
    # x_ref:       (1, H, W, 1)      one batch element (Cin == 1)
    # w1_ref:      (9, C1)           conv1 taps (kh*3+kw major)
    # w2_ref:      (9*C1, C2)        conv2 im2col weights
    # wf_ref:      (H*W*C2, 128)     fc1 weight, rows pre-permuted to (h,w,c)
    # wo_ref:      (1, 128)          output-head weight (transposed)
    # o_ref:       (1, 1, 128)       lane-dense output block (value broadcast)
    # scratch: xp (H+2,W+2,1), a1p (H+2,W+2,C1), patches (H*W,9*C1), flat (1,F)
    HW = H * W
    C1 = w1_ref.shape[1]
    C2 = w2_ref.shape[1]

    # ---- conv1 (Cin=1): in-kernel zero padding + 9 VPU broadcast MACs -------
    xp_ref[...] = jnp.zeros_like(xp_ref)
    xp_ref[1:H + 1, 1:W + 1, :] = x_ref[0]            # interior <- input tile
    w1 = w1_ref[...]                                  # (9, C1)
    a1 = jnp.zeros((H, W, C1), jnp.float32)
    for k in range(9):
        dh, dw = k // 3, k % 3
        tap = xp_ref[dh:dh + H, dw:dw + W, :]         # (H, W, 1)
        a1 = a1 + tap * w1[k:k + 1, :]                # broadcast -> (H, W, C1)
    a1 = jnp.maximum(a1 + b1_ref[...], 0.0)           # (H, W, C1)

    # ---- conv2: pad a1 in VMEM, lane-dense im2col, one K=9*C1 MXU matmul ----
    a1p_ref[...] = jnp.zeros_like(a1p_ref)
    a1p_ref[1:H + 1, 1:W + 1, :] = a1
    for k in range(9):
        dh, dw = k // 3, k % 3
        patches_ref[:, k * C1:(k + 1) * C1] = (
            a1p_ref[dh:dh + H, dw:dw + W, :].reshape(HW, C1))
    a2 = jnp.dot(patches_ref[...], w2_ref[...],
                 preferred_element_type=jnp.float32)
    a2 = jnp.maximum(a2 + b2_ref[...], 0.0)           # (HW, C2)

    # ---- flatten in (h, w, c)-major order into one VMEM row -----------------
    # (fc1 weight rows were pre-permuted to this order, so no transpose needed)
    for p in range(HW):
        flat_ref[:, p * C2:(p + 1) * C2] = a2[p:p + 1, :]

    # ---- fc1 + ReLU ----------------------------------------------------------
    # TODO(synk): for large inputs (e.g. 84x84 frames) the fc1 weight should be
    # K-tiled over a grid axis with an accumulator; at these shapes it fits VMEM.
    h = jnp.dot(flat_ref[...], wf_ref[...], preferred_element_type=jnp.float32)
    h = jnp.maximum(h + bf_ref[...], 0.0)             # (1, 128)

    # ---- output head: VPU multiply + lane reduce (avoid N=1 MXU matmul) -----
    val = jnp.sum(h * wo_ref[...], axis=-1, keepdims=True) + bo_ref[...]  # (1,1)
    o_ref[...] = jnp.broadcast_to(val, (1, 128)).reshape(1, 1, 128)


# ----------------------------- weight prep ----------------------------------
def prepare_params(params, H, W):
    """One-time (out of the hot path) repack of the PyTorch-style weights."""
    C1 = params["w_conv1"].shape[-1]
    C2 = params["w_conv2"].shape[-1]
    F = C2 * H * W
    nf = params["w_fc1"].shape[-1]
    # fc1 rows are in torch's NCHW flatten order (c, h, w); permute once to
    # (h, w, c) so the NHWC activation flattens with a free reshape.
    wf = (params["w_fc1"].reshape(C2, H, W, nf)
          .transpose(1, 2, 0, 3).reshape(F, nf))
    return {
        "w1": params["w_conv1"].reshape(9, C1),          # HWIO -> (kh*3+kw, C1)
        "b1": params["b_conv1"].reshape(1, C1),
        "w2": params["w_conv2"].reshape(9 * C1, C2),     # (tap*C1+cin, C2)
        "b2": params["b_conv2"].reshape(1, C2),
        "wf": wf,
        "bf": params["b_fc1"].reshape(1, -1),
        "wo": params["w_out"].reshape(1, -1),            # (1, 128)
        "bo": params["b_out"].reshape(1, 1),
    }


# ------------------------------ full forward --------------------------------
def dqn_forward(x_nchw, prep):
    # x_nchw: (B, 1, H, W) float32 — same layout as the PyTorch module's input
    B, Cin, H, W = x_nchw.shape
    assert Cin == 1, "DQN's conv1 expects in_channels == 1"
    HW = H * W
    C1 = prep["w1"].shape[1]
    C2 = prep["w2"].shape[1]
    F = HW * C2

    x4 = x_nchw.reshape(B, H, W, 1)          # free reshape (Cin == 1)
    kernel = functools.partial(_dqn_fused_kernel, H=H, W=W)

    out3 = pl.pallas_call(
        kernel,
        out_shape=jax.ShapeDtypeStruct((B, 1, 128), jnp.float32),
        grid_spec=pltpu.PrefetchScalarGridSpec(
            num_scalar_prefetch=0,
            grid=(B,),
            in_specs=[
                pl.BlockSpec((1, H, W, 1), lambda b: (b, 0, 0, 0)),
                pl.BlockSpec((9, C1), lambda b: (0, 0)),
                pl.BlockSpec((1, C1), lambda b: (0, 0)),
                pl.BlockSpec((9 * C1, C2), lambda b: (0, 0)),
                pl.BlockSpec((1, C2), lambda b: (0, 0)),
                pl.BlockSpec((F, 128), lambda b: (0, 0)),
                pl.BlockSpec((1, 128), lambda b: (0, 0)),
                pl.BlockSpec((1, 128), lambda b: (0, 0)),
                pl.BlockSpec((1, 1), lambda b: (0, 0)),
            ],
            out_specs=pl.BlockSpec((1, 1, 128), lambda b: (b, 0, 0)),
            scratch_shapes=[
                pltpu.VMEM((H + 2, W + 2, 1), jnp.float32),    # padded input
                pltpu.VMEM((H + 2, W + 2, C1), jnp.float32),   # padded conv1 act
                pltpu.VMEM((HW, 9 * C1), jnp.float32),         # conv2 im2col
                pltpu.VMEM((1, F), jnp.float32),               # flattened features
            ],
        ),
        compiler_params=pltpu.CompilerParams(
            dimension_semantics=("parallel",),      # 2 grid steps -> both TCs on v7x
            vmem_limit_bytes=32 * 1024 * 1024),
    )(x4, prep["w1"], prep["b1"], prep["w2"], prep["b2"],
      prep["wf"], prep["bf"], prep["wo"], prep["bo"])

    return out3[:, 0, :1]                     # (B, 1)


# ------------------------------ JAX reference --------------------------------
def dqn_forward_ref(x_nchw, params):
    x = jnp.transpose(x_nchw, (0, 2, 3, 1))

    def conv(x, w, b):
        y = lax.conv_general_dilated(
            x, w, window_strides=(1, 1), padding="SAME",
            dimension_numbers=("NHWC", "HWIO", "NHWC"))
        return jax.nn.relu(y + b)

    x = conv(x, params["w_conv1"], params["b_conv1"])
    x = conv(x, params["w_conv2"], params["b_conv2"])
    B, H, W, C = x.shape
    xf = jnp.transpose(x, (0, 3, 1, 2)).reshape(B, C * H * W)  # torch NCHW flatten
    h = jax.nn.relu(xf @ params["w_fc1"] + params["b_fc1"])
    return h @ params["w_out"] + params["b_out"]


if __name__ == "__main__":
    key = jax.random.PRNGKey(0)
    B, Cin, H, W = 2, 1, 8, 8            # conv1 expects in_channels=1
    F = 64 * H * W                       # flattened_size after conv2 (same pad)

    ks = jax.random.split(key, 9)
    params = {
        "w_conv1": jax.random.normal(ks[0], (3, 3, 1, 32), jnp.float32) * 0.10,
        "b_conv1": jax.random.normal(ks[1], (32,), jnp.float32) * 0.10,
        "w_conv2": jax.random.normal(ks[2], (3, 3, 32, 64), jnp.float32) * 0.05,
        "b_conv2": jax.random.normal(ks[3], (64,), jnp.float32) * 0.05,
        "w_fc1":   jax.random.normal(ks[4], (F, 128), jnp.float32) * 0.02,
        "b_fc1":   jax.random.normal(ks[5], (128,), jnp.float32) * 0.02,
        "w_out":   jax.random.normal(ks[6], (128, 1), jnp.float32) * 0.05,
        "b_out":   jax.random.normal(ks[7], (1,), jnp.float32) * 0.05,
    }
    x = jax.random.normal(ks[8], (B, Cin, H, W), jnp.float32)

    prep = prepare_params(params, H, W)      # one-time weight repack/permute

    out = jax.block_until_ready(dqn_forward(x, prep))
    ref = jax.block_until_ready(dqn_forward_ref(x, params))

    assert out.shape == (B, 1), out.shape
    assert jnp.allclose(out, ref, atol=1e-4, rtol=1e-4), (out, ref)
    print("KERNEL_OK")
</pallas_src>

<mosaic_0001>
module attributes {stable_mosaic.version = 11 : i64} {
  func.func @_dqn_fused_kernel(%arg0: i32, %arg1: memref<1x8x8x1xf32, #tpu.memory_space<vmem>>, %arg2: memref<9x32xf32, #tpu.memory_space<vmem>>, %arg3: memref<1x32xf32, #tpu.memory_space<vmem>>, %arg4: memref<288x64xf32, #tpu.memory_space<vmem>>, %arg5: memref<1x64xf32, #tpu.memory_space<vmem>>, %arg6: memref<4096x128xf32, #tpu.memory_space<vmem>>, %arg7: memref<1x128xf32, #tpu.memory_space<vmem>>, %arg8: memref<1x128xf32, #tpu.memory_space<vmem>>, %arg9: memref<1x1xf32, #tpu.memory_space<vmem>>, %arg10: memref<1x1x128xf32, #tpu.memory_space<vmem>>, %arg11: memref<10x10x1xf32, #tpu.memory_space<vmem>>, %arg12: memref<10x10x32xf32, #tpu.memory_space<vmem>>, %arg13: memref<64x288xf32, #tpu.memory_space<vmem>>, %arg14: memref<1x4096xf32, #tpu.memory_space<vmem>>) attributes {dimension_semantics = [#tpu.dimension_semantics<parallel>], iteration_bounds = array<i64: 2>, scalar_prefetch = 0 : i64, scratch_operands = 4 : i64, tpu.core_type = #tpu.core_type<tc>, window_params = [{transform_indices = @transform_0, window_bounds = array<i64: 1, 8, 8, 1>}, {pipeline_mode = #tpu.pipeline_mode<synchronous>, transform_indices = @transform_1, window_bounds = array<i64: 9, 32>}, {pipeline_mode = #tpu.pipeline_mode<synchronous>, transform_indices = @transform_2, window_bounds = array<i64: 1, 32>}, {pipeline_mode = #tpu.pipeline_mode<synchronous>, transform_indices = @transform_3, window_bounds = array<i64: 288, 64>}, {pipeline_mode = #tpu.pipeline_mode<synchronous>, transform_indices = @transform_4, window_bounds = array<i64: 1, 64>}, {pipeline_mode = #tpu.pipeline_mode<synchronous>, transform_indices = @transform_5, window_bounds = array<i64: 4096, 128>}, {pipeline_mode = #tpu.pipeline_mode<synchronous>, transform_indices = @transform_6, window_bounds = array<i64: 1, 128>}, {pipeline_mode = #tpu.pipeline_mode<synchronous>, transform_indices = @transform_7, window_bounds = array<i64: 1, 128>}, {pipeline_mode = #tpu.pipeline_mode<synchronous>, transform_indices = @transform_8, window_bounds = array<i64: 1, 1>}, {transform_indices = @transform_9, window_bounds = array<i64: 1, 1, 128>}]} {
    %cst = arith.constant 0.000000e+00 : f32
    %0 = vector.broadcast %cst : f32 to vector<10x10x1xf32>
    %c0 = arith.constant 0 : index
    %c0_0 = arith.constant 0 : index
    %c0_1 = arith.constant 0 : index
    %1 = vector.load %arg11[%c0, %c0_0, %c0_1] : memref<10x10x1xf32, #tpu.memory_space<vmem>>, vector<10x10x1xf32>
    tpu.vector_store %arg11[%c0, %c0_0, %c0_1], %0 {strides = array<i32>} : memref<10x10x1xf32, #tpu.memory_space<vmem>>, vector<10x10x1xf32>,
    %c0_2 = arith.constant 0 : index
    %c0_3 = arith.constant 0 : index
    %c0_4 = arith.constant 0 : index
    %c0_5 = arith.constant 0 : index
    %2 = vector.load %arg1[%c0_2, %c0_3, %c0_4, %c0_5] : memref<1x8x8x1xf32, #tpu.memory_space<vmem>>, vector<1x8x8x1xf32>
    %3 = vector.shape_cast %2 : vector<1x8x8x1xf32> to vector<8x8x1xf32>
    %c1 = arith.constant 1 : index
    %c1_6 = arith.constant 1 : index
    %c0_7 = arith.constant 0 : index
    %4 = vector.load %arg11[%c1, %c1_6, %c0_7] : memref<10x10x1xf32, #tpu.memory_space<vmem>>, vector<8x8x1xf32>
    tpu.vector_store %arg11[%c1, %c1_6, %c0_7], %3 {strides = array<i32>} : memref<10x10x1xf32, #tpu.memory_space<vmem>>, vector<8x8x1xf32>,
    %c0_8 = arith.constant 0 : index
    %c0_9 = arith.constant 0 : index
    %5 = vector.load %arg2[%c0_8, %c0_9] : memref<9x32xf32, #tpu.memory_space<vmem>>, vector<9x32xf32>
    %cst_10 = arith.constant 0.000000e+00 : f32
    %6 = vector.broadcast %cst_10 : f32 to vector<8x8x32xf32>
    %c0_11 = arith.constant 0 : index
    %c0_12 = arith.constant 0 : index
    %c0_13 = arith.constant 0 : index
    %7 = vector.load %arg11[%c0_11, %c0_12, %c0_13] : memref<10x10x1xf32, #tpu.memory_space<vmem>>, vector<8x8x1xf32>
    %8 = vector.extract_strided_slice %5 {offsets = [0, 0], sizes = [1, 32], strides = [1, 1]} : vector<9x32xf32> to vector<1x32xf32>
    %9 = vector.shape_cast %8 : vector<1x32xf32> to vector<1x1x32xf32>
    %10 = vector.broadcast %7 : vector<8x8x1xf32> to vector<8x8x32xf32>
    %11 = vector.broadcast %9 : vector<1x1x32xf32> to vector<8x8x32xf32>
    %12 = arith.mulf %10, %11 : vector<8x8x32xf32>
    %13 = arith.addf %6, %12 : vector<8x8x32xf32>
    %c0_14 = arith.constant 0 : index
    %c1_15 = arith.constant 1 : index
    %c0_16 = arith.constant 0 : index
    %14 = vector.load %arg11[%c0_14, %c1_15, %c0_16] : memref<10x10x1xf32, #tpu.memory_space<vmem>>, vector<8x8x1xf32>
    %15 = vector.extract_strided_slice %5 {offsets = [1, 0], sizes = [1, 32], strides = [1, 1]} : vector<9x32xf32> to vector<1x32xf32>
    %16 = vector.shape_cast %15 : vector<1x32xf32> to vector<1x1x32xf32>
    %17 = vector.broadcast %14 : vector<8x8x1xf32> to vector<8x8x32xf32>
    %18 = vector.broadcast %16 : vector<1x1x32xf32> to vector<8x8x32xf32>
    %19 = arith.mulf %17, %18 : vector<8x8x32xf32>
    %20 = arith.addf %13, %19 : vector<8x8x32xf32>
    %c0_17 = arith.constant 0 : index
    %c2 = arith.constant 2 : index
    %c0_18 = arith.constant 0 : index
    %21 = vector.load %arg11[%c0_17, %c2, %c0_18] : memref<10x10x1xf32, #tpu.memory_space<vmem>>, vector<8x8x1xf32>
    %22 = vector.extract_strided_slice %5 {offsets = [2, 0], sizes = [1, 32], strides = [1, 1]} : vector<9x32xf32> to vector<1x32xf32>
    %23 = vector.shape_cast %22 : vector<1x32xf32> to vector<1x1x32xf32>
    %24 = vector.broadcast %21 : vector<8x8x1xf32> to vector<8x8x32xf32>
    %25 = vector.broadcast %23 : vector<1x1x32xf32> to vector<8x8x32xf32>
    %26 = arith.mulf %24, %25 : vector<8x8x32xf32>
    %27 = arith.addf %20, %26 : vector<8x8x32xf32>
    %c1_19 = arith.constant 1 : index
    %c0_20 = arith.constant 0 : index
    %c0_21 = arith.constant 0 : index
    %28 = vector.load %arg11[%c1_19, %c0_20, %c0_21] : memref<10x10x1xf32, #tpu.memory_space<vmem>>, vector<8x8x1xf32>
    %29 = vector.extract_strided_slice %5 {offsets = [3, 0], sizes = [1, 32], strides = [1, 1]} : vector<9x32xf32> to vector<1x32xf32>
    %30 = vector.shape_cast %29 : vector<1x32xf32> to vector<1x1x32xf32>
    %31 = vector.broadcast %28 : vector<8x8x1xf32> to vector<8x8x32xf32>
    %32 = vector.broadcast %30 : vector<1x1x32xf32> to vector<8x8x32xf32>
    %33 = arith.mulf %31, %32 : vector<8x8x32xf32>
    %34 = arith.addf %27, %33 : vector<8x8x32xf32>
    %c1_22 = arith.constant 1 : index
    %c1_23 = arith.constant 1 : index
    %c0_24 = arith.constant 0 : index
    %35 = vector.load %arg11[%c1_22, %c1_23, %c0_24] : memref<10x10x1xf32, #tpu.memory_space<vmem>>, vector<8x8x1xf32>
    %36 = vector.extract_strided_slice %5 {offsets = [4, 0], sizes = [1, 32], strides = [1, 1]} : vector<9x32xf32> to vector<1x32xf32>
    %37 = vector.shape_cast %36 : vector<1x32xf32> to vector<1x1x32xf32>
    %38 = vector.broadcast %35 : vector<8x8x1xf32> to vector<8x8x32xf32>
    %39 = vector.broadcast %37 : vector<1x1x32xf32> to vector<8x8x32xf32>
    %40 = arith.mulf %38, %39 : vector<8x8x32xf32>
    %41 = arith.addf %34, %40 : vector<8x8x32xf32>
    %c1_25 = arith.constant 1 : index
    %c2_26 = arith.constant 2 : index
    %c0_27 = arith.constant 0 : index
    %42 = vector.load %arg11[%c1_25, %c2_26, %c0_27] : memref<10x10x1xf32, #tpu.memory_space<vmem>>, vector<8x8x1xf32>
    %43 = vector.extract_strided_slice %5 {offsets = [5, 0], sizes = [1, 32], strides = [1, 1]} : vector<9x32xf32> to vector<1x32xf32>
    %44 = vector.shape_cast %43 : vector<1x32xf32> to vector<1x1x32xf32>
    %45 = vector.broadcast %42 : vector<8x8x1xf32> to vector<8x8x32xf32>
    %46 = vector.broadcast %44 : vector<1x1x32xf32> to vector<8x8x32xf32>
    %47 = arith.mulf %45, %46 : vector<8x8x32xf32>
    %48 = arith.addf %41, %47 : vector<8x8x32xf32>
    %c2_28 = arith.constant 2 : index
    %c0_29 = arith.constant 0 : index
    %c0_30 = arith.constant 0 : index
    %49 = vector.load %arg11[%c2_28, %c0_29, %c0_30] : memref<10x10x1xf32, #tpu.memory_space<vmem>>, vector<8x8x1xf32>
    %50 = vector.extract_strided_slice %5 {offsets = [6, 0], sizes = [1, 32], strides = [1, 1]} : vector<9x32xf32> to vector<1x32xf32>
    %51 = vector.shape_cast %50 : vector<1x32xf32> to vector<1x1x32xf32>
    %52 = vector.broadcast %49 : vector<8x8x1xf32> to vector<8x8x32xf32>
    %53 = vector.broadcast %51 : vector<1x1x32xf32> to vector<8x8x32xf32>
    %54 = arith.mulf %52, %53 : vector<8x8x32xf32>
    %55 = arith.addf %48, %54 : vector<8x8x32xf32>
    %c2_31 = arith.constant 2 : index
    %c1_32 = arith.constant 1 : index
    %c0_33 = arith.constant 0 : index
    %56 = vector.load %arg11[%c2_31, %c1_32, %c0_33] : memref<10x10x1xf32, #tpu.memory_space<vmem>>, vector<8x8x1xf32>
    %57 = vector.extract_strided_slice %5 {offsets = [7, 0], sizes = [1, 32], strides = [1, 1]} : vector<9x32xf32> to vector<1x32xf32>
    %58 = vector.shape_cast %57 : vector<1x32xf32> to vector<1x1x32xf32>
    %59 = vector.broadcast %56 : vector<8x8x1xf32> to vector<8x8x32xf32>
    %60 = vector.broadcast %58 : vector<1x1x32xf32> to vector<8x8x32xf32>
    %61 = arith.mulf %59, %60 : vector<8x8x32xf32>
    %62 = arith.addf %55, %61 : vector<8x8x32xf32>
    %c2_34 = arith.constant 2 : index
    %c2_35 = arith.constant 2 : index
    %c0_36 = arith.constant 0 : index
    %63 = vector.load %arg11[%c2_34, %c2_35, %c0_36] : memref<10x10x1xf32, #tpu.memory_space<vmem>>, vector<8x8x1xf32>
    %64 = vector.extract_strided_slice %5 {offsets = [8, 0], sizes = [1, 32], strides = [1, 1]} : vector<9x32xf32> to vector<1x32xf32>
    %65 = vector.shape_cast %64 : vector<1x32xf32> to vector<1x1x32xf32>
    %66 = vector.broadcast %63 : vector<8x8x1xf32> to vector<8x8x32xf32>
    %67 = vector.broadcast %65 : vector<1x1x32xf32> to vector<8x8x32xf32>
    %68 = arith.mulf %66, %67 : vector<8x8x32xf32>
    %69 = arith.addf %62, %68 : vector<8x8x32xf32>
    %c0_37 = arith.constant 0 : index
    %c0_38 = arith.constant 0 : index
    %70 = vector.load %arg3[%c0_37, %c0_38] : memref<1x32xf32, #tpu.memory_space<vmem>>, vector<1x32xf32>
    %71 = vector.shape_cast %70 : vector<1x32xf32> to vector<1x1x32xf32>
    %72 = vector.broadcast %71 : vector<1x1x32xf32> to vector<8x8x32xf32>
    %73 = arith.addf %69, %72 : vector<8x8x32xf32>
    %cst_39 = arith.constant 0.000000e+00 : f32
    %74 = vector.broadcast %cst_39 : f32 to vector<8x8x32xf32>
    %75 = arith.maximumf %73, %74 : vector<8x8x32xf32>
    %cst_40 = arith.constant 0.000000e+00 : f32
    %76 = vector.broadcast %cst_40 : f32 to vector<10x10x32xf32>
    %c0_41 = arith.constant 0 : index
    %c0_42 = arith.constant 0 : index
    %c0_43 = arith.constant 0 : index
    %77 = vector.load %arg12[%c0_41, %c0_42, %c0_43] : memref<10x10x32xf32, #tpu.memory_space<vmem>>, vector<10x10x32xf32>
    tpu.vector_store %arg12[%c0_41, %c0_42, %c0_43], %76 {strides = array<i32>} : memref<10x10x32xf32, #tpu.memory_space<vmem>>, vector<10x10x32xf32>,
    %c1_44 = arith.constant 1 : index
    %c1_45 = arith.constant 1 : index
    %c0_46 = arith.constant 0 : index
    %78 = vector.load %arg12[%c1_44, %c1_45, %c0_46] : memref<10x10x32xf32, #tpu.memory_space<vmem>>, vector<8x8x32xf32>
    tpu.vector_store %arg12[%c1_44, %c1_45, %c0_46], %75 {strides = array<i32>} : memref<10x10x32xf32, #tpu.memory_space<vmem>>, vector<8x8x32xf32>,
    %c0_47 = arith.constant 0 : index
    %c0_48 = arith.constant 0 : index
    %c0_49 = arith.constant 0 : index
    %79 = vector.load %arg12[%c0_47, %c0_48, %c0_49] : memref<10x10x32xf32, #tpu.memory_space<vmem>>, vector<8x8x32xf32>
    %80 = vector.shape_cast %79 : vector<8x8x32xf32> to vector<64x32xf32>
    %c0_50 = arith.constant 0 : index
    %c0_51 = arith.constant 0 : index
    %81 = vector.load %arg13[%c0_50, %c0_51] : memref<64x288xf32, #tpu.memory_space<vmem>>, vector<64x32xf32>
    tpu.vector_store %arg13[%c0_50, %c0_51], %80 {strides = array<i32>} : memref<64x288xf32, #tpu.memory_space<vmem>>, vector<64x32xf32>,
    %c0_52 = arith.constant 0 : index
    %c1_53 = arith.constant 1 : index
    %c0_54 = arith.constant 0 : index
    %82 = vector.load %arg12[%c0_52, %c1_53, %c0_54] : memref<10x10x32xf32, #tpu.memory_space<vmem>>, vector<8x8x32xf32>
    %83 = vector.shape_cast %82 : vector<8x8x32xf32> to vector<64x32xf32>
    %c0_55 = arith.constant 0 : index
    %c32 = arith.constant 32 : index
    %84 = vector.load %arg13[%c0_55, %c32] : memref<64x288xf32, #tpu.memory_space<vmem>>, vector<64x32xf32>
    tpu.vector_store %arg13[%c0_55, %c32], %83 {strides = array<i32>} : memref<64x288xf32, #tpu.memory_space<vmem>>, vector<64x32xf32>,
    %c0_56 = arith.constant 0 : index
    %c2_57 = arith.constant 2 : index
    %c0_58 = arith.constant 0 : index
    %85 = vector.load %arg12[%c0_56, %c2_57, %c0_58] : memref<10x10x32xf32, #tpu.memory_space<vmem>>, vector<8x8x32xf32>
    %86 = vector.shape_cast %85 : vector<8x8x32xf32> to vector<64x32xf32>
    %c0_59 = arith.constant 0 : index
    %c64 = arith.constant 64 : index
    %87 = vector.load %arg13[%c0_59, %c64] : memref<64x288xf32, #tpu.memory_space<vmem>>, vector<64x32xf32>
    tpu.vector_store %arg13[%c0_59, %c64], %86 {strides = array<i32>} : memref<64x288xf32, #tpu.memory_space<vmem>>, vector<64x32xf32>,
    %c1_60 = arith.constant 1 : index
    %c0_61 = arith.constant 0 : index
    %c0_62 = arith.constant 0 : index
    %88 = vector.load %arg12[%c1_60, %c0_61, %c0_62] : memref<10x10x32xf32, #tpu.memory_space<vmem>>, vector<8x8x32xf32>
    %89 = vector.shape_cast %88 : vector<8x8x32xf32> to vector<64x32xf32>
    %c0_63 = arith.constant 0 : index
    %c96 = arith.constant 96 : index
    %90 = vector.load %arg13[%c0_63, %c96] : memref<64x288xf32, #tpu.memory_space<vmem>>, vector<64x32xf32>
    tpu.vector_store %arg13[%c0_63, %c96], %89 {strides = array<i32>} : memref<64x288xf32, #tpu.memory_space<vmem>>, vector<64x32xf32>,
    %c1_64 = arith.constant 1 : index
    %c1_65 = arith.constant 1 : index
    %c0_66 = arith.constant 0 : index
    %91 = vector.load %arg12[%c1_64, %c1_65, %c0_66] : memref<10x10x32xf32, #tpu.memory_space<vmem>>, vector<8x8x32xf32>
    %92 = vector.shape_cast %91 : vector<8x8x32xf32> to vector<64x32xf32>
    %c0_67 = arith.constant 0 : index
    %c128 = arith.constant 128 : index
    %93 = vector.load %arg13[%c0_67, %c128] : memref<64x288xf32, #tpu.memory_space<vmem>>, vector<64x32xf32>
    tpu.vector_store %arg13[%c0_67, %c128], %92 {strides = array<i32>} : memref<64x288xf32, #tpu.memory_space<vmem>>, vector<64x32xf32>,
    %c1_68 = arith.constant 1 : index
    %c2_69 = arith.constant 2 : index
    %c0_70 = arith.constant 0 : index
    %94 = vector.load %arg12[%c1_68, %c2_69, %c0_70] : memref<10x10x32xf32, #tpu.memory_space<vmem>>, vector<8x8x32xf32>
    %95 = vector.shape_cast %94 : vector<8x8x32xf32> to vector<64x32xf32>
    %c0_71 = arith.constant 0 : index
    %c160 = arith.constant 160 : index
    %96 = vector.load %arg13[%c0_71, %c160] : memref<64x288xf32, #tpu.memory_space<vmem>>, vector<64x32xf32>
    tpu.vector_store %arg13[%c0_71, %c160], %95 {strides = array<i32>} : memref<64x288xf32, #tpu.memory_space<vmem>>, vector<64x32xf32>,
    %c2_72 = arith.constant 2 : index
    %c0_73 = arith.constant 0 : index
    %c0_74 = arith.constant 0 : index
    %97 = vector.load %arg12[%c2_72, %c0_73, %c0_74] : memref<10x10x32xf32, #tpu.memory_space<vmem>>, vector<8x8x32xf32>
    %98 = vector.shape_cast %97 : vector<8x8x32xf32> to vector<64x32xf32>
    %c0_75 = arith.constant 0 : index
    %c192 = arith.constant 192 : index
    %99 = vector.load %arg13[%c0_75, %c192] : memref<64x288xf32, #tpu.memory_space<vmem>>, vector<64x32xf32>
    tpu.vector_store %arg13[%c0_75, %c192], %98 {strides = array<i32>} : memref<64x288xf32, #tpu.memory_space<vmem>>, vector<64x32xf32>,
    %c2_76 = arith.constant 2 : index
    %c1_77 = arith.constant 1 : index
    %c0_78 = arith.constant 0 : index
    %100 = vector.load %arg12[%c2_76, %c1_77, %c0_78] : memref<10x10x32xf32, #tpu.memory_space<vmem>>, vector<8x8x32xf32>
    %101 = vector.shape_cast %100 : vector<8x8x32xf32> to vector<64x32xf32>
    %c0_79 = arith.constant 0 : index
    %c224 = arith.constant 224 : index
    %102 = vector.load %arg13[%c0_79, %c224] : memref<64x288xf32, #tpu.memory_space<vmem>>, vector<64x32xf32>
    tpu.vector_store %arg13[%c0_79, %c224], %101 {strides = array<i32>} : memref<64x288xf32, #tpu.memory_space<vmem>>, vector<64x32xf32>,
    %c2_80 = arith.constant 2 : index
    %c2_81 = arith.constant 2 : index
    %c0_82 = arith.constant 0 : index
    %103 = vector.load %arg12[%c2_80, %c2_81, %c0_82] : memref<10x10x32xf32, #tpu.memory_space<vmem>>, vector<8x8x32xf32>
    %104 = vector.shape_cast %103 : vector<8x8x32xf32> to vector<64x32xf32>
    %c0_83 = arith.constant 0 : index
    %c256 = arith.constant 256 : index
    %105 = vector.load %arg13[%c0_83, %c256] : memref<64x288xf32, #tpu.memory_space<vmem>>, vector<64x32xf32>
    tpu.vector_store %arg13[%c0_83, %c256], %104 {strides = array<i32>} : memref<64x288xf32, #tpu.memory_space<vmem>>, vector<64x32xf32>,
    %c0_84 = arith.constant 0 : index
    %c0_85 = arith.constant 0 : index
    %106 = vector.load %arg13[%c0_84, %c0_85] : memref<64x288xf32, #tpu.memory_space<vmem>>, vector<64x288xf32>
    %c0_86 = arith.constant 0 : index
    %c0_87 = arith.constant 0 : index
    %107 = vector.load %arg4[%c0_86, %c0_87] : memref<288x64xf32, #tpu.memory_space<vmem>>, vector<288x64xf32>
    %cst_88 = arith.constant dense<0.000000e+00> : vector<64x64xf32>
    %108 = tpu.matmul %106, %107, %cst_88 {dimension_numbers = #tpu.dot_dimension_numbers<[1], [0], [0], [1], [0, 0, 1, 1], [], []>} : vector<64x288xf32>, vector<288x64xf32>, vector<64x64xf32> -> vector<64x64xf32>
    %c0_89 = arith.constant 0 : index
    %c0_90 = arith.constant 0 : index
    %109 = vector.load %arg5[%c0_89, %c0_90] : memref<1x64xf32, #tpu.memory_space<vmem>>, vector<1x64xf32>
    %110 = vector.broadcast %109 : vector<1x64xf32> to vector<64x64xf32>
    %111 = arith.addf %108, %110 : vector<64x64xf32>
    %cst_91 = arith.constant 0.000000e+00 : f32
    %112 = vector.broadcast %cst_91 : f32 to vector<64x64xf32>
    %113 = arith.maximumf %111, %112 : vector<64x64xf32>
    %114 = vector.extract_strided_slice %113 {offsets = [0, 0], sizes = [1, 64], strides = [1, 1]} : vector<64x64xf32> to vector<1x64xf32>
    %c0_92 = arith.constant 0 : index
    %c0_93 = arith.constant 0 : index
    %115 = vector.load %arg14[%c0_92, %c0_93] : memref<1x4096xf32, #tpu.memory_space<vmem>>, vector<1x64xf32>
    tpu.vector_store %arg14[%c0_92, %c0_93], %114 {strides = array<i32>} : memref<1x4096xf32, #tpu.memory_space<vmem>>, vector<1x64xf32>,
    %116 = vector.extract_strided_slice %113 {offsets = [1, 0], sizes = [1, 64], strides = [1, 1]} : vector<64x64xf32> to vector<1x64xf32>
    %c0_94 = arith.constant 0 : index
    %c64_95 = arith.constant 64 : index
    %117 = vector.load %arg14[%c0_94, %c64_95] : memref<1x4096xf32, #tpu.memory_space<vmem>>, vector<1x64xf32>
    tpu.vector_store %arg14[%c0_94, %c64_95], %116 {strides = array<i32>} : memref<1x4096xf32, #tpu.memory_space<vmem>>, vector<1x64xf32>,
    %118 = vector.extract_strided_slice %113 {offsets = [2, 0], sizes = [1, 64], strides = [1, 1]} : vector<64x64xf32> to vector<1x64xf32>
    %c0_96 = arith.constant 0 : index
    %c128_97 = arith.constant 128 : index
    %119 = vector.load %arg14[%c0_96, %c128_97] : memref<1x4096xf32, #tpu.memory_space<vmem>>, vector<1x64xf32>
    tpu.vector_store %arg14[%c0_96, %c128_97], %118 {strides = array<i32>} : memref<1x4096xf32, #tpu.memory_space<vmem>>, vector<1x64xf32>,
    %120 = vector.extract_strided_slice %113 {offsets = [3, 0], sizes = [1, 64], strides = [1, 1]} : vector<64x64xf32> to vector<1x64xf32>
    %c0_98 = arith.constant 0 : index
    %c192_99 = arith.constant 192 : index
    %121 = vector.load %arg14[%c0_98, %c192_99] : memref<1x4096xf32, #tpu.memory_space<vmem>>, vector<1x64xf32>
    tpu.vector_store %arg14[%c0_98, %c192_99], %120 {strides = array<i32>} : memref<1x4096xf32, #tpu.memory_space<vmem>>, vector<1x64xf32>,
    %122 = vector.extract_strided_slice %113 {offsets = [4, 0], sizes = [1, 64], strides = [1, 1]} : vector<64x64xf32> to vector<1x64xf32>
    %c0_100 = arith.constant 0 : index
    %c256_101 = arith.constant 256 : index
    %123 = vector.load %arg14[%c0_100, %c256_101] : memref<1x4096xf32, #tpu.memory_space<vmem>>, vector<1x64xf32>
    tpu.vector_store %arg14[%c0_100, %c256_101], %122 {strides = array<i32>} : memref<1x4096xf32, #tpu.memory_space<vmem>>, vector<1x64xf32>,
    %124 = vector.extract_strided_slice %113 {offsets = [5, 0], sizes = [1, 64], strides = [1, 1]} : vector<64x64xf32> to vector<1x64xf32>
    %c0_102 = arith.constant 0 : index
    %c320 = arith.constant 320 : index
    %125 = vector.load %arg14[%c0_102, %c320] : memref<1x4096xf32, #tpu.memory_space<vmem>>, vector<1x64xf32>
    tpu.vector_store %arg14[%c0_102, %c320], %124 {strides = array<i32>} : memref<1x4096xf32, #tpu.memory_space<vmem>>, vector<1x64xf32>,
    %126 = vector.extract_strided_slice %113 {offsets = [6, 0], sizes = [1, 64], strides = [1, 1]} : vector<64x64xf32> to vector<1x64xf32>
    %c0_103 = arith.constant 0 : index
    %c384 = arith.constant 384 : index
    %127 = vector.load %arg14[%c0_103, %c384] : memref<1x4096xf32, #tpu.memory_space<vmem>>, vector<1x64xf32>
    tpu.vector_store %arg14[%c0_103, %c384], %126 {strides = array<i32>} : memref<1x4096xf32, #tpu.memory_space<vmem>>, vector<1x64xf32>,
    %128 = vector.extract_strided_slice %113 {offsets = [7, 0], sizes = [1, 64], strides = [1, 1]} : vector<64x64xf32> to vector<1x64xf32>
    %c0_104 = arith.constant 0 : index
    %c448 = arith.constant 448 : index
    %129 = vector.load %arg14[%c0_104, %c448] : memref<1x4096xf32, #tpu.memory_space<vmem>>, vector<1x64xf32>
    tpu.vector_store %arg14[%c0_104, %c448], %128 {strides = array<i32>} : memref<1x4096xf32, #tpu.memory_space<vmem>>, vector<1x64xf32>,
    %130 = vector.extract_strided_slice %113 {offsets = [8, 0], sizes = [1, 64], strides = [1, 1]} : vector<64x64xf32> to vector<1x64xf32>
    %c0_105 = arith.constant 0 : index
    %c512 = arith.constant 512 : index
    %131 = vector.load %arg14[%c0_105, %c512] : memref<1x4096xf32, #tpu.memory_space<vmem>>, vector<1x64xf32>
    tpu.vector_store %arg14[%c0_105, %c512], %130 {strides = array<i32>} : memref<1x4096xf32, #tpu.memory_space<vmem>>, vector<1x64xf32>,
    %132 = vector.extract_strided_slice %113 {offsets = [9, 0], sizes = [1, 64], strides = [1, 1]} : vector<64x64xf32> to vector<1x64xf32>
    %c0_106 = arith.constant 0 : index
    %c576 = arith.constant 576 : index
    %133 = vector.load %arg14[%c0_106, %c576] : memref<1x4096xf32, #tpu.memory_space<vmem>>, vector<1x64xf32>
    tpu.vector_store %arg14[%c0_106, %c576], %132 {strides = array<i32>} : memref<1x4096xf32, #tpu.memory_space<vmem>>, vector<1x64xf32>,
    %134 = vector.extract_strided_slice %113 {offsets = [10, 0], sizes = [1, 64], strides = [1, 1]} : vector<64x64xf32> to vector<1x64xf32>
    %c0_107 = arith.constant 0 : index
    %c640 = arith.constant 640 : index
    %135 = vector.load %arg14[%c0_107, %c640] : memref<1x4096xf32, #tpu.memory_space<vmem>>, vector<1x64xf32>
    tpu.vector_store %arg14[%c0_107, %c640], %134 {strides = array<i32>} : memref<1x4096xf32, #tpu.memory_space<vmem>>, vector<1x64xf32>,
    %136 = vector.extract_strided_slice %113 {offsets = [11, 0], sizes = [1, 64], strides = [1, 1]} : vector<64x64xf32> to vector<1x64xf32>
    %c0_108 = arith.constant 0 : index
    %c704 = arith.constant 704 : index
    %137 = vector.load %arg14[%c0_108, %c704] : memref<1x4096xf32, #tpu.memory_space<vmem>>, vector<1x64xf32>
    tpu.vector_store %arg14[%c0_108, %c704], %136 {strides = array<i32>} : memref<1x4096xf32, #tpu.memory_space<vmem>>, vector<1x64xf32>,
    %138 = vector.extract_strided_slice %113 {offsets = [12, 0], sizes = [1, 64], strides = [1, 1]} : vector<64x64xf32> to vector<1x64xf32>
    %c0_109 = arith.constant 0 : index
    %c768 = arith.constant 768 : index
    %139 = vector.load %arg14[%c0_109, %c768] : memref<1x4096xf32, #tpu.memory_space<vmem>>, vector<1x64xf32>
    tpu.vector_store %arg14[%c0_109, %c768], %138 {strides = array<i32>} : memref<1x4096xf32, #tpu.memory_space<vmem>>, vector<1x64xf32>,
    %140 = vector.extract_strided_slice %113 {offsets = [13, 0], sizes = [1, 64], strides = [1, 1]} : vector<64x64xf32> to vector<1x64xf32>
    %c0_110 = arith.constant 0 : index
    %c832 = arith.constant 832 : index
    %141 = vector.load %arg14[%c0_110, %c832] : memref<1x4096xf32, #tpu.memory_space<vmem>>, vector<1x64xf32>
    tpu.vector_store %arg14[%c0_110, %c832], %140 {strides = array<i32>} : memref<1x4096xf32, #tpu.memory_space<vmem>>, vector<1x64xf32>,
    %142 = vector.extract_strided_slice %113 {offsets = [14, 0], sizes = [1, 64], strides = [1, 1]} : vector<64x64xf32> to vector<1x64xf32>
    %c0_111 = arith.constant 0 : index
    %c896 = arith.constant 896 : index
    %143 = vector.load %arg14[%c0_111, %c896] : memref<1x4096xf32, #tpu.memory_space<vmem>>, vector<1x64xf32>
    tpu.vector_store %arg14[%c0_111, %c896], %142 {strides = array<i32>} : memref<1x4096xf32, #tpu.memory_space<vmem>>, vector<1x64xf32>,
    %144 = vector.extract_strided_slice %113 {offsets = [15, 0], sizes = [1, 64], strides = [1, 1]} : vector<64x64xf32> to vector<1x64xf32>
    %c0_112 = arith.constant 0 : index
    %c960 = arith.constant 960 : index
    %145 = vector.load %arg14[%c0_112, %c960] : memref<1x4096xf32, #tpu.memory_space<vmem>>, vector<1x64xf32>
    tpu.vector_store %arg14[%c0_112, %c960], %144 {strides = array<i32>} : memref<1x4096xf32, #tpu.memory_space<vmem>>, vector<1x64xf32>,
    %146 = vector.extract_strided_slice %113 {offsets = [16, 0], sizes = [1, 64], strides = [1, 1]} : vector<64x64xf32> to vector<1x64xf32>
    %c0_113 = arith.constant 0 : index
    %c1024 = arith.constant 1024 : index
    %147 = vector.load %arg14[%c0_113, %c1024] : memref<1x4096xf32, #tpu.memory_space<vmem>>, vector<1x64xf32>
    tpu.vector_store %arg14[%c0_113, %c1024], %146 {strides = array<i32>} : memref<1x4096xf32, #tpu.memory_space<vmem>>, vector<1x64xf32>,
    %148 = vector.extract_strided_slice %113 {offsets = [17, 0], sizes = [1, 64], strides = [1, 1]} : vector<64x64xf32> to vector<1x64xf32>
    %c0_114 = arith.constant 0 : index
    %c1088 = arith.constant 1088 : index
    %149 = vector.load %arg14[%c0_114, %c1088] : memref<1x4096xf32, #tpu.memory_space<vmem>>, vector<1x64xf32>
    tpu.vector_store %arg14[%c0_114, %c1088], %148 {strides = array<i32>} : memref<1x4096xf32, #tpu.memory_space<vmem>>, vector<1x64xf32>,
    %150 = vector.extract_strided_slice %113 {offsets = [18, 0], sizes = [1, 64], strides = [1, 1]} : vector<64x64xf32> to vector<1x64xf32>
    %c0_115 = arith.constant 0 : index
    %c1152 = arith.constant 1152 : index
    %151 = vector.load %arg14[%c0_115, %c1152] : memref<1x4096xf32, #tpu.memory_space<vmem>>, vector<1x64xf32>
    tpu.vector_store %arg14[%c0_115, %c1152], %150 {strides = array<i32>} : memref<1x4096xf32, #tpu.memory_space<vmem>>, vector<1x64xf32>,
    %152 = vector.extract_strided_slice %113 {offsets = [19, 0], sizes = [1, 64], strides = [1, 1]} : vector<64x64xf32> to vector<1x64xf32>
    %c0_116 = arith.constant 0 : index
    %c1216 = arith.constant 1216 : index
    %153 = vector.load %arg14[%c0_116, %c1216] : memref<1x4096xf32, #tpu.memory_space<vmem>>, vector<1x64xf32>
    tpu.vector_store %arg14[%c0_116, %c1216], %152 {strides = array<i32>} : memref<1x4096xf32, #tpu.memory_space<vmem>>, vector<1x64xf32>,
    %154 = vector.extract_strided_slice %113 {offsets = [20, 0], sizes = [1, 64], strides = [1, 1]} : vector<64x64xf32> to vector<1x64xf32>
    %c0_117 = arith.constant 0 : index
    %c1280 = arith.constant 1280 : index
    %155 = vector.load %arg14[%c0_117, %c1280] : memref<1x4096xf32, #tpu.memory_space<vmem>>, vector<1x64xf32>
    tpu.vector_store %arg14[%c0_117, %c1280], %154 {strides = array<i32>} : memref<1x4096xf32, #tpu.memory_space<vmem>>, vector<1x64xf32>,
    %156 = vector.extract_strided_slice %113 {offsets = [21, 0], sizes = [1, 64], strides = [1, 1]} : vector<64x64xf32> to vector<1x64xf32>
    %c0_118 = arith.constant 0 : index
    %c1344 = arith.constant 1344 : index
    %157 = vector.load %arg14[%c0_118, %c1344] : memref<1x4096xf32, #tpu.memory_space<vmem>>, vector<1x64xf32>
    tpu.vector_store %arg14[%c0_118, %c1344], %156 {strides = array<i32>} : memref<1x4096xf32, #tpu.memory_space<vmem>>, vector<1x64xf32>,
    %158 = vector.extract_strided_slice %113 {offsets = [22, 0], sizes = [1, 64], strides = [1, 1]} : vector<64x64xf32> to vector<1x64xf32>
    %c0_119 = arith.constant 0 : index
    %c1408 = arith.constant 1408 : index
    %159 = vector.load %arg14[%c0_119, %c1408] : memref<1x4096xf32, #tpu.memory_space<vmem>>, vector<1x64xf32>
    tpu.vector_store %arg14[%c0_119, %c1408], %158 {strides = array<i32>} : memref<1x4096xf32, #tpu.memory_space<vmem>>, vector<1x64xf32>,
    %160 = vector.extract_strided_slice %113 {offsets = [23, 0], sizes = [1, 64], strides = [1, 1]} : vector<64x64xf32> to vector<1x64xf32>
    %c0_120 = arith.constant 0 : index
    %c1472 = arith.constant 1472 : index
    %161 = vector.load %arg14[%c0_120, %c1472] : memref<1x4096xf32, #tpu.memory_space<vmem>>, vector<1x64xf32>
    tpu.vector_store %arg14[%c0_120, %c1472], %160 {strides = array<i32>} : memref<1x4096xf32, #tpu.memory_space<vmem>>, vector<1x64xf32>,
    %162 = vector.extract_strided_slice %113 {offsets = [24, 0], sizes = [1, 64], strides = [1, 1]} : vector<64x64xf32> to vector<1x64xf32>
    %c0_121 = arith.constant 0 : index
    %c1536 = arith.constant 1536 : index
    %163 = vector.load %arg14[%c0_121, %c1536] : memref<1x4096xf32, #tpu.memory_space<vmem>>, vector<1x64xf32>
    tpu.vector_store %arg14[%c0_121, %c1536], %162 {strides = array<i32>} : memref<1x4096xf32, #tpu.memory_space<vmem>>, vector<1x64xf32>,
    %164 = vector.extract_strided_slice %113 {offsets = [25, 0], sizes = [1, 64], strides = [1, 1]} : vector<64x64xf32> to vector<1x64xf32>
    %c0_122 = arith.constant 0 : index
    %c1600 = arith.constant 1600 : index
    %165 = vector.load %arg14[%c0_122, %c1600] : memref<1x4096xf32, #tpu.memory_space<vmem>>, vector<1x64xf32>
    tpu.vector_store %arg14[%c0_122, %c1600], %164 {strides = array<i32>} : memref<1x4096xf32, #tpu.memory_space<vmem>>, vector<1x64xf32>,
    %166 = vector.extract_strided_slice %113 {offsets = [26, 0], sizes = [1, 64], strides = [1, 1]} : vector<64x64xf32> to vector<1x64xf32>
    %c0_123 = arith.constant 0 : index
    %c1664 = arith.constant 1664 : index
    %167 = vector.load %arg14[%c0_123, %c1664] : memref<1x4096xf32, #tpu.memory_space<vmem>>, vector<1x64xf32>
    tpu.vector_store %arg14[%c0_123, %c1664], %166 {strides = array<i32>} : memref<1x4096xf32, #tpu.memory_space<vmem>>, vector<1x64xf32>,
    %168 = vector.extract_strided_slice %113 {offsets = [27, 0], sizes = [1, 64], strides = [1, 1]} : vector<64x64xf32> to vector<1x64xf32>
    %c0_124 = arith.constant 0 : index
    %c1728 = arith.constant 1728 : index
    %169 = vector.load %arg14[%c0_124, %c1728] : memref<1x4096xf32, #tpu.memory_space<vmem>>, vector<1x64xf32>
    tpu.vector_store %arg14[%c0_124, %c1728], %168 {strides = array<i32>} : memref<1x4096xf32, #tpu.memory_space<vmem>>, vector<1x64xf32>,
    %170 = vector.extract_strided_slice %113 {offsets = [28, 0], sizes = [1, 64], strides = [1, 1]} : vector<64x64xf32> to vector<1x64xf32>
    %c0_125 = arith.constant 0 : index
    %c1792 = arith.constant 1792 : index
    %171 = vector.load %arg14[%c0_125, %c1792] : memref<1x4096xf32, #tpu.memory_space<vmem>>, vector<1x64xf32>
    tpu.vector_store %arg14[%c0_125, %c1792], %170 {strides = array<i32>} : memref<1x4096xf32, #tpu.memory_space<vmem>>, vector<1x64xf32>,
    %172 = vector.extract_strided_slice %113 {offsets = [29, 0], sizes = [1, 64], strides = [1, 1]} : vector<64x64xf32> to vector<1x64xf32>
    %c0_126 = arith.constant 0 : index
    %c1856 = arith.constant 1856 : index
    %173 = vector.load %arg14[%c0_126, %c1856] : memref<1x4096xf32, #tpu.memory_space<vmem>>, vector<1x64xf32>
    tpu.vector_store %arg14[%c0_126, %c1856], %172 {strides = array<i32>} : memref<1x4096xf32, #tpu.memory_space<vmem>>, vector<1x64xf32>,
    %174 = vector.extract_strided_slice %113 {offsets = [30, 0], sizes = [1, 64], strides = [1, 1]} : vector<64x64xf32> to vector<1x64xf32>
    %c0_127 = arith.constant 0 : index
    %c1920 = arith.constant 1920 : index
    %175 = vector.load %arg14[%c0_127, %c1920] : memref<1x4096xf32, #tpu.memory_space<vmem>>, vector<1x64xf32>
    tpu.vector_store %arg14[%c0_127, %c1920], %174 {strides = array<i32>} : memref<1x4096xf32, #tpu.memory_space<vmem>>, vector<1x64xf32>,
    %176 = vector.extract_strided_slice %113 {offsets = [31, 0], sizes = [1, 64], strides = [1, 1]} : vector<64x64xf32> to vector<1x64xf32>
    %c0_128 = arith.constant 0 : index
    %c1984 = arith.constant 1984 : index
    %177 = vector.load %arg14[%c0_128, %c1984] : memref<1x4096xf32, #tpu.memory_space<vmem>>, vector<1x64xf32>
    tpu.vector_store %arg14[%c0_128, %c1984], %176 {strides = array<i32>} : memref<1x4096xf32, #tpu.memory_space<vmem>>, vector<1x64xf32>,
    %178 = vector.extract_strided_slice %113 {offsets = [32, 0], sizes = [1, 64], strides = [1, 1]} : vector<64x64xf32> to vector<1x64xf32>
    %c0_129 = arith.constant 0 : index
    %c2048 = arith.constant 2048 : index
    %179 = vector.load %arg14[%c0_129, %c2048] : memref<1x4096xf32, #tpu.memory_space<vmem>>, vector<1x64xf32>
    tpu.vector_store %arg14[%c0_129, %c2048], %178 {strides = array<i32>} : memref<1x4096xf32, #tpu.memory_space<vmem>>, vector<1x64xf32>,
    %180 = vector.extract_strided_slice %113 {offsets = [33, 0], sizes = [1, 64], strides = [1, 1]} : vector<64x64xf32> to vector<1x64xf32>
    %c0_130 = arith.constant 0 : index
    %c2112 = arith.constant 2112 : index
    %181 = vector.load %arg14[%c0_130, %c2112] : memref<1x4096xf32, #tpu.memory_space<vmem>>, vector<1x64xf32>
    tpu.vector_store %arg14[%c0_130, %c2112], %180 {strides = array<i32>} : memref<1x4096xf32, #tpu.memory_space<vmem>>, vector<1x64xf32>,
    %182 = vector.extract_strided_slice %113 {offsets = [34, 0], sizes = [1, 64], strides = [1, 1]} : vector<64x64xf32> to vector<1x64xf32>
    %c0_131 = arith.constant 0 : index
    %c2176 = arith.constant 2176 : index
    %183 = vector.load %arg14[%c0_131, %c2176] : memref<1x4096xf32, #tpu.memory_space<vmem>>, vector<1x64xf32>
    tpu.vector_store %arg14[%c0_131, %c2176], %182 {strides = array<i32>} : memref<1x4096xf32, #tpu.memory_space<vmem>>, vector<1x64xf32>,
    %184 = vector.extract_strided_slice %113 {offsets = [35, 0], sizes = [1, 64], strides = [1, 1]} : vector<64x64xf32> to vector<1x64xf32>
    %c0_132 = arith.constant 0 : index
    %c2240 = arith.constant 2240 : index
    %185 = vector.load %arg14[%c0_132, %c2240] : memref<1x4096xf32, #tpu.memory_space<vmem>>, vector<1x64xf32>
    tpu.vector_store %arg14[%c0_132, %c2240], %184 {strides = array<i32>} : memref<1x4096xf32, #tpu.memory_space<vmem>>, vector<1x64xf32>,
    %186 = vector.extract_strided_slice %113 {offsets = [36, 0], sizes = [1, 64], strides = [1, 1]} : vector<64x64xf32> to vector<1x64xf32>
    %c0_133 = arith.constant 0 : index
    %c2304 = arith.constant 2304 : index
    %187 = vector.load %arg14[%c0_133, %c2304] : memref<1x4096xf32, #tpu.memory_space<vmem>>, vector<1x64xf32>
    tpu.vector_store %arg14[%c0_133, %c2304], %186 {strides = array<i32>} : memref<1x4096xf32, #tpu.memory_space<vmem>>, vector<1x64xf32>,
    %188 = vector.extract_strided_slice %113 {offsets = [37, 0], sizes = [1, 64], strides = [1, 1]} : vector<64x64xf32> to vector<1x64xf32>
    %c0_134 = arith.constant 0 : index
    %c2368 = arith.constant 2368 : index
    %189 = vector.load %arg14[%c0_134, %c2368] : memref<1x4096xf32, #tpu.memory_space<vmem>>, vector<1x64xf32>
    tpu.vector_store %arg14[%c0_134, %c2368], %188 {strides = array<i32>} : memref<1x4096xf32, #tpu.memory_space<vmem>>, vector<1x64xf32>,
    %190 = vector.extract_strided_slice %113 {offsets = [38, 0], sizes = [1, 64], strides = [1, 1]} : vector<64x64xf32> to vector<1x64xf32>
    %c0_135 = arith.constant 0 : index
    %c2432 = arith.constant 2432 : index
    %191 = vector.load %arg14[%c0_135, %c2432] : memref<1x4096xf32, #tpu.memory_space<vmem>>, vector<1x64xf32>
    tpu.vector_store %arg14[%c0_135, %c2432], %190 {strides = array<i32>} : memref<1x4096xf32, #tpu.memory_space<vmem>>, vector<1x64xf32>,
    %192 = vector.extract_strided_slice %113 {offsets = [39, 0], sizes = [1, 64], strides = [1, 1]} : vector<64x64xf32> to vector<1x64xf32>
    %c0_136 = arith.constant 0 : index
    %c2496 = arith.constant 2496 : index
    %193 = vector.load %arg14[%c0_136, %c2496] : memref<1x4096xf32, #tpu.memory_space<vmem>>, vector<1x64xf32>
    tpu.vector_store %arg14[%c0_136, %c2496], %192 {strides = array<i32>} : memref<1x4096xf32, #tpu.memory_space<vmem>>, vector<1x64xf32>,
    %194 = vector.extract_strided_slice %113 {offsets = [40, 0], sizes = [1, 64], strides = [1, 1]} : vector<64x64xf32> to vector<1x64xf32>
    %c0_137 = arith.constant 0 : index
    %c2560 = arith.constant 2560 : index
    %195 = vector.load %arg14[%c0_137, %c2560] : memref<1x4096xf32, #tpu.memory_space<vmem>>, vector<1x64xf32>
    tpu.vector_store %arg14[%c0_137, %c2560], %194 {strides = array<i32>} : memref<1x4096xf32, #tpu.memory_space<vmem>>, vector<1x64xf32>,
    %196 = vector.extract_strided_slice %113 {offsets = [41, 0], sizes = [1, 64], strides = [1, 1]} : vector<64x64xf32> to vector<1x64xf32>
    %c0_138 = arith.constant 0 : index
    %c2624 = arith.constant 2624 : index
    %197 = vector.load %arg14[%c0_138, %c2624] : memref<1x4096xf32, #tpu.memory_space<vmem>>, vector<1x64xf32>
    tpu.vector_store %arg14[%c0_138, %c2624], %196 {strides = array<i32>} : memref<1x4096xf32, #tpu.memory_space<vmem>>, vector<1x64xf32>,
    %198 = vector.extract_strided_slice %113 {offsets = [42, 0], sizes = [1, 64], strides = [1, 1]} : vector<64x64xf32> to vector<1x64xf32>
    %c0_139 = arith.constant 0 : index
    %c2688 = arith.constant 2688 : index
    %199 = vector.load %arg14[%c0_139, %c2688] : memref<1x4096xf32, #tpu.memory_space<vmem>>, vector<1x64xf32>
    tpu.vector_store %arg14[%c0_139, %c2688], %198 {strides = array<i32>} : memref<1x4096xf32, #tpu.memory_space<vmem>>, vector<1x64xf32>,
    %200 = vector.extract_strided_slice %113 {offsets = [43, 0], sizes = [1, 64], strides = [1, 1]} : vector<64x64xf32> to vector<1x64xf32>
    %c0_140 = arith.constant 0 : index
    %c2752 = arith.constant 2752 : index
    %201 = vector.load %arg14[%c0_140, %c2752] : memref<1x4096xf32, #tpu.memory_space<vmem>>, vector<1x64xf32>
    tpu.vector_store %arg14[%c0_140, %c2752], %200 {strides = array<i32>} : memref<1x4096xf32, #tpu.memory_space<vmem>>, vector<1x64xf32>,
    %202 = vector.extract_strided_slice %113 {offsets = [44, 0], sizes = [1, 64], strides = [1, 1]} : vector<64x64xf32> to vector<1x64xf32>
    %c0_141 = arith.constant 0 : index
    %c2816 = arith.constant 2816 : index
    %203 = vector.load %arg14[%c0_141, %c2816] : memref<1x4096xf32, #tpu.memory_space<vmem>>, vector<1x64xf32>
    tpu.vector_store %arg14[%c0_141, %c2816], %202 {strides = array<i32>} : memref<1x4096xf32, #tpu.memory_space<vmem>>, vector<1x64xf32>,
    %204 = vector.extract_strided_slice %113 {offsets = [45, 0], sizes = [1, 64], strides = [1, 1]} : vector<64x64xf32> to vector<1x64xf32>
    %c0_142 = arith.constant 0 : index
    %c2880 = arith.constant 2880 : index
    %205 = vector.load %arg14[%c0_142, %c2880] : memref<1x4096xf32, #tpu.memory_space<vmem>>, vector<1x64xf32>
    tpu.vector_store %arg14[%c0_142, %c2880], %204 {strides = array<i32>} : memref<1x4096xf32, #tpu.memory_space<vmem>>, vector<1x64xf32>,
    %206 = vector.extract_strided_slice %113 {offsets = [46, 0], sizes = [1, 64], strides = [1, 1]} : vector<64x64xf32> to vector<1x64xf32>
    %c0_143 = arith.constant 0 : index
    %c2944 = arith.constant 2944 : index
    %207 = vector.load %arg14[%c0_143, %c2944] : memref<1x4096xf32, #tpu.memory_space<vmem>>, vector<1x64xf32>
    tpu.vector_store %arg14[%c0_143, %c2944], %206 {strides = array<i32>} : memref<1x4096xf32, #tpu.memory_space<vmem>>, vector<1x64xf32>,
    %208 = vector.extract_strided_slice %113 {offsets = [47, 0], sizes = [1, 64], strides = [1, 1]} : vector<64x64xf32> to vector<1x64xf32>
    %c0_144 = arith.constant 0 : index
    %c3008 = arith.constant 3008 : index
    %209 = vector.load %arg14[%c0_144, %c3008] : memref<1x4096xf32, #tpu.memory_space<vmem>>, vector<1x64xf32>
    tpu.vector_store %arg14[%c0_144, %c3008], %208 {strides = array<i32>} : memref<1x4096xf32, #tpu.memory_space<vmem>>, vector<1x64xf32>,
    %210 = vector.extract_strided_slice %113 {offsets = [48, 0], sizes = [1, 64], strides = [1, 1]} : vector<64x64xf32> to vector<1x64xf32>
    %c0_145 = arith.constant 0 : index
    %c3072 = arith.constant 3072 : index
    %211 = vector.load %arg14[%c0_145, %c3072] : memref<1x4096xf32, #tpu.memory_space<vmem>>, vector<1x64xf32>
    tpu.vector_store %arg14[%c0_145, %c3072], %210 {strides = array<i32>} : memref<1x4096xf32, #tpu.memory_space<vmem>>, vector<1x64xf32>,
    %212 = vector.extract_strided_slice %113 {offsets = [49, 0], sizes = [1, 64], strides = [1, 1]} : vector<64x64xf32> to vector<1x64xf32>
    %c0_146 = arith.constant 0 : index
    %c3136 = arith.constant 3136 : index
    %213 = vector.load %arg14[%c0_146, %c3136] : memref<1x4096xf32, #tpu.memory_space<vmem>>, vector<1x64xf32>
    tpu.vector_store %arg14[%c0_146, %c3136], %212 {strides = array<i32>} : memref<1x4096xf32, #tpu.memory_space<vmem>>, vector<1x64xf32>,
    %214 = vector.extract_strided_slice %113 {offsets = [50, 0], sizes = [1, 64], strides = [1, 1]} : vector<64x64xf32> to vector<1x64xf32>
    %c0_147 = arith.constant 0 : index
    %c3200 = arith.constant 3200 : index
    %215 = vector.load %arg14[%c0_147, %c3200] : memref<1x4096xf32, #tpu.memory_space<vmem>>, vector<1x64xf32>
    tpu.vector_store %arg14[%c0_147, %c3200], %214 {strides = array<i32>} : memref<1x4096xf32, #tpu.memory_space<vmem>>, vector<1x64xf32>,
    %216 = vector.extract_strided_slice %113 {offsets = [51, 0], sizes = [1, 64], strides = [1, 1]} : vector<64x64xf32> to vector<1x64xf32>
    %c0_148 = arith.constant 0 : index
    %c3264 = arith.constant 3264 : index
    %217 = vector.load %arg14[%c0_148, %c3264] : memref<1x4096xf32, #tpu.memory_space<vmem>>, vector<1x64xf32>
    tpu.vector_store %arg14[%c0_148, %c3264], %216 {strides = array<i32>} : memref<1x4096xf32, #tpu.memory_space<vmem>>, vector<1x64xf32>,
    %218 = vector.extract_strided_slice %113 {offsets = [52, 0], sizes = [1, 64], strides = [1, 1]} : vector<64x64xf32> to vector<1x64xf32>
    %c0_149 = arith.constant 0 : index
    %c3328 = arith.constant 3328 : index
    %219 = vector.load %arg14[%c0_149, %c3328] : memref<1x4096xf32, #tpu.memory_space<vmem>>, vector<1x64xf32>
    tpu.vector_store %arg14[%c0_149, %c3328], %218 {strides = array<i32>} : memref<1x4096xf32, #tpu.memory_space<vmem>>, vector<1x64xf32>,
    %220 = vector.extract_strided_slice %113 {offsets = [53, 0], sizes = [1, 64], strides = [1, 1]} : vector<64x64xf32> to vector<1x64xf32>
    %c0_150 = arith.constant 0 : index
    %c3392 = arith.constant 3392 : index
    %221 = vector.load %arg14[%c0_150, %c3392] : memref<1x4096xf32, #tpu.memory_space<vmem>>, vector<1x64xf32>
    tpu.vector_store %arg14[%c0_150, %c3392], %220 {strides = array<i32>} : memref<1x4096xf32, #tpu.memory_space<vmem>>, vector<1x64xf32>,
    %222 = vector.extract_strided_slice %113 {offsets = [54, 0], sizes = [1, 64], strides = [1, 1]} : vector<64x64xf32> to vector<1x64xf32>
    %c0_151 = arith.constant 0 : index
    %c3456 = arith.constant 3456 : index
    %223 = vector.load %arg14[%c0_151, %c3456] : memref<1x4096xf32, #tpu.memory_space<vmem>>, vector<1x64xf32>
    tpu.vector_store %arg14[%c0_151, %c3456], %222 {strides = array<i32>} : memref<1x4096xf32, #tpu.memory_space<vmem>>, vector<1x64xf32>,
    %224 = vector.extract_strided_slice %113 {offsets = [55, 0], sizes = [1, 64], strides = [1, 1]} : vector<64x64xf32> to vector<1x64xf32>
    %c0_152 = arith.constant 0 : index
    %c3520 = arith.constant 3520 : index
    %225 = vector.load %arg14[%c0_152, %c3520] : memref<1x4096xf32, #tpu.memory_space<vmem>>, vector<1x64xf32>
    tpu.vector_store %arg14[%c0_152, %c3520], %224 {strides = array<i32>} : memref<1x4096xf32, #tpu.memory_space<vmem>>, vector<1x64xf32>,
    %226 = vector.extract_strided_slice %113 {offsets = [56, 0], sizes = [1, 64], strides = [1, 1]} : vector<64x64xf32> to vector<1x64xf32>
    %c0_153 = arith.constant 0 : index
    %c3584 = arith.constant 3584 : index
    %227 = vector.load %arg14[%c0_153, %c3584] : memref<1x4096xf32, #tpu.memory_space<vmem>>, vector<1x64xf32>
    tpu.vector_store %arg14[%c0_153, %c3584], %226 {strides = array<i32>} : memref<1x4096xf32, #tpu.memory_space<vmem>>, vector<1x64xf32>,
    %228 = vector.extract_strided_slice %113 {offsets = [57, 0], sizes = [1, 64], strides = [1, 1]} : vector<64x64xf32> to vector<1x64xf32>
    %c0_154 = arith.constant 0 : index
    %c3648 = arith.constant 3648 : index
    %229 = vector.load %arg14[%c0_154, %c3648] : memref<1x4096xf32, #tpu.memory_space<vmem>>, vector<1x64xf32>
    tpu.vector_store %arg14[%c0_154, %c3648], %228 {strides = array<i32>} : memref<1x4096xf32, #tpu.memory_space<vmem>>, vector<1x64xf32>,
    %230 = vector.extract_strided_slice %113 {offsets = [58, 0], sizes = [1, 64], strides = [1, 1]} : vector<64x64xf32> to vector<1x64xf32>
    %c0_155 = arith.constant 0 : index
    %c3712 = arith.constant 3712 : index
    %231 = vector.load %arg14[%c0_155, %c3712] : memref<1x4096xf32, #tpu.memory_space<vmem>>, vector<1x64xf32>
    tpu.vector_store %arg14[%c0_155, %c3712], %230 {strides = array<i32>} : memref<1x4096xf32, #tpu.memory_space<vmem>>, vector<1x64xf32>,
    %232 = vector.extract_strided_slice %113 {offsets = [59, 0], sizes = [1, 64], strides = [1, 1]} : vector<64x64xf32> to vector<1x64xf32>
    %c0_156 = arith.constant 0 : index
    %c3776 = arith.constant 3776 : index
    %233 = vector.load %arg14[%c0_156, %c3776] : memref<1x4096xf32, #tpu.memory_space<vmem>>, vector<1x64xf32>
    tpu.vector_store %arg14[%c0_156, %c3776], %232 {strides = array<i32>} : memref<1x4096xf32, #tpu.memory_space<vmem>>, vector<1x64xf32>,
    %234 = vector.extract_strided_slice %113 {offsets = [60, 0], sizes = [1, 64], strides = [1, 1]} : vector<64x64xf32> to vector<1x64xf32>
    %c0_157 = arith.constant 0 : index
    %c3840 = arith.constant 3840 : index
    %235 = vector.load %arg14[%c0_157, %c3840] : memref<1x4096xf32, #tpu.memory_space<vmem>>, vector<1x64xf32>
    tpu.vector_store %arg14[%c0_157, %c3840], %234 {strides = array<i32>} : memref<1x4096xf32, #tpu.memory_space<vmem>>, vector<1x64xf32>,
    %236 = vector.extract_strided_slice %113 {offsets = [61, 0], sizes = [1, 64], strides = [1, 1]} : vector<64x64xf32> to vector<1x64xf32>
    %c0_158 = arith.constant 0 : index
    %c3904 = arith.constant 3904 : index
    %237 = vector.load %arg14[%c0_158, %c3904] : memref<1x4096xf32, #tpu.memory_space<vmem>>, vector<1x64xf32>
    tpu.vector_store %arg14[%c0_158, %c3904], %236 {strides = array<i32>} : memref<1x4096xf32, #tpu.memory_space<vmem>>, vector<1x64xf32>,
    %238 = vector.extract_strided_slice %113 {offsets = [62, 0], sizes = [1, 64], strides = [1, 1]} : vector<64x64xf32> to vector<1x64xf32>
    %c0_159 = arith.constant 0 : index
    %c3968 = arith.constant 3968 : index
    %239 = vector.load %arg14[%c0_159, %c3968] : memref<1x4096xf32, #tpu.memory_space<vmem>>, vector<1x64xf32>
    tpu.vector_store %arg14[%c0_159, %c3968], %238 {strides = array<i32>} : memref<1x4096xf32, #tpu.memory_space<vmem>>, vector<1x64xf32>,
    %240 = vector.extract_strided_slice %113 {offsets = [63, 0], sizes = [1, 64], strides = [1, 1]} : vector<64x64xf32> to vector<1x64xf32>
    %c0_160 = arith.constant 0 : index
    %c4032 = arith.constant 4032 : index
    %241 = vector.load %arg14[%c0_160, %c4032] : memref<1x4096xf32, #tpu.memory_space<vmem>>, vector<1x64xf32>
    tpu.vector_store %arg14[%c0_160, %c4032], %240 {strides = array<i32>} : memref<1x4096xf32, #tpu.memory_space<vmem>>, vector<1x64xf32>,
    %c0_161 = arith.constant 0 : index
    %c0_162 = arith.constant 0 : index
    %242 = vector.load %arg14[%c0_161, %c0_162] : memref<1x4096xf32, #tpu.memory_space<vmem>>, vector<1x4096xf32>
    %c0_163 = arith.constant 0 : index
    %c0_164 = arith.constant 0 : index
    %243 = vector.load %arg6[%c0_163, %c0_164] : memref<4096x128xf32, #tpu.memory_space<vmem>>, vector<4096x128xf32>
    %cst_165 = arith.constant dense<0.000000e+00> : vector<1x128xf32>
    %244 = tpu.matmul %242, %243, %cst_165 {dimension_numbers = #tpu.dot_dimension_numbers<[1], [0], [0], [1], [0, 0, 1, 1], [], []>} : vector<1x4096xf32>, vector<4096x128xf32>, vector<1x128xf32> -> vector<1x128xf32>
    %c0_166 = arith.constant 0 : index
    %c0_167 = arith.constant 0 : index
    %245 = vector.load %arg7[%c0_166, %c0_167] : memref<1x128xf32, #tpu.memory_space<vmem>>, vector<1x128xf32>
    %246 = arith.addf %244, %245 : vector<1x128xf32>
    %cst_168 = arith.constant 0.000000e+00 : f32
    %247 = vector.broadcast %cst_168 : f32 to vector<1x128xf32>
    %248 = arith.maximumf %246, %247 : vector<1x128xf32>
    %c0_169 = arith.constant 0 : index
    %c0_170 = arith.constant 0 : index
    %249 = vector.load %arg8[%c0_169, %c0_170] : memref<1x128xf32, #tpu.memory_space<vmem>>, vector<1x128xf32>
    %250 = arith.mulf %248, %249 : vector<1x128xf32>
    %cst_171 = arith.constant dense<0.000000e+00> : vector<1xf32>
    %251 = vector.multi_reduction <add>, %250, %cst_171 [1] : vector<1x128xf32> to vector<1xf32>
    %252 = vector.shape_cast %251 : vector<1xf32> to vector<1x1xf32>
    %c0_172 = arith.constant 0 : index
    %c0_173 = arith.constant 0 : index
    %253 = vector.load %arg9[%c0_172, %c0_173] : memref<1x1xf32, #tpu.memory_space<vmem>>, vector<1x1xf32>
    %254 = arith.addf %252, %253 : vector<1x1xf32>
    %255 = vector.shape_cast %254 : vector<1x1xf32> to vector<1x1xf32>
    %256 = vector.broadcast %255 : vector<1x1xf32> to vector<1x128xf32>
    %257 = vector.shape_cast %256 : vector<1x128xf32> to vector<1x1x128xf32>
    %c0_174 = arith.constant 0 : index
    %c0_175 = arith.constant 0 : index
    %c0_176 = arith.constant 0 : index
    %258 = vector.load %arg10[%c0_174, %c0_175, %c0_176] : memref<1x1x128xf32, #tpu.memory_space<vmem>>, vector<1x1x128xf32>
    tpu.vector_store %arg10[%c0_174, %c0_175, %c0_176], %257 {strides = array<i32>} : memref<1x1x128xf32, #tpu.memory_space<vmem>>, vector<1x1x128xf32>,
    return
  }
  func.func @transform_0(%arg0: i32) -> (i32, i32, i32, i32) {
    %c0_i32 = arith.constant 0 : i32
    %c0_i32_0 = arith.constant 0 : i32
    %c0_i32_1 = arith.constant 0 : i32
    %c0_i32_2 = arith.constant 0 : i32
    return %arg0, %c0_i32, %c0_i32_0, %c0_i32_1 : i32, i32, i32, i32
  }
  func.func @transform_1(%arg0: i32) -> (i32, i32) {
    %c0_i32 = arith.constant 0 : i32
    %c0_i32_0 = arith.constant 0 : i32
    %c0_i32_1 = arith.constant 0 : i32
    return %c0_i32, %c0_i32_0 : i32, i32
  }
  func.func @transform_2(%arg0: i32) -> (i32, i32) {
    %c0_i32 = arith.constant 0 : i32
    %c0_i32_0 = arith.constant 0 : i32
    %c0_i32_1 = arith.constant 0 : i32
    return %c0_i32, %c0_i32_0 : i32, i32
  }
  func.func @transform_3(%arg0: i32) -> (i32, i32) {
    %c0_i32 = arith.constant 0 : i32
    %c0_i32_0 = arith.constant 0 : i32
    %c0_i32_1 = arith.constant 0 : i32
    return %c0_i32, %c0_i32_0 : i32, i32
  }
  func.func @transform_4(%arg0: i32) -> (i32, i32) {
    %c0_i32 = arith.constant 0 : i32
    %c0_i32_0 = arith.constant 0 : i32
    %c0_i32_1 = arith.constant 0 : i32
    return %c0_i32, %c0_i32_0 : i32, i32
  }
  func.func @transform_5(%arg0: i32) -> (i32, i32) {
    %c0_i32 = arith.constant 0 : i32
    %c0_i32_0 = arith.constant 0 : i32
    %c0_i32_1 = arith.constant 0 : i32
    return %c0_i32, %c0_i32_0 : i32, i32
  }
  func.func @transform_6(%arg0: i32) -> (i32, i32) {
    %c0_i32 = arith.constant 0 : i32
    %c0_i32_0 = arith.constant 0 : i32
    %c0_i32_1 = arith.constant 0 : i32
    return %c0_i32, %c0_i32_0 : i32, i32
  }
  func.func @transform_7(%arg0: i32) -> (i32, i32) {
    %c0_i32 = arith.constant 0 : i32
    %c0_i32_0 = arith.constant 0 : i32
    %c0_i32_1 = arith.constant 0 : i32
    return %c0_i32, %c0_i32_0 : i32, i32
  }
  func.func @transform_8(%arg0: i32) -> (i32, i32) {
    %c0_i32 = arith.constant 0 : i32
    %c0_i32_0 = arith.constant 0 : i32
    %c0_i32_1 = arith.constant 0 : i32
    return %c0_i32, %c0_i32_0 : i32, i32
  }
  func.func @transform_9(%arg0: i32) -> (i32, i32, i32) {
    %c0_i32 = arith.constant 0 : i32
    %c0_i32_0 = arith.constant 0 : i32
    %c0_i32_1 = arith.constant 0 : i32
    return %arg0, %c0_i32, %c0_i32_0 : i32, i32, i32
  }
}

</mosaic_0001>

<llo_original>
// kernel: tpu_custom_call.1
$region0: #{tpu_custom_call.1}
  #allocation0 [shape = 'u32[]', space=smem, size = 0x4, offset = 0x4, fixed_abs, tag = 'smem constant byte address 0x4 - core index']
  #allocation1 [shape = 'u32[72,128]{1,0:T(1,128)}', space=vmem, size = 0x9000, scoped, tag = 'internal scratch']
  #allocation2 [shape = 'f32[10,10,1]{2,1,0:T(8,128)}', space=vmem, size = 0x14000, scoped, tag = 'scratch operand']
  #allocation3 [shape = 'f32[10,10,32]{2,1,0:T(8,128)}', space=vmem, size = 0x14000, scoped, tag = 'scratch operand']
  #allocation4 [shape = 'f32[64,288]{1,0:T(8,128)}', space=vmem, size = 0x18000, scoped, tag = 'scratch operand']
  #allocation5 [shape = 'f32[1,4096]{1,0:T(1,128)}', space=vmem, size = 0x4000, scoped, tag = 'scratch operand']
  #allocation6 [shape = 'f32[1,1]{1,0:T(1,128)S(1)}', space=vmem, size = 0x200, scoped, tag = 'scoped memory for tpu_custom_call.1']
  %s0 = inlined_call_operand.vmem [shape: f32[2,8,8,1], index: 0, kind: input, shape index: {}]
  %s1 = inlined_call_operand.hbm [shape: f32[9,32], index: 1, kind: input, shape index: {}]
  %s2 = inlined_call_operand.hbm [shape: f32[1,32], index: 2, kind: input, shape index: {}]
  %s3 = inlined_call_operand.vmem [shape: f32[288,64], index: 3, kind: input, shape index: {}]
  %s4 = inlined_call_operand.hbm [shape: f32[1,64], index: 4, kind: input, shape index: {}]
  %s5 = inlined_call_operand.hbm [shape: f32[4096,128], index: 5, kind: input, shape index: {}]
  %s6 = inlined_call_operand.hbm [shape: f32[1,128], index: 6, kind: input, shape index: {}]
  %s7 = inlined_call_operand.hbm [shape: f32[1,128], index: 7, kind: input, shape index: {}]
  %s8 = inlined_call_operand.<no memory space> [shape: f32[1,1], index: 8, kind: input, shape index: {}]
  %s9 = inlined_call_operand.hbm [shape: f32[2,1,128], index: 9, kind: output, shape index: {}]
  %s10 = sld [smem:[#allocation0]]
  $region93: #{tpu_custom_call.1} parent=0
    _
  %s12 = ssub.s32 1, %s10
  %s13 = scalar_select 0, %s12, %s10
  %v14 = vstv %s8
  %15 = vst [vmem:[#allocation6] sm:$0x1] %v14
  $region1: #{tpu_custom_call.1} parent=0
    #allocation7 [shape = 'u8[8192]{0}', space=vmem, size = 0x2000, scoped, tag = 'input window, operand 1, single buffered']
    #allocation8 [shape = 's32[2]{0}', space=sflag, size = 0x8, scoped, tag = 'scoped memory for tpu_custom_call.1']
    #allocation9 [shape = 's32[2]{0}', space=sflag, size = 0x8, scoped, tag = 'scoped memory for tpu_custom_call.1']
    #allocation10 [shape = 'u8[512]{0}', space=vmem, size = 0x400, scoped, tag = 'input window, operand 2, single buffered']
    #allocation11 [shape = 's32[1]{0}', space=sflag, size = 0x4, scoped, tag = 'scoped memory for tpu_custom_call.1']
    #allocation12 [shape = 'u8[512]{0}', space=vmem, size = 0x400, scoped, tag = 'input window, operand 4, single buffered']
    #allocation13 [shape = 'u8[2097152]{0}', space=vmem, size = 0x200000, scoped, tag = 'input window, operand 5, single buffered']
    #allocation14 [shape = 's32[1]{0}', space=sflag, size = 0x4, scoped, tag = 'scoped memory for tpu_custom_call.1']
    #allocation15 [shape = 'u8[512]{0}', space=vmem, size = 0x400, scoped, tag = 'input window, operand 6, single buffered']
    #allocation16 [shape = 'u8[512]{0}', space=vmem, size = 0x400, scoped, tag = 'input window, operand 7, single buffered']
    #allocation17 [shape = 's32[1]{0}', space=sflag, size = 0x4, scoped, tag = 'scoped memory for tpu_custom_call.1']
    #allocation18 [shape = 'u8[1024]{0}', space=vmem, size = 0x400, scoped, tag = 'output window, operand 0']
    %16 = vsyncpa [#allocation8], 0
    %17 = vsyncpa [#allocation11], 0
    %18 = vsyncpa [#allocation14], 0
    %19 = vsyncpa [#allocation17], 0
    %20 = vsyncpa [#allocation9], 0
    %s21 = scalar_lea.sflag [#allocation9], 1
    %22 = vsyncpa %s21, 0
    loop: start=0, step=1, limit=4
    $region2: #{tpu_custom_call.1} parent=1 // loop_pre_header
      _
    $region3: #{tpu_custom_call.1} parent=1 // loop_header
      %s24 = sphi 0, %s28
      %p25 = scmp.ge.s32.totalorder %s24, 4
      %s34 = sphi 0, %s36
      %s37 = sphi 0, %s34
      %s38 = sphi 0, %s37
      %s54 = sphi 0, %s38
      %s58 = sphi 0, %s58
      %s60 = sphi 0, %s58
      %s61 = sphi 0, %s60
      %s75 = sphi 0, %s61
      %s79 = sphi 0, %s79
      %s81 = sphi 0, %s79
      %s82 = sphi 0, %s81
      %s96 = sphi 0, %s82
      %s100 = sphi 0, %s100
      %s102 = sphi 0, %s100
      %s103 = sphi 0, %s102
      %s117 = sphi 0, %s103
      %s121 = sphi 0, %s121
      %s123 = sphi 0, %s121
      %s124 = sphi 0, %s123
      %s138 = sphi 0, %s124
      %s142 = sphi 0, %s142
      %s144 = sphi 0, %s142
      %s145 = sphi 0, %s144
      %s159 = sphi 0, %s145
      %s163 = sphi 0, %s163
      %s165 = sphi 0, %s163
      %s166 = sphi 0, %s165
      %s180 = sphi 0, %s166
      %s184 = sphi 0, %s184
      %s186 = sphi 0, %s184
      %s187 = sphi 0, %s186
      %s201 = sphi 0, %s187
      %s205 = sphi 0, %s205
      %s207 = sphi 0, %s205
      %s208 = sphi 0, %s207
      %s222 = sphi 0, %s208
      %s228 = sphi 0, %s230
      %s231 = sphi 0, %s228
      %s232 = sphi 0, %s231
      %s248 = sphi 0, %s232
    $region4: #{tpu_custom_call.1} parent=1 // loop_header_branch
      %27 = sbr.rel (%p25) target = $region8
    $region5: #{tpu_custom_call.1} parent=1 // loop_body
      %s29 = ssub.s32 %s24, 1
      %s30 = ssub.s32 %s24, 2
      %s31 = sadd.s32 %s24, 1
      %s32 = ssub.s32 %s24, %s31
      %p33 = scmp.eq.s32.totalorder %s32, 0
      %s35 = sadd.s32 %s34, 1
      %s36 = scalar_select %p33, %s34, %s35
      %p39 = pneg %p33
      %p40 = scmp.eq.s32.totalorder %s24, 1
      %p41 = por %p39, %p40
      %p42 = scmp.ne.s32.totalorder %s34, %s37
      %p43 = scmp.eq.s32.totalorder %s24, 0
      %p44 = por %p42, %p43
      %p45 = scmp.ne.s32.totalorder %s34, %s37
      %p46 = scmp.eq.s32.totalorder %s29, 1
      %p47 = por %p45, %p46
      %p48 = scmp.ne.s32.totalorder %s37, %s38
      %p49 = scmp.eq.s32.totalorder %s29, 0
      %p50 = por %p48, %p49
      %p51 = scmp.ne.s32.totalorder %s37, %s38
      %p52 = scmp.eq.s32.totalorder %s30, 1
      %p53 = por %p51, %p52
      %p55 = scmp.ne.s32.totalorder %s38, %s54
      %p56 = scmp.eq.s32.totalorder %s30, 0
      %p57 = por %p55, %p56
      %s59 = sadd.s32 %s58, 1
      %p62 = scmp.eq.s32.totalorder %s24, 1
      %p63 = scmp.ne.s32.totalorder %s58, %s60
      %p64 = scmp.eq.s32.totalorder %s24, 0
      %p65 = por %p63, %p64
      %p66 = scmp.ne.s32.totalorder %s58, %s60
      %p67 = scmp.eq.s32.totalorder %s29, 1
      %p68 = por %p66, %p67
      %p69 = scmp.ne.s32.totalorder %s60, %s61
      %p70 = scmp.eq.s32.totalorder %s29, 0
      %p71 = por %p69, %p70
      %p72 = scmp.ne.s32.totalorder %s60, %s61
      %p73 = scmp.eq.s32.totalorder %s30, 1
      %p74 = por %p72, %p73
      %p76 = scmp.ne.s32.totalorder %s61, %s75
      %p77 = scmp.eq.s32.totalorder %s30, 0
      %p78 = por %p76, %p77
      %s80 = sadd.s32 %s79, 1
      %p83 = scmp.eq.s32.totalorder %s24, 1
      %p84 = scmp.ne.s32.totalorder %s79, %s81
      %p85 = scmp.eq.s32.totalorder %s24, 0
      %p86 = por %p84, %p85
      %p87 = scmp.ne.s32.totalorder %s79, %s81
      %p88 = scmp.eq.s32.totalorder %s29, 1
      %p89 = por %p87, %p88
      %p90 = scmp.ne.s32.totalorder %s81, %s82
      %p91 = scmp.eq.s32.totalorder %s29, 0
      %p92 = por %p90, %p91
      %p93 = scmp.ne.s32.totalorder %s81, %s82
      %p94 = scmp.eq.s32.totalorder %s30, 1
      %p95 = por %p93, %p94
      %p97 = scmp.ne.s32.totalorder %s82, %s96
      %p98 = scmp.eq.s32.totalorder %s30, 0
      %p99 = por %p97, %p98
      %s101 = sadd.s32 %s100, 1
      %p104 = scmp.eq.s32.totalorder %s24, 1
      %p105 = scmp.ne.s32.totalorder %s100, %s102
      %p106 = scmp.eq.s32.totalorder %s24, 0
      %p107 = por %p105, %p106
      %p108 = scmp.ne.s32.totalorder %s100, %s102
      %p109 = scmp.eq.s32.totalorder %s29, 1
      %p110 = por %p108, %p109
      %p111 = scmp.ne.s32.totalorder %s102, %s103
      %p112 = scmp.eq.s32.totalorder %s29, 0
      %p113 = por %p111, %p112
      %p114 = scmp.ne.s32.totalorder %s102, %s103
      %p115 = scmp.eq.s32.totalorder %s30, 1
      %p116 = por %p114, %p115
      %p118 = scmp.ne.s32.totalorder %s103, %s117
      %p119 = scmp.eq.s32.totalorder %s30, 0
      %p120 = por %p118, %p119
      %s122 = sadd.s32 %s121, 1
      %p125 = scmp.eq.s32.totalorder %s24, 1
      %p126 = scmp.ne.s32.totalorder %s121, %s123
      %p127 = scmp.eq.s32.totalorder %s24, 0
      %p128 = por %p126, %p127
      %p129 = scmp.ne.s32.totalorder %s121, %s123
      %p130 = scmp.eq.s32.totalorder %s29, 1
      %p131 = por %p129, %p130
      %p132 = scmp.ne.s32.totalorder %s123, %s124
      %p133 = scmp.eq.s32.totalorder %s29, 0
      %p134 = por %p132, %p133
      %p135 = scmp.ne.s32.totalorder %s123, %s124
      %p136 = scmp.eq.s32.totalorder %s30, 1
      %p137 = por %p135, %p136
      %p139 = scmp.ne.s32.totalorder %s124, %s138
      %p140 = scmp.eq.s32.totalorder %s30, 0
      %p141 = por %p139, %p140
      %s143 = sadd.s32 %s142, 1
      %p146 = scmp.eq.s32.totalorder %s24, 1
      %p147 = scmp.ne.s32.totalorder %s142, %s144
      %p148 = scmp.eq.s32.totalorder %s24, 0
      %p149 = por %p147, %p148
      %p150 = scmp.ne.s32.totalorder %s142, %s144
      %p151 = scmp.eq.s32.totalorder %s29, 1
      %p152 = por %p150, %p151
      %p153 = scmp.ne.s32.totalorder %s144, %s145
      %p154 = scmp.eq.s32.totalorder %s29, 0
      %p155 = por %p153, %p154
      %p156 = scmp.ne.s32.totalorder %s144, %s145
      %p157 = scmp.eq.s32.totalorder %s30, 1
      %p158 = por %p156, %p157
      %p160 = scmp.ne.s32.totalorder %s145, %s159
      %p161 = scmp.eq.s32.totalorder %s30, 0
      %p162 = por %p160, %p161
      %s164 = sadd.s32 %s163, 1
      %p167 = scmp.eq.s32.totalorder %s24, 1
      %p168 = scmp.ne.s32.totalorder %s163, %s165
      %p169 = scmp.eq.s32.totalorder %s24, 0
      %p170 = por %p168, %p169
      %p171 = scmp.ne.s32.totalorder %s163, %s165
      %p172 = scmp.eq.s32.totalorder %s29, 1
      %p173 = por %p171, %p172
      %p174 = scmp.ne.s32.totalorder %s165, %s166
      %p175 = scmp.eq.s32.totalorder %s29, 0
      %p176 = por %p174, %p175
      %p177 = scmp.ne.s32.totalorder %s165, %s166
      %p178 = scmp.eq.s32.totalorder %s30, 1
      %p179 = por %p177, %p178
      %p181 = scmp.ne.s32.totalorder %s166, %s180
      %p182 = scmp.eq.s32.totalorder %s30, 0
      %p183 = por %p181, %p182
      %s185 = sadd.s32 %s184, 1
      %p188 = scmp.eq.s32.totalorder %s24, 1
      %p189 = scmp.ne.s32.totalorder %s184, %s186
      %p190 = scmp.eq.s32.totalorder %s24, 0
      %p191 = por %p189, %p190
      %p192 = scmp.ne.s32.totalorder %s184, %s186
      %p193 = scmp.eq.s32.totalorder %s29, 1
      %p194 = por %p192, %p193
      %p195 = scmp.ne.s32.totalorder %s186, %s187
      %p196 = scmp.eq.s32.totalorder %s29, 0
      %p197 = por %p195, %p196
      %p198 = scmp.ne.s32.totalorder %s186, %s187
      %p199 = scmp.eq.s32.totalorder %s30, 1
      %p200 = por %p198, %p199
      %p202 = scmp.ne.s32.totalorder %s187, %s201
      %p203 = scmp.eq.s32.totalorder %s30, 0
      %p204 = por %p202, %p203
      %s206 = sadd.s32 %s205, 1
      %p209 = scmp.eq.s32.totalorder %s24, 1
      %p210 = scmp.ne.s32.totalorder %s205, %s207
      %p211 = scmp.eq.s32.totalorder %s24, 0
      %p212 = por %p210, %p211
      %p213 = scmp.ne.s32.totalorder %s205, %s207
      %p214 = scmp.eq.s32.totalorder %s29, 1
      %p215 = por %p213, %p214
      %p216 = scmp.ne.s32.totalorder %s207, %s208
      %p217 = scmp.eq.s32.totalorder %s29, 0
      %p218 = por %p216, %p217
      %p219 = scmp.ne.s32.totalorder %s207, %s208
      %p220 = scmp.eq.s32.totalorder %s30, 1
      %p221 = por %p219, %p220
      %p223 = scmp.ne.s32.totalorder %s208, %s222
      %p224 = scmp.eq.s32.totalorder %s30, 0
      %p225 = por %p223, %p224
      %s226 = ssub.s32 %s24, %s31
      %p227 = scmp.eq.s32.totalorder %s226, 0
      %s229 = sadd.s32 %s228, 1
      %s230 = scalar_select %p227, %s228, %s229
      %p233 = pneg %p227
      %p234 = scmp.eq.s32.totalorder %s24, 1
      %p235 = por %p233, %p234
      %p236 = scmp.ne.s32.totalorder %s228, %s231
      %p237 = scmp.eq.s32.totalorder %s24, 0
      %p238 = por %p236, %p237
      %p239 = scmp.ne.s32.totalorder %s228, %s231
      %p240 = scmp.eq.s32.totalorder %s29, 1
      %p241 = por %p239, %p240
      %p242 = scmp.ne.s32.totalorder %s231, %s232
      %p243 = scmp.eq.s32.totalorder %s29, 0
      %p244 = por %p242, %p243
      %p245 = scmp.ne.s32.totalorder %s231, %s232
      %p246 = scmp.eq.s32.totalorder %s30, 1
      %p247 = por %p245, %p246
      %p249 = scmp.ne.s32.totalorder %s232, %s248
      %p250 = scmp.eq.s32.totalorder %s30, 0
      %p251 = por %p249, %p250
      %p252 = scmp.le.s32.totalorder 1, %s24
      %p253 = scmp.lt.s32.totalorder %s24, 3
      %p254 = pnand %p252, %p253
      %p255 = pneg %p254
      // Predicated region
      $region9: #{tpu_custom_call.1} parent=5 // pred_check
        _
      $region10: #{tpu_custom_call.1} parent=5 // pred_check_branch
        %257 = sbr.rel (%p254) target = $region12
      $region11: #{tpu_custom_call.1} parent=5 // pred_region
        %s258 = ssub.s32 %s24, 1
        // Predicated region
        $region13: #{tpu_custom_call.1} parent=11 // pred_check
          %p259 = pneg %p71
        $region14: #{tpu_custom_call.1} parent=11 // pred_check_branch
          %261 = sbr.rel (%p259) target = $region16
        $region15: #{tpu_custom_call.1} parent=11 // pred_region
          %263 = vsyncadd [#allocation8], 0
          %s264 = sshll.u32 %s1, 4
          %s265 = int_to_ptr.hbm [resolvable:$true] %s264
          %s266 = sshll.u32 [#allocation7], 4
          %s267 = int_to_ptr.vmem [resolvable:$true] %s266
          %272 = dma.hbm_to_vmem [thread:$0]  %s265, 256, %s267, [#allocation8], 128, 128, 8
        $region16: #{tpu_custom_call.1} parent=11 // pred_fallthru
          _
        // Predicated region
        $region17: #{tpu_custom_call.1} parent=11 // pred_check
          %p273 = pneg %p92
        $region18: #{tpu_custom_call.1} parent=11 // pred_check_branch
          %275 = sbr.rel (%p273) target = $region20
        $region19: #{tpu_custom_call.1} parent=11 // pred_region
          %277 = vsyncadd [#allocation11], 0
          %s279 = sshll.u32 %s2, 4
          %s280 = int_to_ptr.hbm [resolvable:$true] %s279
          %s281 = sshll.u32 [#allocation10], 4
          %s282 = int_to_ptr.vmem [resolvable:$true] %s281
          %284 = dma.hbm_to_vmem [thread:$0]  %s280, 16, %s282, [#allocation11]
        $region20: #{tpu_custom_call.1} parent=11 // pred_fallthru
          _
        // Predicated region
        $region21: #{tpu_custom_call.1} parent=11 // pred_check
          %p285 = pneg %p113
        $region22: #{tpu_custom_call.1} parent=11 // pred_check_branch
          %287 = sbr.rel (%p285) target = $region24
        $region23: #{tpu_custom_call.1} parent=11 // pred_region
          _
        $region24: #{tpu_custom_call.1} parent=11 // pred_fallthru
          _
        // Predicated region
        $region25: #{tpu_custom_call.1} parent=11 // pred_check
          %p288 = pneg %p134
        $region26: #{tpu_custom_call.1} parent=11 // pred_check_branch
          %290 = sbr.rel (%p288) target = $region28
        $region27: #{tpu_custom_call.1} parent=11 // pred_region
          %292 = vsyncadd [#allocation11], 0
          %s294 = sshll.u32 %s4, 4
          %s295 = int_to_ptr.hbm [resolvable:$true] %s294
          %s296 = sshll.u32 [#allocation12], 4
          %s297 = int_to_ptr.vmem [resolvable:$true] %s296
          %299 = dma.hbm_to_vmem [thread:$0]  %s295, 16, %s297, [#allocation11]
        $region28: #{tpu_custom_call.1} parent=11 // pred_fallthru
          _
        // Predicated region
        $region29: #{tpu_custom_call.1} parent=11 // pred_check
          %p300 = pneg %p155
        $region30: #{tpu_custom_call.1} parent=11 // pred_check_branch
          %302 = sbr.rel (%p300) target = $region32
        $region31: #{tpu_custom_call.1} parent=11 // pred_region
          %304 = vsyncadd [#allocation14], 0
          %s305 = sshll.u32 %s5, 4
          %s306 = int_to_ptr.hbm [resolvable:$true] %s305
          %s307 = sshll.u32 [#allocation13], 4
          %s308 = int_to_ptr.vmem [resolvable:$true] %s307
          %313 = dma.hbm_to_vmem [thread:$0]  %s306, 65536, %s308, [#allocation14], 128, 128, 8
        $region32: #{tpu_custom_call.1} parent=11 // pred_fallthru
          _
        // Predicated region
        $region33: #{tpu_custom_call.1} parent=11 // pred_check
          %p314 = pneg %p176
        $region34: #{tpu_custom_call.1} parent=11 // pred_check_branch
          %316 = sbr.rel (%p314) target = $region36
        $region35: #{tpu_custom_call.1} parent=11 // pred_region
          %318 = vsyncadd [#allocation14], 0
          %s320 = sshll.u32 %s6, 4
          %s321 = int_to_ptr.hbm [resolvable:$true] %s320
          %s322 = sshll.u32 [#allocation15], 4
          %s323 = int_to_ptr.vmem [resolvable:$true] %s322
          %325 = dma.hbm_to_vmem [thread:$0]  %s321, 16, %s323, [#allocation14]
        $region36: #{tpu_custom_call.1} parent=11 // pred_fallthru
          _
        // Predicated region
        $region37: #{tpu_custom_call.1} parent=11 // pred_check
          %p326 = pneg %p197
        $region38: #{tpu_custom_call.1} parent=11 // pred_check_branch
          %328 = sbr.rel (%p326) target = $region40
        $region39: #{tpu_custom_call.1} parent=11 // pred_region
          %330 = vsyncadd [#allocation17], 0
          %s332 = sshll.u32 %s7, 4
          %s333 = int_to_ptr.hbm [resolvable:$true] %s332
          %s334 = sshll.u32 [#allocation16], 4
          %s335 = int_to_ptr.vmem [resolvable:$true] %s334
          %337 = dma.hbm_to_vmem [thread:$0]  %s333, 16, %s335, [#allocation17]
        $region40: #{tpu_custom_call.1} parent=11 // pred_fallthru
          _
        // Predicated region
        $region41: #{tpu_custom_call.1} parent=11 // pred_check
          %p338 = pneg %p218
        $region42: #{tpu_custom_call.1} parent=11 // pred_check_branch
          %340 = sbr.rel (%p338) target = $region44
        $region43: #{tpu_custom_call.1} parent=11 // pred_region
          _
        $region44: #{tpu_custom_call.1} parent=11 // pred_fallthru
          _
      $region12: #{tpu_custom_call.1} parent=5 // pred_fallthru
        _
      %p341 = scmp.lt.s32.totalorder %s24, 2
      // Predicated region
      $region45: #{tpu_custom_call.1} parent=5 // pred_check
        %p342 = pneg %p341
      $region46: #{tpu_custom_call.1} parent=5 // pred_check_branch
        %344 = sbr.rel (%p342) target = $region48
      $region47: #{tpu_custom_call.1} parent=5 // pred_region
        // Predicated region
        $region49: #{tpu_custom_call.1} parent=47 // pred_check
          %p345 = pneg %p44
        $region50: #{tpu_custom_call.1} parent=47 // pred_check_branch
          %347 = sbr.rel (%p345) target = $region52
        $region51: #{tpu_custom_call.1} parent=47 // pred_region
          %p348 = scmp.lt.s32.totalorder %s24, 1
          %s349 = scalar_select %p348, %s24, 1
          %s350 = smul.addr %s349, 8
          %s351 = smul.addr %s350, 8
          %s352 = scalar_lea.vmem %s0, %s351
        $region52: #{tpu_custom_call.1} parent=47 // pred_fallthru
          _
      $region48: #{tpu_custom_call.1} parent=5 // pred_fallthru
        _
      %p353 = scmp.le.s32.totalorder 1, %s24
      %p354 = scmp.lt.s32.totalorder %s24, 3
      %p355 = pnand %p353, %p354
      %p356 = pneg %p355
      // Predicated region
      $region53: #{tpu_custom_call.1} parent=5 // pred_check
        _
      $region54: #{tpu_custom_call.1} parent=5 // pred_check_branch
        %358 = sbr.rel (%p355) target = $region56
      $region55: #{tpu_custom_call.1} parent=5 // pred_region
        %s359 = ssub.s32 %s24, 1
        // Predicated region
        $region57: #{tpu_custom_call.1} parent=55 // pred_check
          %p360 = pneg %p71
        $region58: #{tpu_custom_call.1} parent=55 // pred_check_branch
          %362 = sbr.rel (%p360) target = $region60
        $region59: #{tpu_custom_call.1} parent=55 // pred_region
          %364 = dma.done [#allocation8], 256
        $region60: #{tpu_custom_call.1} parent=55 // pred_fallthru
          _
        // Predicated region
        $region61: #{tpu_custom_call.1} parent=55 // pred_check
          %p365 = pneg %p92
        $region62: #{tpu_custom_call.1} parent=55 // pred_check_branch
          %367 = sbr.rel (%p365) target = $region64
        $region63: #{tpu_custom_call.1} parent=55 // pred_region
          %369 = dma.done [#allocation11], 16
        $region64: #{tpu_custom_call.1} parent=55 // pred_fallthru
          _
        // Predicated region
        $region65: #{tpu_custom_call.1} parent=55 // pred_check
          %p370 = pneg %p134
        $region66: #{tpu_custom_call.1} parent=55 // pred_check_branch
          %372 = sbr.rel (%p370) target = $region68
        $region67: #{tpu_custom_call.1} parent=55 // pred_region
          %374 = dma.done [#allocation11], 16
        $region68: #{tpu_custom_call.1} parent=55 // pred_fallthru
          _
        // Predicated region
        $region69: #{tpu_custom_call.1} parent=55 // pred_check
          %p375 = pneg %p155
        $region70: #{tpu_custom_call.1} parent=55 // pred_check_branch
          %377 = sbr.rel (%p375) target = $region72
        $region71: #{tpu_custom_call.1} parent=55 // pred_region
          %379 = dma.done [#allocation14], 65536
        $region72: #{tpu_custom_call.1} parent=55 // pred_fallthru
          _
        // Predicated region
        $region73: #{tpu_custom_call.1} parent=55 // pred_check
          %p380 = pneg %p176
        $region74: #{tpu_custom_call.1} parent=55 // pred_check_branch
          %382 = sbr.rel (%p380) target = $region76
        $region75: #{tpu_custom_call.1} parent=55 // pred_region
          %384 = dma.done [#allocation14], 16
        $region76: #{tpu_custom_call.1} parent=55 // pred_fallthru
          _
        // Predicated region
        $region77: #{tpu_custom_call.1} parent=55 // pred_check
          %p385 = pneg %p197
        $region78: #{tpu_custom_call.1} parent=55 // pred_check_branch
          %387 = sbr.rel (%p385) target = $region80
        $region79: #{tpu_custom_call.1} parent=55 // pred_region
          %389 = dma.done [#allocation17], 16
        $region80: #{tpu_custom_call.1} parent=55 // pred_fallthru
          _
        %p390 = scmp.lt.s32.totalorder %s29, 1
        %s391 = scalar_select %p390, %s29, 1
        %s392 = smul.addr %s391, 8
        %s393 = smul.addr %s392, 8
        %s394 = scalar_lea.vmem %s0, %s393
        %p395 = pneg %p50
        %p396 = pneg %p47
        %p397 = pneg %p71
        %p398 = pneg %p68
        %p399 = pneg %p92
        %p400 = pneg %p89
        %p401 = pneg %p113
        %p402 = pneg %p110
        %p403 = pneg %p134
        %p404 = pneg %p131
        %p405 = pneg %p155
        %p406 = pneg %p152
        %p407 = pneg %p176
        %p408 = pneg %p173
        %p409 = pneg %p197
        %p410 = pneg %p194
        %p411 = pneg %p218
        %p412 = pneg %p215
        %p413 = pneg %p244
        %p414 = pneg %p241
        %s415 = sand.u32 %s231, 1
        %s416 = scalar_lea.sflag [#allocation9], %s415
        %s417 = sand.u32 %s231, 1
        %s418 = scalar_lea.vmem [#allocation18], %s417
        %p419 = scmp.lt.s32.totalorder %s29, 1
        %s420 = scalar_select %p419, %s29, 1
        %s421 = smul.addr %s420, 8
        %s422 = smul.addr %s421, 8
        %s423 = scalar_lea.vmem %s0, %s422
        %vm424 = vcmask 7168
        %425 = vst.msk [vmem:[#allocation2] sm:$0xff] %vm424, 0.0
        %vm426 = vcmask 1024
        %427 = vst.msk [vmem:[#allocation2 + $0x8] sm:$0x3] %vm426, 0.0
        %428 = vst.msk [vmem:[#allocation2 + $0x10] sm:$0xff] %vm424, 0.0
        %429 = vst.msk [vmem:[#allocation2 + $0x18] sm:$0x3] %vm426, 0.0
        %430 = vst.msk [vmem:[#allocation2 + $0x20] sm:$0xff] %vm424, 0.0
        %431 = vst.msk [vmem:[#allocation2 + $0x28] sm:$0x3] %vm426, 0.0
        %432 = vst.msk [vmem:[#allocation2 + $0x30] sm:$0xff] %vm424, 0.0
        %433 = vst.msk [vmem:[#allocation2 + $0x38] sm:$0x3] %vm426, 0.0
        %434 = vst.msk [vmem:[#allocation2 + $0x40] sm:$0xff] %vm424, 0.0
        %435 = vst.msk [vmem:[#allocation2 + $0x48] sm:$0x3] %vm426, 0.0
        %436 = vst.msk [vmem:[#allocation2 + $0x50] sm:$0xff] %vm424, 0.0
        %437 = vst.msk [vmem:[#allocation2 + $0x58] sm:$0x3] %vm426, 0.0
        %438 = vst.msk [vmem:[#allocation2 + $0x60] sm:$0xff] %vm424, 0.0
        %439 = vst.msk [vmem:[#allocation2 + $0x68] sm:$0x3] %vm426, 0.0
        %440 = vst.msk [vmem:[#allocation2 + $0x70] sm:$0xff] %vm424, 0.0
        %441 = vst.msk [vmem:[#allocation2 + $0x78] sm:$0x3] %vm426, 0.0
        %442 = vst.msk [vmem:[#allocation2 + $0x80] sm:$0xff] %vm424, 0.0
        %443 = vst.msk [vmem:[#allocation2 + $0x88] sm:$0x3] %vm426, 0.0
        %444 = vst.msk [vmem:[#allocation2 + $0x90] sm:$0xff] %vm424, 0.0
        %445 = vst.msk [vmem:[#allocation2 + $0x98] sm:$0x3] %vm426, 0.0
        %v446 = vld [vmem:[%s423] sm:$0xff]
        %v447 = vld [vmem:[%s423 + $0x8] sm:$0xff]
        %v448 = vld [vmem:[%s423 + $0x10] sm:$0xff]
        %v449 = vld [vmem:[%s423 + $0x18] sm:$0xff]
        %v450 = vld [vmem:[%s423 + $0x20] sm:$0xff]
        %v451 = vld [vmem:[%s423 + $0x28] sm:$0xff]
        %v452 = vld [vmem:[%s423 + $0x30] sm:$0xff]
        %v453 = vld [vmem:[%s423 + $0x38] sm:$0xff]
        %s454 = scalar_lea.vmem [#allocation2], 16
        %455 = vst.msk [vmem:[%s454 + $0x1] sm:$0xff] %vm424, %v446
        %456 = vst.msk [vmem:[%s454 + $0x11] sm:$0xff] %vm424, %v447
        %457 = vst.msk [vmem:[%s454 + $0x21] sm:$0xff] %vm424, %v448
        %458 = vst.msk [vmem:[%s454 + $0x31] sm:$0xff] %vm424, %v449
        %459 = vst.msk [vmem:[%s454 + $0x41] sm:$0xff] %vm424, %v450
        %460 = vst.msk [vmem:[%s454 + $0x51] sm:$0xff] %vm424, %v451
        %461 = vst.msk [vmem:[%s454 + $0x61] sm:$0xff] %vm424, %v452
        %462 = vst.msk [vmem:[%s454 + $0x71] sm:$0xff] %vm424, %v453
        %v463 = vld [vmem:[#allocation7] sm:$0xff]
        %v464 = vld [vmem:[#allocation7 + $0x8] sm:$0x1]
        %v465 = vld [vmem:[#allocation2] sm:$0xff]
        %v466 = vld [vmem:[#allocation2 + $0x10] sm:$0xff]
        %v467 = vld [vmem:[#allocation2 + $0x20] sm:$0xff]
        %v468 = vld [vmem:[#allocation2 + $0x30] sm:$0xff]
        %v469 = vld [vmem:[#allocation2 + $0x40] sm:$0xff]
        %v470 = vld [vmem:[#allocation2 + $0x50] sm:$0xff]
        %v471 = vld [vmem:[#allocation2 + $0x60] sm:$0xff]
        %v472 = vld [vmem:[#allocation2 + $0x70] sm:$0xff]
        %474 = vset.pattern.permute.xlu0 0
        %475 = vperm.xlu0 %474, %v465
        %v476 = vpop.permute.xlu0 %475
        %479 = vset.pattern.permute.xlu0 0
        %480 = vperm.xlu0 %479, %v466
        %v481 = vpop.permute.xlu0 %480
        %484 = vset.pattern.permute.xlu0 0
        %485 = vperm.xlu0 %484, %v467
        %v486 = vpop.permute.xlu0 %485
        %489 = vset.pattern.permute.xlu0 0
        %490 = vperm.xlu0 %489, %v468
        %v491 = vpop.permute.xlu0 %490
        %494 = vset.pattern.permute.xlu0 0
        %495 = vperm.xlu0 %494, %v469
        %v496 = vpop.permute.xlu0 %495
        %499 = vset.pattern.permute.xlu0 0
        %500 = vperm.xlu0 %499, %v470
        %v501 = vpop.permute.xlu0 %500
        %504 = vset.pattern.permute.xlu0 0
        %505 = vperm.xlu0 %504, %v471
        %v506 = vpop.permute.xlu0 %505
        %509 = vset.pattern.permute.xlu0 0
        %510 = vperm.xlu0 %509, %v472
        %v511 = vpop.permute.xlu0 %510
        %v513 = vperm.slane %v463, 0
        %v514 = vmul.f32 %v476, %v513
        %v515 = vmul.f32 %v481, %v513
        %v516 = vmul.f32 %v486, %v513
        %v517 = vmul.f32 %v491, %v513
        %v518 = vmul.f32 %v496, %v513
        %v519 = vmul.f32 %v501, %v513
        %v520 = vmul.f32 %v506, %v513
        %v521 = vmul.f32 %v511, %v513
        %v522 = vadd.f32 %v514, 0.0
        %v523 = vadd.f32 %v515, 0.0
        %v524 = vadd.f32 %v516, 0.0
        %v525 = vadd.f32 %v517, 0.0
        %v526 = vadd.f32 %v518, 0.0
        %v527 = vadd.f32 %v519, 0.0
        %v528 = vadd.f32 %v520, 0.0
        %v529 = vadd.f32 %v521, 0.0
        %v530 = vld [vmem:[#allocation2 + $0x1] sm:$0xff]
        %v531 = vld [vmem:[#allocation2 + $0x11] sm:$0xff]
        %v532 = vld [vmem:[#allocation2 + $0x21] sm:$0xff]
        %v533 = vld [vmem:[#allocation2 + $0x31] sm:$0xff]
        %v534 = vld [vmem:[#allocation2 + $0x41] sm:$0xff]
        %v535 = vld [vmem:[#allocation2 + $0x51] sm:$0xff]
        %v536 = vld [vmem:[#allocation2 + $0x61] sm:$0xff]
        %v537 = vld [vmem:[#allocation2 + $0x71] sm:$0xff]
        %539 = vset.pattern.permute.xlu0 0
        %540 = vperm.xlu0 %539, %v530
        %v541 = vpop.permute.xlu0 %540
        %544 = vset.pattern.permute.xlu0 0
        %545 = vperm.xlu0 %544, %v531
        %v546 = vpop.permute.xlu0 %545
        %549 = vset.pattern.permute.xlu0 0
        %550 = vperm.xlu0 %549, %v532
        %v551 = vpop.permute.xlu0 %550
        %554 = vset.pattern.permute.xlu0 0
        %555 = vperm.xlu0 %554, %v533
        %v556 = vpop.permute.xlu0 %555
        %559 = vset.pattern.permute.xlu0 0
        %560 = vperm.xlu0 %559, %v534
        %v561 = vpop.permute.xlu0 %560
        %564 = vset.pattern.permute.xlu0 0
        %565 = vperm.xlu0 %564, %v535
        %v566 = vpop.permute.xlu0 %565
        %569 = vset.pattern.permute.xlu0 0
        %570 = vperm.xlu0 %569, %v536
        %v571 = vpop.permute.xlu0 %570
        %574 = vset.pattern.permute.xlu0 0
        %575 = vperm.xlu0 %574, %v537
        %v576 = vpop.permute.xlu0 %575
        %v578 = vperm.slane %v463, 1
        %v579 = vmul.f32 %v541, %v578
        %v580 = vmul.f32 %v546, %v578
        %v581 = vmul.f32 %v551, %v578
        %v582 = vmul.f32 %v556, %v578
        %v583 = vmul.f32 %v561, %v578
        %v584 = vmul.f32 %v566, %v578
        %v585 = vmul.f32 %v571, %v578
        %v586 = vmul.f32 %v576, %v578
        %v587 = vadd.f32 %v522, %v579
        %v588 = vadd.f32 %v523, %v580
        %v589 = vadd.f32 %v524, %v581
        %v590 = vadd.f32 %v525, %v582
        %v591 = vadd.f32 %v526, %v583
        %v592 = vadd.f32 %v527, %v584
        %v593 = vadd.f32 %v528, %v585
        %v594 = vadd.f32 %v529, %v586
        %v595 = vld [vmem:[#allocation2 + $0x2] sm:$0xff]
        %v596 = vld [vmem:[#allocation2 + $0x12] sm:$0xff]
        %v597 = vld [vmem:[#allocation2 + $0x22] sm:$0xff]
        %v598 = vld [vmem:[#allocation2 + $0x32] sm:$0xff]
        %v599 = vld [vmem:[#allocation2 + $0x42] sm:$0xff]
        %v600 = vld [vmem:[#allocation2 + $0x52] sm:$0xff]
        %v601 = vld [vmem:[#allocation2 + $0x62] sm:$0xff]
        %v602 = vld [vmem:[#allocation2 + $0x72] sm:$0xff]
        %604 = vset.pattern.permute.xlu0 0
        %605 = vperm.xlu0 %604, %v595
        %v606 = vpop.permute.xlu0 %605
        %609 = vset.pattern.permute.xlu0 0
        %610 = vperm.xlu0 %609, %v596
        %v611 = vpop.permute.xlu0 %610
        %614 = vset.pattern.permute.xlu0 0
        %615 = vperm.xlu0 %614, %v597
        %v616 = vpop.permute.xlu0 %615
        %619 = vset.pattern.permute.xlu0 0
        %620 = vperm.xlu0 %619, %v598
        %v621 = vpop.permute.xlu0 %620
        %624 = vset.pattern.permute.xlu0 0
        %625 = vperm.xlu0 %624, %v599
        %v626 = vpop.permute.xlu0 %625
        %629 = vset.pattern.permute.xlu0 0
        %630 = vperm.xlu0 %629, %v600
        %v631 = vpop.permute.xlu0 %630
        %634 = vset.pattern.permute.xlu0 0
        %635 = vperm.xlu0 %634, %v601
        %v636 = vpop.permute.xlu0 %635
        %639 = vset.pattern.permute.xlu0 0
        %640 = vperm.xlu0 %639, %v602
        %v641 = vpop.permute.xlu0 %640
        %v643 = vperm.slane %v463, 2
        %v644 = vmul.f32 %v606, %v643
        %v645 = vmul.f32 %v611, %v643
        %v646 = vmul.f32 %v616, %v643
        %v647 = vmul.f32 %v621, %v643
        %v648 = vmul.f32 %v626, %v643
        %v649 = vmul.f32 %v631, %v643
        %v650 = vmul.f32 %v636, %v643
        %v651 = vmul.f32 %v641, %v643
        %v652 = vadd.f32 %v587, %v644
        %v653 = vadd.f32 %v588, %v645
        %v654 = vadd.f32 %v589, %v646
        %v655 = vadd.f32 %v590, %v647
        %v656 = vadd.f32 %v591, %v648
        %v657 = vadd.f32 %v592, %v649
        %v658 = vadd.f32 %v593, %v650
        %v659 = vadd.f32 %v594, %v651
        %v660 = vld [vmem:[%s454] sm:$0xff]
        %v661 = vld [vmem:[%s454 + $0x10] sm:$0xff]
        %v662 = vld [vmem:[%s454 + $0x20] sm:$0xff]
        %v663 = vld [vmem:[%s454 + $0x30] sm:$0xff]
        %v664 = vld [vmem:[%s454 + $0x40] sm:$0xff]
        %v665 = vld [vmem:[%s454 + $0x50] sm:$0xff]
        %v666 = vld [vmem:[%s454 + $0x60] sm:$0xff]
        %v667 = vld [vmem:[%s454 + $0x70] sm:$0xff]
        %669 = vset.pattern.permute.xlu0 0
        %670 = vperm.xlu0 %669, %v660
        %v671 = vpop.permute.xlu0 %670
        %674 = vset.pattern.permute.xlu0 0
        %675 = vperm.xlu0 %674, %v661
        %v676 = vpop.permute.xlu0 %675
        %679 = vset.pattern.permute.xlu0 0
        %680 = vperm.xlu0 %679, %v662
        %v681 = vpop.permute.xlu0 %680
        %684 = vset.pattern.permute.xlu0 0
        %685 = vperm.xlu0 %684, %v663
        %v686 = vpop.permute.xlu0 %685
        %689 = vset.pattern.permute.xlu0 0
        %690 = vperm.xlu0 %689, %v664
        %v691 = vpop.permute.xlu0 %690
        %694 = vset.pattern.permute.xlu0 0
        %695 = vperm.xlu0 %694, %v665
        %v696 = vpop.permute.xlu0 %695
        %699 = vset.pattern.permute.xlu0 0
        %700 = vperm.xlu0 %699, %v666
        %v701 = vpop.permute.xlu0 %700
        %704 = vset.pattern.permute.xlu0 0
        %705 = vperm.xlu0 %704, %v667
        %v706 = vpop.permute.xlu0 %705
        %v708 = vperm.slane %v463, 3
        %v709 = vmul.f32 %v671, %v708
        %v710 = vmul.f32 %v676, %v708
        %v711 = vmul.f32 %v681, %v708
        %v712 = vmul.f32 %v686, %v708
        %v713 = vmul.f32 %v691, %v708
        %v714 = vmul.f32 %v696, %v708
        %v715 = vmul.f32 %v701, %v708
        %v716 = vmul.f32 %v706, %v708
        %v717 = vadd.f32 %v652, %v709
        %v718 = vadd.f32 %v653, %v710
        %v719 = vadd.f32 %v654, %v711
        %v720 = vadd.f32 %v655, %v712
        %v721 = vadd.f32 %v656, %v713
        %v722 = vadd.f32 %v657, %v714
        %v723 = vadd.f32 %v658, %v715
        %v724 = vadd.f32 %v659, %v716
        %v725 = vld [vmem:[%s454 + $0x1] sm:$0xff]
        %v726 = vld [vmem:[%s454 + $0x11] sm:$0xff]
        %v727 = vld [vmem:[%s454 + $0x21] sm:$0xff]
        %v728 = vld [vmem:[%s454 + $0x31] sm:$0xff]
        %v729 = vld [vmem:[%s454 + $0x41] sm:$0xff]
        %v730 = vld [vmem:[%s454 + $0x51] sm:$0xff]
        %v731 = vld [vmem:[%s454 + $0x61] sm:$0xff]
        %v732 = vld [vmem:[%s454 + $0x71] sm:$0xff]
        %734 = vset.pattern.permute.xlu0 0
        %735 = vperm.xlu0 %734, %v725
        %v736 = vpop.permute.xlu0 %735
        %739 = vset.pattern.permute.xlu0 0
        %740 = vperm.xlu0 %739, %v726
        %v741 = vpop.permute.xlu0 %740
        %744 = vset.pattern.permute.xlu0 0
        %745 = vperm.xlu0 %744, %v727
        %v746 = vpop.permute.xlu0 %745
        %749 = vset.pattern.permute.xlu0 0
        %750 = vperm.xlu0 %749, %v728
        %v751 = vpop.permute.xlu0 %750
        %754 = vset.pattern.permute.xlu0 0
        %755 = vperm.xlu0 %754, %v729
        %v756 = vpop.permute.xlu0 %755
        %759 = vset.pattern.permute.xlu0 0
        %760 = vperm.xlu0 %759, %v730
        %v761 = vpop.permute.xlu0 %760
        %764 = vset.pattern.permute.xlu0 0
        %765 = vperm.xlu0 %764, %v731
        %v766 = vpop.permute.xlu0 %765
        %769 = vset.pattern.permute.xlu0 0
        %770 = vperm.xlu0 %769, %v732
        %v771 = vpop.permute.xlu0 %770
        %v773 = vperm.slane %v463, 4
        %v774 = vmul.f32 %v736, %v773
        %v775 = vmul.f32 %v741, %v773
        %v776 = vmul.f32 %v746, %v773
        %v777 = vmul.f32 %v751, %v773
        %v778 = vmul.f32 %v756, %v773
        %v779 = vmul.f32 %v761, %v773
        %v780 = vmul.f32 %v766, %v773
        %v781 = vmul.f32 %v771, %v773
        %v782 = vadd.f32 %v717, %v774
        %v783 = vadd.f32 %v718, %v775
        %v784 = vadd.f32 %v719, %v776
        %v785 = vadd.f32 %v720, %v777
        %v786 = vadd.f32 %v721, %v778
        %v787 = vadd.f32 %v722, %v779
        %v788 = vadd.f32 %v723, %v780
        %v789 = vadd.f32 %v724, %v781
        %v790 = vld [vmem:[%s454 + $0x2] sm:$0xff]
        %v791 = vld [vmem:[%s454 + $0x12] sm:$0xff]
        %v792 = vld [vmem:[%s454 + $0x22] sm:$0xff]
        %v793 = vld [vmem:[%s454 + $0x32] sm:$0xff]
        %v794 = vld [vmem:[%s454 + $0x42] sm:$0xff]
        %v795 = vld [vmem:[%s454 + $0x52] sm:$0xff]
        %v796 = vld [vmem:[%s454 + $0x62] sm:$0xff]
        %v797 = vld [vmem:[%s454 + $0x72] sm:$0xff]
        %799 = vset.pattern.permute.xlu0 0
        %800 = vperm.xlu0 %799, %v790
        %v801 = vpop.permute.xlu0 %800
        %804 = vset.pattern.permute.xlu0 0
        %805 = vperm.xlu0 %804, %v791
        %v806 = vpop.permute.xlu0 %805
        %809 = vset.pattern.permute.xlu0 0
        %810 = vperm.xlu0 %809, %v792
        %v811 = vpop.permute.xlu0 %810
        %814 = vset.pattern.permute.xlu0 0
        %815 = vperm.xlu0 %814, %v793
        %v816 = vpop.permute.xlu0 %815
        %819 = vset.pattern.permute.xlu0 0
        %820 = vperm.xlu0 %819, %v794
        %v821 = vpop.permute.xlu0 %820
        %824 = vset.pattern.permute.xlu0 0
        %825 = vperm.xlu0 %824, %v795
        %v826 = vpop.permute.xlu0 %825
        %829 = vset.pattern.permute.xlu0 0
        %830 = vperm.xlu0 %829, %v796
        %v831 = vpop.permute.xlu0 %830
        %834 = vset.pattern.permute.xlu0 0
        %835 = vperm.xlu0 %834, %v797
        %v836 = vpop.permute.xlu0 %835
        %v838 = vperm.slane %v463, 5
        %v839 = vmul.f32 %v801, %v838
        %v840 = vmul.f32 %v806, %v838
        %v841 = vmul.f32 %v811, %v838
        %v842 = vmul.f32 %v816, %v838
        %v843 = vmul.f32 %v821, %v838
        %v844 = vmul.f32 %v826, %v838
        %v845 = vmul.f32 %v831, %v838
        %v846 = vmul.f32 %v836, %v838
        %v847 = vadd.f32 %v782, %v839
        %v848 = vadd.f32 %v783, %v840
        %v849 = vadd.f32 %v784, %v841
        %v850 = vadd.f32 %v785, %v842
        %v851 = vadd.f32 %v786, %v843
        %v852 = vadd.f32 %v787, %v844
        %v853 = vadd.f32 %v788, %v845
        %v854 = vadd.f32 %v789, %v846
        %s855 = scalar_lea.vmem [#allocation2], 32
        %v856 = vld [vmem:[%s855] sm:$0xff]
        %v857 = vld [vmem:[%s855 + $0x10] sm:$0xff]
        %v858 = vld [vmem:[%s855 + $0x20] sm:$0xff]
        %v859 = vld [vmem:[%s855 + $0x30] sm:$0xff]
        %v860 = vld [vmem:[%s855 + $0x40] sm:$0xff]
        %v861 = vld [vmem:[%s855 + $0x50] sm:$0xff]
        %v862 = vld [vmem:[%s855 + $0x60] sm:$0xff]
        %v863 = vld [vmem:[%s855 + $0x70] sm:$0xff]
        %865 = vset.pattern.permute.xlu0 0
        %866 = vperm.xlu0 %865, %v856
        %v867 = vpop.permute.xlu0 %866
        %870 = vset.pattern.permute.xlu0 0
        %871 = vperm.xlu0 %870, %v857
        %v872 = vpop.permute.xlu0 %871
        %875 = vset.pattern.permute.xlu0 0
        %876 = vperm.xlu0 %875, %v858
        %v877 = vpop.permute.xlu0 %876
        %880 = vset.pattern.permute.xlu0 0
        %881 = vperm.xlu0 %880, %v859
        %v882 = vpop.permute.xlu0 %881
        %885 = vset.pattern.permute.xlu0 0
        %886 = vperm.xlu0 %885, %v860
        %v887 = vpop.permute.xlu0 %886
        %890 = vset.pattern.permute.xlu0 0
        %891 = vperm.xlu0 %890, %v861
        %v892 = vpop.permute.xlu0 %891
        %895 = vset.pattern.permute.xlu0 0
        %896 = vperm.xlu0 %895, %v862
        %v897 = vpop.permute.xlu0 %896
        %900 = vset.pattern.permute.xlu0 0
        %901 = vperm.xlu0 %900, %v863
        %v902 = vpop.permute.xlu0 %901
        %v904 = vperm.slane %v463, 6
        %v905 = vmul.f32 %v867, %v904
        %v906 = vmul.f32 %v872, %v904
        %v907 = vmul.f32 %v877, %v904
        %v908 = vmul.f32 %v882, %v904
        %v909 = vmul.f32 %v887, %v904
        %v910 = vmul.f32 %v892, %v904
        %v911 = vmul.f32 %v897, %v904
        %v912 = vmul.f32 %v902, %v904
        %v913 = vadd.f32 %v847, %v905
        %v914 = vadd.f32 %v848, %v906
        %v915 = vadd.f32 %v849, %v907
        %v916 = vadd.f32 %v850, %v908
        %v917 = vadd.f32 %v851, %v909
        %v918 = vadd.f32 %v852, %v910
        %v919 = vadd.f32 %v853, %v911
        %v920 = vadd.f32 %v854, %v912
        %v921 = vld [vmem:[%s855 + $0x1] sm:$0xff]
        %v922 = vld [vmem:[%s855 + $0x11] sm:$0xff]
        %v923 = vld [vmem:[%s855 + $0x21] sm:$0xff]
        %v924 = vld [vmem:[%s855 + $0x31] sm:$0xff]
        %v925 = vld [vmem:[%s855 + $0x41] sm:$0xff]
        %v926 = vld [vmem:[%s855 + $0x51] sm:$0xff]
        %v927 = vld [vmem:[%s855 + $0x61] sm:$0xff]
        %v928 = vld [vmem:[%s855 + $0x71] sm:$0xff]
        %930 = vset.pattern.permute.xlu0 0
        %931 = vperm.xlu0 %930, %v921
        %v932 = vpop.permute.xlu0 %931
        %935 = vset.pattern.permute.xlu0 0
        %936 = vperm.xlu0 %935, %v922
        %v937 = vpop.permute.xlu0 %936
        %940 = vset.pattern.permute.xlu0 0
        %941 = vperm.xlu0 %940, %v923
        %v942 = vpop.permute.xlu0 %941
        %945 = vset.pattern.permute.xlu0 0
        %946 = vperm.xlu0 %945, %v924
        %v947 = vpop.permute.xlu0 %946
        %950 = vset.pattern.permute.xlu0 0
        %951 = vperm.xlu0 %950, %v925
        %v952 = vpop.permute.xlu0 %951
        %955 = vset.pattern.permute.xlu0 0
        %956 = vperm.xlu0 %955, %v926
        %v957 = vpop.permute.xlu0 %956
        %960 = vset.pattern.permute.xlu0 0
        %961 = vperm.xlu0 %960, %v927
        %v962 = vpop.permute.xlu0 %961
        %965 = vset.pattern.permute.xlu0 0
        %966 = vperm.xlu0 %965, %v928
        %v967 = vpop.permute.xlu0 %966
        %v969 = vperm.slane %v463, 7
        %v970 = vmul.f32 %v932, %v969
        %v971 = vmul.f32 %v937, %v969
        %v972 = vmul.f32 %v942, %v969
        %v973 = vmul.f32 %v947, %v969
        %v974 = vmul.f32 %v952, %v969
        %v975 = vmul.f32 %v957, %v969
        %v976 = vmul.f32 %v962, %v969
        %v977 = vmul.f32 %v967, %v969
        %v978 = vadd.f32 %v913, %v970
        %v979 = vadd.f32 %v914, %v971
        %v980 = vadd.f32 %v915, %v972
        %v981 = vadd.f32 %v916, %v973
        %v982 = vadd.f32 %v917, %v974
        %v983 = vadd.f32 %v918, %v975
        %v984 = vadd.f32 %v919, %v976
        %v985 = vadd.f32 %v920, %v977
        %v986 = vld [vmem:[%s855 + $0x2] sm:$0xff]
        %v987 = vld [vmem:[%s855 + $0x12] sm:$0xff]
        %v988 = vld [vmem:[%s855 + $0x22] sm:$0xff]
        %v989 = vld [vmem:[%s855 + $0x32] sm:$0xff]
        %v990 = vld [vmem:[%s855 + $0x42] sm:$0xff]
        %v991 = vld [vmem:[%s855 + $0x52] sm:$0xff]
        %v992 = vld [vmem:[%s855 + $0x62] sm:$0xff]
        %v993 = vld [vmem:[%s855 + $0x72] sm:$0xff]
        %995 = vset.pattern.permute.xlu0 0
        %996 = vperm.xlu0 %995, %v986
        %v997 = vpop.permute.xlu0 %996
        %1000 = vset.pattern.permute.xlu0 0
        %1001 = vperm.xlu0 %1000, %v987
        %v1002 = vpop.permute.xlu0 %1001
        %1005 = vset.pattern.permute.xlu0 0
        %1006 = vperm.xlu0 %1005, %v988
        %v1007 = vpop.permute.xlu0 %1006
        %1010 = vset.pattern.permute.xlu0 0
        %1011 = vperm.xlu0 %1010, %v989
        %v1012 = vpop.permute.xlu0 %1011
        %1015 = vset.pattern.permute.xlu0 0
        %1016 = vperm.xlu0 %1015, %v990
        %v1017 = vpop.permute.xlu0 %1016
        %1020 = vset.pattern.permute.xlu0 0
        %1021 = vperm.xlu0 %1020, %v991
        %v1022 = vpop.permute.xlu0 %1021
        %1025 = vset.pattern.permute.xlu0 0
        %1026 = vperm.xlu0 %1025, %v992
        %v1027 = vpop.permute.xlu0 %1026
        %1030 = vset.pattern.permute.xlu0 0
        %1031 = vperm.xlu0 %1030, %v993
        %v1032 = vpop.permute.xlu0 %1031
        %v1034 = vperm.slane %v464, 0
        %v1035 = vmul.f32 %v997, %v1034
        %v1036 = vmul.f32 %v1002, %v1034
        %v1037 = vmul.f32 %v1007, %v1034
        %v1038 = vmul.f32 %v1012, %v1034
        %v1039 = vmul.f32 %v1017, %v1034
        %v1040 = vmul.f32 %v1022, %v1034
        %v1041 = vmul.f32 %v1027, %v1034
        %v1042 = vmul.f32 %v1032, %v1034
        %v1043 = vadd.f32 %v978, %v1035
        %v1044 = vadd.f32 %v979, %v1036
        %v1045 = vadd.f32 %v980, %v1037
        %v1046 = vadd.f32 %v981, %v1038
        %v1047 = vadd.f32 %v982, %v1039
        %v1048 = vadd.f32 %v983, %v1040
        %v1049 = vadd.f32 %v984, %v1041
        %v1050 = vadd.f32 %v985, %v1042
        %v1051 = vld [vmem:[#allocation10] sm:$0x1]
        %v1053 = vperm.slane %v1051, 0
        %v1055 = vadd.f32 %v1043, %v1053
        %v1056 = vadd.f32 %v1044, %v1053
        %v1057 = vadd.f32 %v1045, %v1053
        %v1058 = vadd.f32 %v1046, %v1053
        %v1059 = vadd.f32 %v1047, %v1053
        %v1060 = vadd.f32 %v1048, %v1053
        %v1061 = vadd.f32 %v1049, %v1053
        %v1062 = vadd.f32 %v1050, %v1053
        %v1063 = vmax.f32 %v1055, 0.0
        %v1064 = vmax.f32 %v1056, 0.0
        %v1065 = vmax.f32 %v1057, 0.0
        %v1066 = vmax.f32 %v1058, 0.0
        %v1067 = vmax.f32 %v1059, 0.0
        %v1068 = vmax.f32 %v1060, 0.0
        %v1069 = vmax.f32 %v1061, 0.0
        %v1070 = vmax.f32 %v1062, 0.0
        %vm1071 = vcmask 261120
        %1072 = vst.msk [vmem:[#allocation3] sm:$0xff] %vm1071, 0.0
        %vm1073 = vcmask 254976
        %1074 = vst.msk [vmem:[#allocation3 + $0x8] sm:$0x3] %vm1073, 0.0
        %1075 = vst.msk [vmem:[#allocation3 + $0x10] sm:$0xff] %vm1071, 0.0
        %1076 = vst.msk [vmem:[#allocation3 + $0x18] sm:$0x3] %vm1073, 0.0
        %1077 = vst.msk [vmem:[#allocation3 + $0x20] sm:$0xff] %vm1071, 0.0
        %1078 = vst.msk [vmem:[#allocation3 + $0x28] sm:$0x3] %vm1073, 0.0
        %1079 = vst.msk [vmem:[#allocation3 + $0x30] sm:$0xff] %vm1071, 0.0
        %1080 = vst.msk [vmem:[#allocation3 + $0x38] sm:$0x3] %vm1073, 0.0
        %1081 = vst.msk [vmem:[#allocation3 + $0x40] sm:$0xff] %vm1071, 0.0
        %1082 = vst.msk [vmem:[#allocation3 + $0x48] sm:$0x3] %vm1073, 0.0
        %1083 = vst.msk [vmem:[#allocation3 + $0x50] sm:$0xff] %vm1071, 0.0
        %1084 = vst.msk [vmem:[#allocation3 + $0x58] sm:$0x3] %vm1073, 0.0
        %1085 = vst.msk [vmem:[#allocation3 + $0x60] sm:$0xff] %vm1071, 0.0
        %1086 = vst.msk [vmem:[#allocation3 + $0x68] sm:$0x3] %vm1073, 0.0
        %1087 = vst.msk [vmem:[#allocation3 + $0x70] sm:$0xff] %vm1071, 0.0
        %1088 = vst.msk [vmem:[#allocation3 + $0x78] sm:$0x3] %vm1073, 0.0
        %1089 = vst.msk [vmem:[#allocation3 + $0x80] sm:$0xff] %vm1071, 0.0
        %1090 = vst.msk [vmem:[#allocation3 + $0x88] sm:$0x3] %vm1073, 0.0
        %1091 = vst.msk [vmem:[#allocation3 + $0x90] sm:$0xff] %vm1071, 0.0
        %1092 = vst.msk [vmem:[#allocation3 + $0x98] sm:$0x3] %vm1073, 0.0
        %s1093 = scalar_lea.vmem [#allocation3], 16
        %1094 = vst.msk [vmem:[%s1093 + $0x1] sm:$0xff] %vm1071, %v1063
        %1095 = vst.msk [vmem:[%s1093 + $0x11] sm:$0xff] %vm1071, %v1064
        %1096 = vst.msk [vmem:[%s1093 + $0x21] sm:$0xff] %vm1071, %v1065
        %1097 = vst.msk [vmem:[%s1093 + $0x31] sm:$0xff] %vm1071, %v1066
        %1098 = vst.msk [vmem:[%s1093 + $0x41] sm:$0xff] %vm1071, %v1067
        %1099 = vst.msk [vmem:[%s1093 + $0x51] sm:$0xff] %vm1071, %v1068
        %1100 = vst.msk [vmem:[%s1093 + $0x61] sm:$0xff] %vm1071, %v1069
        %1101 = vst.msk [vmem:[%s1093 + $0x71] sm:$0xff] %vm1071, %v1070
        %v1102 = vld [vmem:[#allocation3] sm:$0xff]
        %v1103 = vld [vmem:[#allocation3 + $0x10] sm:$0xff]
        %v1104 = vld [vmem:[#allocation3 + $0x20] sm:$0xff]
        %v1105 = vld [vmem:[#allocation3 + $0x30] sm:$0xff]
        %v1106 = vld [vmem:[#allocation3 + $0x40] sm:$0xff]
        %v1107 = vld [vmem:[#allocation3 + $0x50] sm:$0xff]
        %v1108 = vld [vmem:[#allocation3 + $0x60] sm:$0xff]
        %v1109 = vld [vmem:[#allocation3 + $0x70] sm:$0xff]
        %1110 = vst.msk [vmem:[#allocation4] sm:$0xff] %vm1071, %v1102
        %1111 = vst.msk [vmem:[#allocation4 + $0x18] sm:$0xff] %vm1071, %v1103
        %1112 = vst.msk [vmem:[#allocation4 + $0x30] sm:$0xff] %vm1071, %v1104
        %1113 = vst.msk [vmem:[#allocation4 + $0x48] sm:$0xff] %vm1071, %v1105
        %1114 = vst.msk [vmem:[#allocation4 + $0x60] sm:$0xff] %vm1071, %v1106
        %1115 = vst.msk [vmem:[#allocation4 + $0x78] sm:$0xff] %vm1071, %v1107
        %1116 = vst.msk [vmem:[#allocation4 + $0x90] sm:$0xff] %vm1071, %v1108
        %1117 = vst.msk [vmem:[#allocation4 + $0xa8] sm:$0xff] %vm1071, %v1109
        %v1118 = vld [vmem:[#allocation3 + $0x1] sm:$0xff]
        %v1119 = vld [vmem:[#allocation3 + $0x11] sm:$0xff]
        %v1120 = vld [vmem:[#allocation3 + $0x21] sm:$0xff]
        %v1121 = vld [vmem:[#allocation3 + $0x31] sm:$0xff]
        %v1122 = vld [vmem:[#allocation3 + $0x41] sm:$0xff]
        %v1123 = vld [vmem:[#allocation3 + $0x51] sm:$0xff]
        %v1124 = vld [vmem:[#allocation3 + $0x61] sm:$0xff]
        %v1125 = vld [vmem:[#allocation3 + $0x71] sm:$0xff]
        %1134 = vrot.lane.b32.xlu0 %v1118, 32
        %v1135 = vpop.permute.xlu0 %1134
        %1136 = vrot.lane.b32.xlu0 %v1119, 32
        %v1137 = vpop.permute.xlu0 %1136
        %1138 = vrot.lane.b32.xlu0 %v1120, 32
        %v1139 = vpop.permute.xlu0 %1138
        %1140 = vrot.lane.b32.xlu0 %v1121, 32
        %v1141 = vpop.permute.xlu0 %1140
        %1142 = vrot.lane.b32.xlu0 %v1122, 32
        %v1143 = vpop.permute.xlu0 %1142
        %1144 = vrot.lane.b32.xlu0 %v1123, 32
        %v1145 = vpop.permute.xlu0 %1144
        %1146 = vrot.lane.b32.xlu0 %v1124, 32
        %v1147 = vpop.permute.xlu0 %1146
        %1148 = vrot.lane.b32.xlu0 %v1125, 32
        %v1149 = vpop.permute.xlu0 %1148
        %vm1158 = vcmask 523520
        %1159 = vst.msk [vmem:[#allocation4] sm:$0xff] %vm1158, %v1135
        %1160 = vst.msk [vmem:[#allocation4 + $0x18] sm:$0xff] %vm1158, %v1137
        %1161 = vst.msk [vmem:[#allocation4 + $0x30] sm:$0xff] %vm1158, %v1139
        %1162 = vst.msk [vmem:[#allocation4 + $0x48] sm:$0xff] %vm1158, %v1141
        %1163 = vst.msk [vmem:[#allocation4 + $0x60] sm:$0xff] %vm1158, %v1143
        %1164 = vst.msk [vmem:[#allocation4 + $0x78] sm:$0xff] %vm1158, %v1145
        %1165 = vst.msk [vmem:[#allocation4 + $0x90] sm:$0xff] %vm1158, %v1147
        %1166 = vst.msk [vmem:[#allocation4 + $0xa8] sm:$0xff] %vm1158, %v1149
        %v1167 = vld [vmem:[#allocation3 + $0x2] sm:$0xff]
        %v1168 = vld [vmem:[#allocation3 + $0x12] sm:$0xff]
        %v1169 = vld [vmem:[#allocation3 + $0x22] sm:$0xff]
        %v1170 = vld [vmem:[#allocation3 + $0x32] sm:$0xff]
        %v1171 = vld [vmem:[#allocation3 + $0x42] sm:$0xff]
        %v1172 = vld [vmem:[#allocation3 + $0x52] sm:$0xff]
        %v1173 = vld [vmem:[#allocation3 + $0x62] sm:$0xff]
        %v1174 = vld [vmem:[#allocation3 + $0x72] sm:$0xff]
        %1183 = vrot.lane.b32.xlu0 %v1167, 64
        %v1184 = vpop.permute.xlu0 %1183
        %1185 = vrot.lane.b32.xlu0 %v1168, 64
        %v1186 = vpop.permute.xlu0 %1185
        %1187 = vrot.lane.b32.xlu0 %v1169, 64
        %v1188 = vpop.permute.xlu0 %1187
        %1189 = vrot.lane.b32.xlu0 %v1170, 64
        %v1190 = vpop.permute.xlu0 %1189
        %1191 = vrot.lane.b32.xlu0 %v1171, 64
        %v1192 = vpop.permute.xlu0 %1191
        %1193 = vrot.lane.b32.xlu0 %v1172, 64
        %v1194 = vpop.permute.xlu0 %1193
        %1195 = vrot.lane.b32.xlu0 %v1173, 64
        %v1196 = vpop.permute.xlu0 %1195
        %1197 = vrot.lane.b32.xlu0 %v1174, 64
        %v1198 = vpop.permute.xlu0 %1197
        %vm1207 = vcmask 785920
        %1208 = vst.msk [vmem:[#allocation4] sm:$0xff] %vm1207, %v1184
        %1209 = vst.msk [vmem:[#allocation4 + $0x18] sm:$0xff] %vm1207, %v1186
        %1210 = vst.msk [vmem:[#allocation4 + $0x30] sm:$0xff] %vm1207, %v1188
        %1211 = vst.msk [vmem:[#allocation4 + $0x48] sm:$0xff] %vm1207, %v1190
        %1212 = vst.msk [vmem:[#allocation4 + $0x60] sm:$0xff] %vm1207, %v1192
        %1213 = vst.msk [vmem:[#allocation4 + $0x78] sm:$0xff] %vm1207, %v1194
        %1214 = vst.msk [vmem:[#allocation4 + $0x90] sm:$0xff] %vm1207, %v1196
        %1215 = vst.msk [vmem:[#allocation4 + $0xa8] sm:$0xff] %vm1207, %v1198
        %v1216 = vld [vmem:[%s1093] sm:$0xff]
        %v1217 = vld [vmem:[%s1093 + $0x10] sm:$0xff]
        %v1218 = vld [vmem:[%s1093 + $0x20] sm:$0xff]
        %v1219 = vld [vmem:[%s1093 + $0x30] sm:$0xff]
        %v1220 = vld [vmem:[%s1093 + $0x40] sm:$0xff]
        %v1221 = vld [vmem:[%s1093 + $0x50] sm:$0xff]
        %v1222 = vld [vmem:[%s1093 + $0x60] sm:$0xff]
        %v1223 = vld [vmem:[%s1093 + $0x70] sm:$0xff]
        %1232 = vrot.lane.b32.xlu0 %v1216, 96
        %v1233 = vpop.permute.xlu0 %1232
        %1234 = vrot.lane.b32.xlu0 %v1217, 96
        %v1235 = vpop.permute.xlu0 %1234
        %1236 = vrot.lane.b32.xlu0 %v1218, 96
        %v1237 = vpop.permute.xlu0 %1236
        %1238 = vrot.lane.b32.xlu0 %v1219, 96
        %v1239 = vpop.permute.xlu0 %1238
        %1240 = vrot.lane.b32.xlu0 %v1220, 96
        %v1241 = vpop.permute.xlu0 %1240
        %1242 = vrot.lane.b32.xlu0 %v1221, 96
        %v1243 = vpop.permute.xlu0 %1242
        %1244 = vrot.lane.b32.xlu0 %v1222, 96
        %v1245 = vpop.permute.xlu0 %1244
        %1246 = vrot.lane.b32.xlu0 %v1223, 96
        %v1247 = vpop.permute.xlu0 %1246
        %vm1256 = vcmask 1048320
        %1257 = vst.msk [vmem:[#allocation4] sm:$0xff] %vm1256, %v1233
        %1258 = vst.msk [vmem:[#allocation4 + $0x18] sm:$0xff] %vm1256, %v1235
        %1259 = vst.msk [vmem:[#allocation4 + $0x30] sm:$0xff] %vm1256, %v1237
        %1260 = vst.msk [vmem:[#allocation4 + $0x48] sm:$0xff] %vm1256, %v1239
        %1261 = vst.msk [vmem:[#allocation4 + $0x60] sm:$0xff] %vm1256, %v1241
        %1262 = vst.msk [vmem:[#allocation4 + $0x78] sm:$0xff] %vm1256, %v1243
        %1263 = vst.msk [vmem:[#allocation4 + $0x90] sm:$0xff] %vm1256, %v1245
        %1264 = vst.msk [vmem:[#allocation4 + $0xa8] sm:$0xff] %vm1256, %v1247
        %v1265 = vld [vmem:[%s1093 + $0x1] sm:$0xff]
        %v1266 = vld [vmem:[%s1093 + $0x11] sm:$0xff]
        %v1267 = vld [vmem:[%s1093 + $0x21] sm:$0xff]
        %v1268 = vld [vmem:[%s1093 + $0x31] sm:$0xff]
        %v1269 = vld [vmem:[%s1093 + $0x41] sm:$0xff]
        %v1270 = vld [vmem:[%s1093 + $0x51] sm:$0xff]
        %v1271 = vld [vmem:[%s1093 + $0x61] sm:$0xff]
        %v1272 = vld [vmem:[%s1093 + $0x71] sm:$0xff]
        %1273 = vst.msk [vmem:[#allocation4 + $0x8] sm:$0xff] %vm1071, %v1265
        %1274 = vst.msk [vmem:[#allocation4 + $0x20] sm:$0xff] %vm1071, %v1266
        %1275 = vst.msk [vmem:[#allocation4 + $0x38] sm:$0xff] %vm1071, %v1267
        %1276 = vst.msk [vmem:[#allocation4 + $0x50] sm:$0xff] %vm1071, %v1268
        %1277 = vst.msk [vmem:[#allocation4 + $0x68] sm:$0xff] %vm1071, %v1269
        %1278 = vst.msk [vmem:[#allocation4 + $0x80] sm:$0xff] %vm1071, %v1270
        %1279 = vst.msk [vmem:[#allocation4 + $0x98] sm:$0xff] %vm1071, %v1271
        %1280 = vst.msk [vmem:[#allocation4 + $0xb0] sm:$0xff] %vm1071, %v1272
        %v1281 = vld [vmem:[%s1093 + $0x2] sm:$0xff]
        %v1282 = vld [vmem:[%s1093 + $0x12] sm:$0xff]
        %v1283 = vld [vmem:[%s1093 + $0x22] sm:$0xff]
        %v1284 = vld [vmem:[%s1093 + $0x32] sm:$0xff]
        %v1285 = vld [vmem:[%s1093 + $0x42] sm:$0xff]
        %v1286 = vld [vmem:[%s1093 + $0x52] sm:$0xff]
        %v1287 = vld [vmem:[%s1093 + $0x62] sm:$0xff]
        %v1288 = vld [vmem:[%s1093 + $0x72] sm:$0xff]
        %1297 = vrot.lane.b32.xlu0 %v1281, 32
        %v1298 = vpop.permute.xlu0 %1297
        %1299 = vrot.lane.b32.xlu0 %v1282, 32
        %v1300 = vpop.permute.xlu0 %1299
        %1301 = vrot.lane.b32.xlu0 %v1283, 32
        %v1302 = vpop.permute.xlu0 %1301
        %1303 = vrot.lane.b32.xlu0 %v1284, 32
        %v1304 = vpop.permute.xlu0 %1303
        %1305 = vrot.lane.b32.xlu0 %v1285, 32
        %v1306 = vpop.permute.xlu0 %1305
        %1307 = vrot.lane.b32.xlu0 %v1286, 32
        %v1308 = vpop.permute.xlu0 %1307
        %1309 = vrot.lane.b32.xlu0 %v1287, 32
        %v1310 = vpop.permute.xlu0 %1309
        %1311 = vrot.lane.b32.xlu0 %v1288, 32
        %v1312 = vpop.permute.xlu0 %1311
        %1321 = vst.msk [vmem:[#allocation4 + $0x8] sm:$0xff] %vm1158, %v1298
        %1322 = vst.msk [vmem:[#allocation4 + $0x20] sm:$0xff] %vm1158, %v1300
        %1323 = vst.msk [vmem:[#allocation4 + $0x38] sm:$0xff] %vm1158, %v1302
        %1324 = vst.msk [vmem:[#allocation4 + $0x50] sm:$0xff] %vm1158, %v1304
        %1325 = vst.msk [vmem:[#allocation4 + $0x68] sm:$0xff] %vm1158, %v1306
        %1326 = vst.msk [vmem:[#allocation4 + $0x80] sm:$0xff] %vm1158, %v1308
        %1327 = vst.msk [vmem:[#allocation4 + $0x98] sm:$0xff] %vm1158, %v1310
        %1328 = vst.msk [vmem:[#allocation4 + $0xb0] sm:$0xff] %vm1158, %v1312
        %s1329 = scalar_lea.vmem [#allocation3], 32
        %v1330 = vld [vmem:[%s1329] sm:$0xff]
        %v1331 = vld [vmem:[%s1329 + $0x10] sm:$0xff]
        %v1332 = vld [vmem:[%s1329 + $0x20] sm:$0xff]
        %v1333 = vld [vmem:[%s1329 + $0x30] sm:$0xff]
        %v1334 = vld [vmem:[%s1329 + $0x40] sm:$0xff]
        %v1335 = vld [vmem:[%s1329 + $0x50] sm:$0xff]
        %v1336 = vld [vmem:[%s1329 + $0x60] sm:$0xff]
        %v1337 = vld [vmem:[%s1329 + $0x70] sm:$0xff]
        %1346 = vrot.lane.b32.xlu0 %v1330, 64
        %v1347 = vpop.permute.xlu0 %1346
        %1348 = vrot.lane.b32.xlu0 %v1331, 64
        %v1349 = vpop.permute.xlu0 %1348
        %1350 = vrot.lane.b32.xlu0 %v1332, 64
        %v1351 = vpop.permute.xlu0 %1350
        %1352 = vrot.lane.b32.xlu0 %v1333, 64
        %v1353 = vpop.permute.xlu0 %1352
        %1354 = vrot.lane.b32.xlu0 %v1334, 64
        %v1355 = vpop.permute.xlu0 %1354
        %1356 = vrot.lane.b32.xlu0 %v1335, 64
        %v1357 = vpop.permute.xlu0 %1356
        %1358 = vrot.lane.b32.xlu0 %v1336, 64
        %v1359 = vpop.permute.xlu0 %1358
        %1360 = vrot.lane.b32.xlu0 %v1337, 64
        %v1361 = vpop.permute.xlu0 %1360
        %1370 = vst.msk [vmem:[#allocation4 + $0x8] sm:$0xff] %vm1207, %v1347
        %1371 = vst.msk [vmem:[#allocation4 + $0x20] sm:$0xff] %vm1207, %v1349
        %1372 = vst.msk [vmem:[#allocation4 + $0x38] sm:$0xff] %vm1207, %v1351
        %1373 = vst.msk [vmem:[#allocation4 + $0x50] sm:$0xff] %vm1207, %v1353
        %1374 = vst.msk [vmem:[#allocation4 + $0x68] sm:$0xff] %vm1207, %v1355
        %1375 = vst.msk [vmem:[#allocation4 + $0x80] sm:$0xff] %vm1207, %v1357
        %1376 = vst.msk [vmem:[#allocation4 + $0x98] sm:$0xff] %vm1207, %v1359
        %1377 = vst.msk [vmem:[#allocation4 + $0xb0] sm:$0xff] %vm1207, %v1361
        %v1378 = vld [vmem:[%s1329 + $0x1] sm:$0xff]
        %v1379 = vld [vmem:[%s1329 + $0x11] sm:$0xff]
        %v1380 = vld [vmem:[%s1329 + $0x21] sm:$0xff]
        %v1381 = vld [vmem:[%s1329 + $0x31] sm:$0xff]
        %v1382 = vld [vmem:[%s1329 + $0x41] sm:$0xff]
        %v1383 = vld [vmem:[%s1329 + $0x51] sm:$0xff]
        %v1384 = vld [vmem:[%s1329 + $0x61] sm:$0xff]
        %v1385 = vld [vmem:[%s1329 + $0x71] sm:$0xff]
        %1394 = vrot.lane.b32.xlu0 %v1378, 96
        %v1395 = vpop.permute.xlu0 %1394
        %1396 = vrot.lane.b32.xlu0 %v1379, 96
        %v1397 = vpop.permute.xlu0 %1396
        %1398 = vrot.lane.b32.xlu0 %v1380, 96
        %v1399 = vpop.permute.xlu0 %1398
        %1400 = vrot.lane.b32.xlu0 %v1381, 96
        %v1401 = vpop.permute.xlu0 %1400
        %1402 = vrot.lane.b32.xlu0 %v1382, 96
        %v1403 = vpop.permute.xlu0 %1402
        %1404 = vrot.lane.b32.xlu0 %v1383, 96
        %v1405 = vpop.permute.xlu0 %1404
        %1406 = vrot.lane.b32.xlu0 %v1384, 96
        %v1407 = vpop.permute.xlu0 %1406
        %1408 = vrot.lane.b32.xlu0 %v1385, 96
        %v1409 = vpop.permute.xlu0 %1408
        %1418 = vst.msk [vmem:[#allocation4 + $0x8] sm:$0xff] %vm1256, %v1395
        %1419 = vst.msk [vmem:[#allocation4 + $0x20] sm:$0xff] %vm1256, %v1397
        %1420 = vst.msk [vmem:[#allocation4 + $0x38] sm:$0xff] %vm1256, %v1399
        %1421 = vst.msk [vmem:[#allocation4 + $0x50] sm:$0xff] %vm1256, %v1401
        %1422 = vst.msk [vmem:[#allocation4 + $0x68] sm:$0xff] %vm1256, %v1403
        %1423 = vst.msk [vmem:[#allocation4 + $0x80] sm:$0xff] %vm1256, %v1405
        %1424 = vst.msk [vmem:[#allocation4 + $0x98] sm:$0xff] %vm1256, %v1407
        %1425 = vst.msk [vmem:[#allocation4 + $0xb0] sm:$0xff] %vm1256, %v1409
        %v1426 = vld [vmem:[%s1329 + $0x2] sm:$0xff]
        %v1427 = vld [vmem:[%s1329 + $0x12] sm:$0xff]
        %v1428 = vld [vmem:[%s1329 + $0x22] sm:$0xff]
        %v1429 = vld [vmem:[%s1329 + $0x32] sm:$0xff]
        %v1430 = vld [vmem:[%s1329 + $0x42] sm:$0xff]
        %v1431 = vld [vmem:[%s1329 + $0x52] sm:$0xff]
        %v1432 = vld [vmem:[%s1329 + $0x62] sm:$0xff]
        %v1433 = vld [vmem:[%s1329 + $0x72] sm:$0xff]
        %1434 = vst.msk [vmem:[#allocation4 + $0x10] sm:$0xff] %vm1071, %v1426
        %1435 = vst.msk [vmem:[#allocation4 + $0x28] sm:$0xff] %vm1071, %v1427
        %1436 = vst.msk [vmem:[#allocation4 + $0x40] sm:$0xff] %vm1071, %v1428
        %1437 = vst.msk [vmem:[#allocation4 + $0x58] sm:$0xff] %vm1071, %v1429
        %1438 = vst.msk [vmem:[#allocation4 + $0x70] sm:$0xff] %vm1071, %v1430
        %1439 = vst.msk [vmem:[#allocation4 + $0x88] sm:$0xff] %vm1071, %v1431
        %1440 = vst.msk [vmem:[#allocation4 + $0xa0] sm:$0xff] %vm1071, %v1432
        %1441 = vst.msk [vmem:[#allocation4 + $0xb8] sm:$0xff] %vm1071, %v1433
        %v1442 = vld [vmem:[#allocation4] sm:$0xff]
        %v1443 = vld [vmem:[#allocation4 + $0x8] sm:$0xff]
        %v1444 = vld [vmem:[#allocation4 + $0x10] sm:$0xff]
        %v1445 = vld [vmem:[#allocation4 + $0x18] sm:$0xff]
        %v1446 = vld [vmem:[#allocation4 + $0x20] sm:$0xff]
        %v1447 = vld [vmem:[#allocation4 + $0x28] sm:$0xff]
        %v1448 = vld [vmem:[#allocation4 + $0x30] sm:$0xff]
        %v1449 = vld [vmem:[#allocation4 + $0x38] sm:$0xff]
        %v1450 = vld [vmem:[#allocation4 + $0x40] sm:$0xff]
        %v1451 = vld [vmem:[#allocation4 + $0x48] sm:$0xff]
        %v1452 = vld [vmem:[#allocation4 + $0x50] sm:$0xff]
        %v1453 = vld [vmem:[#allocation4 + $0x58] sm:$0xff]
        %v1454 = vld [vmem:[#allocation4 + $0x60] sm:$0xff]
        %v1455 = vld [vmem:[#allocation4 + $0x68] sm:$0xff]
        %v1456 = vld [vmem:[#allocation4 + $0x70] sm:$0xff]
        %v1457 = vld [vmem:[#allocation4 + $0x78] sm:$0xff]
        %v1458 = vld [vmem:[#allocation4 + $0x80] sm:$0xff]
        %v1459 = vld [vmem:[#allocation4 + $0x88] sm:$0xff]
        %v1460 = vld [vmem:[#allocation4 + $0x90] sm:$0xff]
        %v1461 = vld [vmem:[#allocation4 + $0x98] sm:$0xff]
        %v1462 = vld [vmem:[#allocation4 + $0xa0] sm:$0xff]
        %v1463 = vld [vmem:[#allocation4 + $0xa8] sm:$0xff]
        %v1464 = vld [vmem:[#allocation4 + $0xb0] sm:$0xff]
        %v1465 = vld [vmem:[#allocation4 + $0xb8] sm:$0xff]
        %v1466 = vld [vmem:[%s3] sm:$0xff]
        %v1467 = vld [vmem:[%s3 + $0x8] sm:$0xff]
        %v1468 = vld [vmem:[%s3 + $0x10] sm:$0xff]
        %v1469 = vld [vmem:[%s3 + $0x18] sm:$0xff]
        %v1470 = vld [vmem:[%s3 + $0x20] sm:$0xff]
        %v1471 = vld [vmem:[%s3 + $0x28] sm:$0xff]
        %v1472 = vld [vmem:[%s3 + $0x30] sm:$0xff]
        %v1473 = vld [vmem:[%s3 + $0x38] sm:$0xff]
        %v1474 = vld [vmem:[%s3 + $0x40] sm:$0xff]
        %v1475 = vld [vmem:[%s3 + $0x48] sm:$0xff]
        %v1476 = vld [vmem:[%s3 + $0x50] sm:$0xff]
        %v1477 = vld [vmem:[%s3 + $0x58] sm:$0xff]
        %v1478 = vld [vmem:[%s3 + $0x60] sm:$0xff]
        %v1479 = vld [vmem:[%s3 + $0x68] sm:$0xff]
        %v1480 = vld [vmem:[%s3 + $0x70] sm:$0xff]
        %v1481 = vld [vmem:[%s3 + $0x78] sm:$0xff]
        %v1482 = vld [vmem:[%s3 + $0x80] sm:$0xff]
        %v1483 = vld [vmem:[%s3 + $0x88] sm:$0xff]
        %v1484 = vld [vmem:[%s3 + $0x90] sm:$0xff]
        %v1485 = vld [vmem:[%s3 + $0x98] sm:$0xff]
        %v1486 = vld [vmem:[%s3 + $0xa0] sm:$0xff]
        %v1487 = vld [vmem:[%s3 + $0xa8] sm:$0xff]
        %v1488 = vld [vmem:[%s3 + $0xb0] sm:$0xff]
        %v1489 = vld [vmem:[%s3 + $0xb8] sm:$0xff]
        %v1490 = vld [vmem:[%s3 + $0xc0] sm:$0xff]
        %v1491 = vld [vmem:[%s3 + $0xc8] sm:$0xff]
        %v1492 = vld [vmem:[%s3 + $0xd0] sm:$0xff]
        %v1493 = vld [vmem:[%s3 + $0xd8] sm:$0xff]
        %v1494 = vld [vmem:[%s3 + $0xe0] sm:$0xff]
        %v1495 = vld [vmem:[%s3 + $0xe8] sm:$0xff]
        %v1496 = vld [vmem:[%s3 + $0xf0] sm:$0xff]
        %v1497 = vld [vmem:[%s3 + $0xf8] sm:$0xff]
        %v1498 = vld [vmem:[%s3 + $0x100] sm:$0xff]
        %v1499 = vld [vmem:[%s3 + $0x108] sm:$0xff]
        %v1500 = vld [vmem:[%s3 + $0x110] sm:$0xff]
        %v1501 = vld [vmem:[%s3 + $0x118] sm:$0xff]
        %v1502 = vld [vmem:[#allocation12] sm:$0x1]
        %v1504 = vperm.slane %v1502, 0
        %v1507 = vsel %vm1071, %v1444, 0
        %v1510 = vsel %vm1071, %v1447, 0
        %v1513 = vsel %vm1071, %v1450, 0
        %v1516 = vsel %vm1071, %v1453, 0
        %v1519 = vsel %vm1071, %v1456, 0
        %v1522 = vsel %vm1071, %v1459, 0
        %v1525 = vsel %vm1071, %v1462, 0
        %v1528 = vsel %vm1071, %v1465, 0
        %1530 = vmatpush.msra.mxu0 %v1481
        %1531 = vmatpush.msra.mxu0 %v1480
        %1532 = vmatpush.msra.mxu0 %v1479
        %1533 = vmatpush.msra.mxu0 %v1478
        %1534 = vmatpush.msra.mxu0 %v1477
        %1535 = vmatpush.msra.mxu0 %v1476
        %1536 = vmatpush.msra.mxu0 %v1475
        %1537 = vmatpush.msra.mxu0 %v1474
        %1538 = vmatpush.msra.mxu0 %v1473
        %1539 = vmatpush.msra.mxu0 %v1472
        %1540 = vmatpush.msra.mxu0 %v1471
        %1541 = vmatpush.msra.mxu0 %v1470
        %1542 = vmatpush.msra.mxu0 %v1469
        %1543 = vmatpush.msra.mxu0 %v1468
        %1544 = vmatpush.msra.mxu0 %v1467
        %1545 = vmatpush.msra.mxu0 %v1466
        %1546 = vmatmul.f32.gmra.mxu0 %v1442
        %v1547 = vpop.f32.mrf.mxu0
        %v1548 = vadd.f32 %v1504, %v1547
        %1549 = vmatmul.f32.gmra.mxu0 %v1445
        %v1550 = vpop.f32.mrf.mxu0
        %v1551 = vadd.f32 %v1504, %v1550
        %1552 = vmatmul.f32.gmra.mxu0 %v1448
        %v1553 = vpop.f32.mrf.mxu0
        %v1554 = vadd.f32 %v1504, %v1553
        %1555 = vmatmul.f32.gmra.mxu0 %v1451
        %v1556 = vpop.f32.mrf.mxu0
        %v1557 = vadd.f32 %v1504, %v1556
        %1558 = vmatmul.f32.gmra.mxu0 %v1454
        %v1559 = vpop.f32.mrf.mxu0
        %v1560 = vadd.f32 %v1504, %v1559
        %1561 = vmatmul.f32.gmra.mxu0 %v1457
        %v1562 = vpop.f32.mrf.mxu0
        %v1563 = vadd.f32 %v1504, %v1562
        %1564 = vmatmul.f32.gmra.mxu0 %v1460
        %v1565 = vpop.f32.mrf.mxu0
        %v1566 = vadd.f32 %v1504, %v1565
        %1567 = vmatmul.f32.gmra.mxu0 %v1463
        %v1568 = vpop.f32.mrf.mxu0
        %v1569 = vadd.f32 %v1504, %v1568
        %1570 = vdwg.mxu0
        %1571 = vmatpush.msra.mxu0 %v1497
        %1572 = vmatpush.msra.mxu0 %v1496
        %1573 = vmatpush.msra.mxu0 %v1495
        %1574 = vmatpush.msra.mxu0 %v1494
        %1575 = vmatpush.msra.mxu0 %v1493
        %1576 = vmatpush.msra.mxu0 %v1492
        %1577 = vmatpush.msra.mxu0 %v1491
        %1578 = vmatpush.msra.mxu0 %v1490
        %1579 = vmatpush.msra.mxu0 %v1489
        %1580 = vmatpush.msra.mxu0 %v1488
        %1581 = vmatpush.msra.mxu0 %v1487
        %1582 = vmatpush.msra.mxu0 %v1486
        %1583 = vmatpush.msra.mxu0 %v1485
        %1584 = vmatpush.msra.mxu0 %v1484
        %1585 = vmatpush.msra.mxu0 %v1483
        %1586 = vmatpush.msra.mxu0 %v1482
        %1587 = vmatmul.f32.gmra.mxu0 %v1443
        %v1588 = vpop.f32.mrf.mxu0
        %v1589 = vadd.f32 %v1548, %v1588
        %1590 = vmatmul.f32.gmra.mxu0 %v1446
        %v1591 = vpop.f32.mrf.mxu0
        %v1592 = vadd.f32 %v1551, %v1591
        %1593 = vmatmul.f32.gmra.mxu0 %v1449
        %v1594 = vpop.f32.mrf.mxu0
        %v1595 = vadd.f32 %v1554, %v1594
        %1596 = vmatmul.f32.gmra.mxu0 %v1452
        %v1597 = vpop.f32.mrf.mxu0
        %v1598 = vadd.f32 %v1557, %v1597
        %1599 = vmatmul.f32.gmra.mxu0 %v1455
        %v1600 = vpop.f32.mrf.mxu0
        %v1601 = vadd.f32 %v1560, %v1600
        %1602 = vmatmul.f32.gmra.mxu0 %v1458
        %v1603 = vpop.f32.mrf.mxu0
        %v1604 = vadd.f32 %v1563, %v1603
        %1605 = vmatmul.f32.gmra.mxu0 %v1461
        %v1606 = vpop.f32.mrf.mxu0
        %v1607 = vadd.f32 %v1566, %v1606
        %1608 = vmatmul.f32.gmra.mxu0 %v1464
        %v1609 = vpop.f32.mrf.mxu0
        %v1610 = vadd.f32 %v1569, %v1609
        %1611 = vdwg.mxu0
        %1612 = vmatpush.msra.mxu0 0.0
        %1613 = vmatpush.msra.mxu0 0.0
        %1614 = vmatpush.msra.mxu0 0.0
        %1615 = vmatpush.msra.mxu0 0.0
        %1616 = vmatpush.msra.mxu0 0.0
        %1617 = vmatpush.msra.mxu0 0.0
        %1618 = vmatpush.msra.mxu0 0.0
        %1619 = vmatpush.msra.mxu0 0.0
        %1620 = vmatpush.msra.mxu0 0.0
        %1621 = vmatpush.msra.mxu0 0.0
        %1622 = vmatpush.msra.mxu0 0.0
        %1623 = vmatpush.msra.mxu0 0.0
        %1624 = vmatpush.msra.mxu0 %v1501
        %1625 = vmatpush.msra.mxu0 %v1500
        %1626 = vmatpush.msra.mxu0 %v1499
        %1627 = vmatpush.msra.mxu0 %v1498
        %1628 = vmatmul.f32.gmra.mxu0 %v1507
        %v1629 = vpop.f32.mrf.mxu0
        %v1630 = vadd.f32 %v1589, %v1629
        %1631 = vmatmul.f32.gmra.mxu0 %v1510
        %v1632 = vpop.f32.mrf.mxu0
        %v1633 = vadd.f32 %v1592, %v1632
        %1634 = vmatmul.f32.gmra.mxu0 %v1513
        %v1635 = vpop.f32.mrf.mxu0
        %v1636 = vadd.f32 %v1595, %v1635
        %1637 = vmatmul.f32.gmra.mxu0 %v1516
        %v1638 = vpop.f32.mrf.mxu0
        %v1639 = vadd.f32 %v1598, %v1638
        %1640 = vmatmul.f32.gmra.mxu0 %v1519
        %v1641 = vpop.f32.mrf.mxu0
        %v1642 = vadd.f32 %v1601, %v1641
        %1643 = vmatmul.f32.gmra.mxu0 %v1522
        %v1644 = vpop.f32.mrf.mxu0
        %v1645 = vadd.f32 %v1604, %v1644
        %1646 = vmatmul.f32.gmra.mxu0 %v1525
        %v1647 = vpop.f32.mrf.mxu0
        %v1648 = vadd.f32 %v1607, %v1647
        %1649 = vmatmul.f32.gmra.mxu0 %v1528
        %v1650 = vpop.f32.mrf.mxu0
        %v1651 = vadd.f32 %v1610, %v1650
        %1652 = vdwg.mxu0
        %v1653 = vmax.f32 %v1630, 0.0
        %v1654 = vmax.f32 %v1633, 0.0
        %v1655 = vmax.f32 %v1636, 0.0
        %v1656 = vmax.f32 %v1639, 0.0
        %v1657 = vmax.f32 %v1642, 0.0
        %v1658 = vmax.f32 %v1645, 0.0
        %v1659 = vmax.f32 %v1648, 0.0
        %v1660 = vmax.f32 %v1651, 0.0
        %v1661 = vlaneseq
        %vm1662 = vcmp.ge.s32.totalorder %v1661, 0
        %vm1663 = vcmp.lt.s32.totalorder %v1661, 64
        %vm1664 = vmand %vm1662, %vm1663
        %1665 = vst.msk [vmem:[#allocation5] sm:$0x1] %vm1664, %v1653
        %1667 = vst [vmem:[#allocation1] sm:$0xff] %v1653
        %s1668 = scalar_lea.vmem [#allocation1], 1
        %v1669 = vld [vmem:[%s1668] ss:$9 sm:$0xff]
        %1670 = vrot.lane.b32.xlu0 %v1669, 64
        %v1671 = vpop.permute.xlu0 %1670
        %vm1673 = vcmp.ge.s32.totalorder %v1661, 64
        %vm1674 = vcmp.lt.s32.totalorder %v1661, 128
        %vm1675 = vmand %vm1673, %vm1674
        %1676 = vst.msk [vmem:[#allocation5] sm:$0x1] %vm1675, %v1671
        %1677 = vst [vmem:[#allocation1] sm:$0xff] %v1653
        %s1678 = scalar_lea.vmem [#allocation1], 2
        %v1679 = vld [vmem:[%s1678] ss:$9 sm:$0xff]
        %1681 = vst.msk [vmem:[#allocation5 + $0x1] sm:$0x1] %vm1664, %v1679
        %1682 = vst [vmem:[#allocation1] sm:$0xff] %v1653
        %s1683 = scalar_lea.vmem [#allocation1], 3
        %v1684 = vld [vmem:[%s1683] ss:$9 sm:$0xff]
        %1685 = vrot.lane.b32.xlu0 %v1684, 64
        %v1686 = vpop.permute.xlu0 %1685
        %1688 = vst.msk [vmem:[#allocation5 + $0x1] sm:$0x1] %vm1675, %v1686
        %1689 = vst [vmem:[#allocation1] sm:$0xff] %v1653
        %s1690 = scalar_lea.vmem [#allocation1], 4
        %v1691 = vld [vmem:[%s1690] ss:$9 sm:$0xff]
        %1693 = vst.msk [vmem:[#allocation5 + $0x2] sm:$0x1] %vm1664, %v1691
        %1694 = vst [vmem:[#allocation1] sm:$0xff] %v1653
        %s1695 = scalar_lea.vmem [#allocation1], 5
        %v1696 = vld [vmem:[%s1695] ss:$9 sm:$0xff]
        %1697 = vrot.lane.b32.xlu0 %v1696, 64
        %v1698 = vpop.permute.xlu0 %1697
        %1700 = vst.msk [vmem:[#allocation5 + $0x2] sm:$0x1] %vm1675, %v1698
        %1701 = vst [vmem:[#allocation1] sm:$0xff] %v1653
        %s1702 = scalar_lea.vmem [#allocation1], 6
        %v1703 = vld [vmem:[%s1702] ss:$9 sm:$0xff]
        %1705 = vst.msk [vmem:[#allocation5 + $0x3] sm:$0x1] %vm1664, %v1703
        %1706 = vst [vmem:[#allocation1] sm:$0xff] %v1653
        %s1707 = scalar_lea.vmem [#allocation1], 7
        %v1708 = vld [vmem:[%s1707] ss:$9 sm:$0xff]
        %1709 = vrot.lane.b32.xlu0 %v1708, 64
        %v1710 = vpop.permute.xlu0 %1709
        %1712 = vst.msk [vmem:[#allocation5 + $0x3] sm:$0x1] %vm1675, %v1710
        %1713 = vst.msk [vmem:[#allocation5 + $0x4] sm:$0x1] %vm1664, %v1654
        %1715 = vst [vmem:[#allocation1] sm:$0xff] %v1654
        %s1716 = scalar_lea.vmem [#allocation1], 1
        %v1717 = vld [vmem:[%s1716] ss:$9 sm:$0xff]
        %1718 = vrot.lane.b32.xlu0 %v1717, 64
        %v1719 = vpop.permute.xlu0 %1718
        %1721 = vst.msk [vmem:[#allocation5 + $0x4] sm:$0x1] %vm1675, %v1719
        %1722 = vst [vmem:[#allocation1] sm:$0xff] %v1654
        %s1723 = scalar_lea.vmem [#allocation1], 2
        %v1724 = vld [vmem:[%s1723] ss:$9 sm:$0xff]
        %1726 = vst.msk [vmem:[#allocation5 + $0x5] sm:$0x1] %vm1664, %v1724
        %1727 = vst [vmem:[#allocation1] sm:$0xff] %v1654
        %s1728 = scalar_lea.vmem [#allocation1], 3
        %v1729 = vld [vmem:[%s1728] ss:$9 sm:$0xff]
        %1730 = vrot.lane.b32.xlu0 %v1729, 64
        %v1731 = vpop.permute.xlu0 %1730
        %1733 = vst.msk [vmem:[#allocation5 + $0x5] sm:$0x1] %vm1675, %v1731
        %1734 = vst [vmem:[#allocation1] sm:$0xff] %v1654
        %s1735 = scalar_lea.vmem [#allocation1], 4
        %v1736 = vld [vmem:[%s1735] ss:$9 sm:$0xff]
        %1738 = vst.msk [vmem:[#allocation5 + $0x6] sm:$0x1] %vm1664, %v1736
        %1739 = vst [vmem:[#allocation1] sm:$0xff] %v1654
        %s1740 = scalar_lea.vmem [#allocation1], 5
        %v1741 = vld [vmem:[%s1740] ss:$9 sm:$0xff]
        %1742 = vrot.lane.b32.xlu0 %v1741, 64
        %v1743 = vpop.permute.xlu0 %1742
        %1745 = vst.msk [vmem:[#allocation5 + $0x6] sm:$0x1] %vm1675, %v1743
        %1746 = vst [vmem:[#allocation1] sm:$0xff] %v1654
        %s1747 = scalar_lea.vmem [#allocation1], 6
        %v1748 = vld [vmem:[%s1747] ss:$9 sm:$0xff]
        %1750 = vst.msk [vmem:[#allocation5 + $0x7] sm:$0x1] %vm1664, %v1748
        %1751 = vst [vmem:[#allocation1] sm:$0xff] %v1654
        %s1752 = scalar_lea.vmem [#allocation1], 7
        %v1753 = vld [vmem:[%s1752] ss:$9 sm:$0xff]
        %1754 = vrot.lane.b32.xlu0 %v1753, 64
        %v1755 = vpop.permute.xlu0 %1754
        %1757 = vst.msk [vmem:[#allocation5 + $0x7] sm:$0x1] %vm1675, %v1755
        %1758 = vst.msk [vmem:[#allocation5 + $0x8] sm:$0x1] %vm1664, %v1655
        %1760 = vst [vmem:[#allocation1] sm:$0xff] %v1655
        %s1761 = scalar_lea.vmem [#allocation1], 1
        %v1762 = vld [vmem:[%s1761] ss:$9 sm:$0xff]
        %1763 = vrot.lane.b32.xlu0 %v1762, 64
        %v1764 = vpop.permute.xlu0 %1763
        %1766 = vst.msk [vmem:[#allocation5 + $0x8] sm:$0x1] %vm1675, %v1764
        %1767 = vst [vmem:[#allocation1] sm:$0xff] %v1655
        %s1768 = scalar_lea.vmem [#allocation1], 2
        %v1769 = vld [vmem:[%s1768] ss:$9 sm:$0xff]
        %1771 = vst.msk [vmem:[#allocation5 + $0x9] sm:$0x1] %vm1664, %v1769
        %1772 = vst [vmem:[#allocation1] sm:$0xff] %v1655
        %s1773 = scalar_lea.vmem [#allocation1], 3
        %v1774 = vld [vmem:[%s1773] ss:$9 sm:$0xff]
        %1775 = vrot.lane.b32.xlu0 %v1774, 64
        %v1776 = vpop.permute.xlu0 %1775
        %1778 = vst.msk [vmem:[#allocation5 + $0x9] sm:$0x1] %vm1675, %v1776
        %1779 = vst [vmem:[#allocation1] sm:$0xff] %v1655
        %s1780 = scalar_lea.vmem [#allocation1], 4
        %v1781 = vld [vmem:[%s1780] ss:$9 sm:$0xff]
        %1783 = vst.msk [vmem:[#allocation5 + $0xa] sm:$0x1] %vm1664, %v1781
        %1784 = vst [vmem:[#allocation1] sm:$0xff] %v1655
        %s1785 = scalar_lea.vmem [#allocation1], 5
        %v1786 = vld [vmem:[%s1785] ss:$9 sm:$0xff]
        %1787 = vrot.lane.b32.xlu0 %v1786, 64
        %v1788 = vpop.permute.xlu0 %1787
        %1790 = vst.msk [vmem:[#allocation5 + $0xa] sm:$0x1] %vm1675, %v1788
        %1791 = vst [vmem:[#allocation1] sm:$0xff] %v1655
        %s1792 = scalar_lea.vmem [#allocation1], 6
        %v1793 = vld [vmem:[%s1792] ss:$9 sm:$0xff]
        %1795 = vst.msk [vmem:[#allocation5 + $0xb] sm:$0x1] %vm1664, %v1793
        %1796 = vst [vmem:[#allocation1] sm:$0xff] %v1655
        %s1797 = scalar_lea.vmem [#allocation1], 7
        %v1798 = vld [vmem:[%s1797] ss:$9 sm:$0xff]
        %1799 = vrot.lane.b32.xlu0 %v1798, 64
        %v1800 = vpop.permute.xlu0 %1799
        %1802 = vst.msk [vmem:[#allocation5 + $0xb] sm:$0x1] %vm1675, %v1800
        %1803 = vst.msk [vmem:[#allocation5 + $0xc] sm:$0x1] %vm1664, %v1656
        %1805 = vst [vmem:[#allocation1] sm:$0xff] %v1656
        %s1806 = scalar_lea.vmem [#allocation1], 1
        %v1807 = vld [vmem:[%s1806] ss:$9 sm:$0xff]
        %1808 = vrot.lane.b32.xlu0 %v1807, 64
        %v1809 = vpop.permute.xlu0 %1808
        %1811 = vst.msk [vmem:[#allocation5 + $0xc] sm:$0x1] %vm1675, %v1809
        %1812 = vst [vmem:[#allocation1] sm:$0xff] %v1656
        %s1813 = scalar_lea.vmem [#allocation1], 2
        %v1814 = vld [vmem:[%s1813] ss:$9 sm:$0xff]
        %1816 = vst.msk [vmem:[#allocation5 + $0xd] sm:$0x1] %vm1664, %v1814
        %1817 = vst [vmem:[#allocation1] sm:$0xff] %v1656
        %s1818 = scalar_lea.vmem [#allocation1], 3
        %v1819 = vld [vmem:[%s1818] ss:$9 sm:$0xff]
        %1820 = vrot.lane.b32.xlu0 %v1819, 64
        %v1821 = vpop.permute.xlu0 %1820
        %1823 = vst.msk [vmem:[#allocation5 + $0xd] sm:$0x1] %vm1675, %v1821
        %1824 = vst [vmem:[#allocation1] sm:$0xff] %v1656
        %s1825 = scalar_lea.vmem [#allocation1], 4
        %v1826 = vld [vmem:[%s1825] ss:$9 sm:$0xff]
        %1828 = vst.msk [vmem:[#allocation5 + $0xe] sm:$0x1] %vm1664, %v1826
        %1829 = vst [vmem:[#allocation1] sm:$0xff] %v1656
        %s1830 = scalar_lea.vmem [#allocation1], 5
        %v1831 = vld [vmem:[%s1830] ss:$9 sm:$0xff]
        %1832 = vrot.lane.b32.xlu0 %v1831, 64
        %v1833 = vpop.permute.xlu0 %1832
        %1835 = vst.msk [vmem:[#allocation5 + $0xe] sm:$0x1] %vm1675, %v1833
        %1836 = vst [vmem:[#allocation1] sm:$0xff] %v1656
        %s1837 = scalar_lea.vmem [#allocation1], 6
        %v1838 = vld [vmem:[%s1837] ss:$9 sm:$0xff]
        %1840 = vst.msk [vmem:[#allocation5 + $0xf] sm:$0x1] %vm1664, %v1838
        %1841 = vst [vmem:[#allocation1] sm:$0xff] %v1656
        %s1842 = scalar_lea.vmem [#allocation1], 7
        %v1843 = vld [vmem:[%s1842] ss:$9 sm:$0xff]
        %1844 = vrot.lane.b32.xlu0 %v1843, 64
        %v1845 = vpop.permute.xlu0 %1844
        %1847 = vst.msk [vmem:[#allocation5 + $0xf] sm:$0x1] %vm1675, %v1845
        %1848 = vst.msk [vmem:[#allocation5 + $0x10] sm:$0x1] %vm1664, %v1657
        %1850 = vst [vmem:[#allocation1] sm:$0xff] %v1657
        %s1851 = scalar_lea.vmem [#allocation1], 1
        %v1852 = vld [vmem:[%s1851] ss:$9 sm:$0xff]
        %1853 = vrot.lane.b32.xlu0 %v1852, 64
        %v1854 = vpop.permute.xlu0 %1853
        %1856 = vst.msk [vmem:[#allocation5 + $0x10] sm:$0x1] %vm1675, %v1854
        %1857 = vst [vmem:[#allocation1] sm:$0xff] %v1657
        %s1858 = scalar_lea.vmem [#allocation1], 2
        %v1859 = vld [vmem:[%s1858] ss:$9 sm:$0xff]
        %1861 = vst.msk [vmem:[#allocation5 + $0x11] sm:$0x1] %vm1664, %v1859
        %1862 = vst [vmem:[#allocation1] sm:$0xff] %v1657
        %s1863 = scalar_lea.vmem [#allocation1], 3
        %v1864 = vld [vmem:[%s1863] ss:$9 sm:$0xff]
        %1865 = vrot.lane.b32.xlu0 %v1864, 64
        %v1866 = vpop.permute.xlu0 %1865
        %1868 = vst.msk [vmem:[#allocation5 + $0x11] sm:$0x1] %vm1675, %v1866
        %1869 = vst [vmem:[#allocation1] sm:$0xff] %v1657
        %s1870 = scalar_lea.vmem [#allocation1], 4
        %v1871 = vld [vmem:[%s1870] ss:$9 sm:$0xff]
        %1873 = vst.msk [vmem:[#allocation5 + $0x12] sm:$0x1] %vm1664, %v1871
        %1874 = vst [vmem:[#allocation1] sm:$0xff] %v1657
        %s1875 = scalar_lea.vmem [#allocation1], 5
        %v1876 = vld [vmem:[%s1875] ss:$9 sm:$0xff]
        %1877 = vrot.lane.b32.xlu0 %v1876, 64
        %v1878 = vpop.permute.xlu0 %1877
        %1880 = vst.msk [vmem:[#allocation5 + $0x12] sm:$0x1] %vm1675, %v1878
        %1881 = vst [vmem:[#allocation1] sm:$0xff] %v1657
        %s1882 = scalar_lea.vmem [#allocation1], 6
        %v1883 = vld [vmem:[%s1882] ss:$9 sm:$0xff]
        %1885 = vst.msk [vmem:[#allocation5 + $0x13] sm:$0x1] %vm1664, %v1883
        %1886 = vst [vmem:[#allocation1] sm:$0xff] %v1657
        %s1887 = scalar_lea.vmem [#allocation1], 7
        %v1888 = vld [vmem:[%s1887] ss:$9 sm:$0xff]
        %1889 = vrot.lane.b32.xlu0 %v1888, 64
        %v1890 = vpop.permute.xlu0 %1889
        %1892 = vst.msk [vmem:[#allocation5 + $0x13] sm:$0x1] %vm1675, %v1890
        %1893 = vst.msk [vmem:[#allocation5 + $0x14] sm:$0x1] %vm1664, %v1658
        %1895 = vst [vmem:[#allocation1] sm:$0xff] %v1658
        %s1896 = scalar_lea.vmem [#allocation1], 1
        %v1897 = vld [vmem:[%s1896] ss:$9 sm:$0xff]
        %1898 = vrot.lane.b32.xlu0 %v1897, 64
        %v1899 = vpop.permute.xlu0 %1898
        %1901 = vst.msk [vmem:[#allocation5 + $0x14] sm:$0x1] %vm1675, %v1899
        %1902 = vst [vmem:[#allocation1] sm:$0xff] %v1658
        %s1903 = scalar_lea.vmem [#allocation1], 2
        %v1904 = vld [vmem:[%s1903] ss:$9 sm:$0xff]
        %1906 = vst.msk [vmem:[#allocation5 + $0x15] sm:$0x1] %vm1664, %v1904
        %1907 = vst [vmem:[#allocation1] sm:$0xff] %v1658
        %s1908 = scalar_lea.vmem [#allocation1], 3
        %v1909 = vld [vmem:[%s1908] ss:$9 sm:$0xff]
        %1910 = vrot.lane.b32.xlu0 %v1909, 64
        %v1911 = vpop.permute.xlu0 %1910
        %1913 = vst.msk [vmem:[#allocation5 + $0x15] sm:$0x1] %vm1675, %v1911
        %1914 = vst [vmem:[#allocation1] sm:$0xff] %v1658
        %s1915 = scalar_lea.vmem [#allocation1], 4
        %v1916 = vld [vmem:[%s1915] ss:$9 sm:$0xff]
        %1918 = vst.msk [vmem:[#allocation5 + $0x16] sm:$0x1] %vm1664, %v1916
        %1919 = vst [vmem:[#allocation1] sm:$0xff] %v1658
        %s1920 = scalar_lea.vmem [#allocation1], 5
        %v1921 = vld [vmem:[%s1920] ss:$9 sm:$0xff]
        %1922 = vrot.lane.b32.xlu0 %v1921, 64
        %v1923 = vpop.permute.xlu0 %1922
        %1925 = vst.msk [vmem:[#allocation5 + $0x16] sm:$0x1] %vm1675, %v1923
        %1926 = vst [vmem:[#allocation1] sm:$0xff] %v1658
        %s1927 = scalar_lea.vmem [#allocation1], 6
        %v1928 = vld [vmem:[%s1927] ss:$9 sm:$0xff]
        %1930 = vst.msk [vmem:[#allocation5 + $0x17] sm:$0x1] %vm1664, %v1928
        %1931 = vst [vmem:[#allocation1] sm:$0xff] %v1658
        %s1932 = scalar_lea.vmem [#allocation1], 7
        %v1933 = vld [vmem:[%s1932] ss:$9 sm:$0xff]
        %1934 = vrot.lane.b32.xlu0 %v1933, 64
        %v1935 = vpop.permute.xlu0 %1934
        %1937 = vst.msk [vmem:[#allocation5 + $0x17] sm:$0x1] %vm1675, %v1935
        %1938 = vst.msk [vmem:[#allocation5 + $0x18] sm:$0x1] %vm1664, %v1659
        %1940 = vst [vmem:[#allocation1] sm:$0xff] %v1659
        %s1941 = scalar_lea.vmem [#allocation1], 1
        %v1942 = vld [vmem:[%s1941] ss:$9 sm:$0xff]
        %1943 = vrot.lane.b32.xlu0 %v1942, 64
        %v1944 = vpop.permute.xlu0 %1943
        %1946 = vst.msk [vmem:[#allocation5 + $0x18] sm:$0x1] %vm1675, %v1944
        %1947 = vst [vmem:[#allocation1] sm:$0xff] %v1659
        %s1948 = scalar_lea.vmem [#allocation1], 2
        %v1949 = vld [vmem:[%s1948] ss:$9 sm:$0xff]
        %1951 = vst.msk [vmem:[#allocation5 + $0x19] sm:$0x1] %vm1664, %v1949
        %1952 = vst [vmem:[#allocation1] sm:$0xff] %v1659
        %s1953 = scalar_lea.vmem [#allocation1], 3
        %v1954 = vld [vmem:[%s1953] ss:$9 sm:$0xff]
        %1955 = vrot.lane.b32.xlu0 %v1954, 64
        %v1956 = vpop.permute.xlu0 %1955
        %1958 = vst.msk [vmem:[#allocation5 + $0x19] sm:$0x1] %vm1675, %v1956
        %1959 = vst [vmem:[#allocation1] sm:$0xff] %v1659
        %s1960 = scalar_lea.vmem [#allocation1], 4
        %v1961 = vld [vmem:[%s1960] ss:$9 sm:$0xff]
        %1963 = vst.msk [vmem:[#allocation5 + $0x1a] sm:$0x1] %vm1664, %v1961
        %1964 = vst [vmem:[#allocation1] sm:$0xff] %v1659
        %s1965 = scalar_lea.vmem [#allocation1], 5
        %v1966 = vld [vmem:[%s1965] ss:$9 sm:$0xff]
        %1967 = vrot.lane.b32.xlu0 %v1966, 64
        %v1968 = vpop.permute.xlu0 %1967
        %1970 = vst.msk [vmem:[#allocation5 + $0x1a] sm:$0x1] %vm1675, %v1968
        %1971 = vst [vmem:[#allocation1] sm:$0xff] %v1659
        %s1972 = scalar_lea.vmem [#allocation1], 6
        %v1973 = vld [vmem:[%s1972] ss:$9 sm:$0xff]
        %1975 = vst.msk [vmem:[#allocation5 + $0x1b] sm:$0x1] %vm1664, %v1973
        %1976 = vst [vmem:[#allocation1] sm:$0xff] %v1659
        %s1977 = scalar_lea.vmem [#allocation1], 7
        %v1978 = vld [vmem:[%s1977] ss:$9 sm:$0xff]
        %1979 = vrot.lane.b32.xlu0 %v1978, 64
        %v1980 = vpop.permute.xlu0 %1979
        %1982 = vst.msk [vmem:[#allocation5 + $0x1b] sm:$0x1] %vm1675, %v1980
        %1983 = vst.msk [vmem:[#allocation5 + $0x1c] sm:$0x1] %vm1664, %v1660
        %1985 = vst [vmem:[#allocation1] sm:$0xff] %v1660
        %s1986 = scalar_lea.vmem [#allocation1], 1
        %v1987 = vld [vmem:[%s1986] ss:$9 sm:$0xff]
        %1988 = vrot.lane.b32.xlu0 %v1987, 64
        %v1989 = vpop.permute.xlu0 %1988
        %1991 = vst.msk [vmem:[#allocation5 + $0x1c] sm:$0x1] %vm1675, %v1989
        %1992 = vst [vmem:[#allocation1] sm:$0xff] %v1660
        %s1993 = scalar_lea.vmem [#allocation1], 2
        %v1994 = vld [vmem:[%s1993] ss:$9 sm:$0xff]
        %1996 = vst.msk [vmem:[#allocation5 + $0x1d] sm:$0x1] %vm1664, %v1994
        %1997 = vst [vmem:[#allocation1] sm:$0xff] %v1660
        %s1998 = scalar_lea.vmem [#allocation1], 3
        %v1999 = vld [vmem:[%s1998] ss:$9 sm:$0xff]
        %2000 = vrot.lane.b32.xlu0 %v1999, 64
        %v2001 = vpop.permute.xlu0 %2000
        %2003 = vst.msk [vmem:[#allocation5 + $0x1d] sm:$0x1] %vm1675, %v2001
        %2004 = vst [vmem:[#allocation1] sm:$0xff] %v1660
        %s2005 = scalar_lea.vmem [#allocation1], 4
        %v2006 = vld [vmem:[%s2005] ss:$9 sm:$0xff]
        %2008 = vst.msk [vmem:[#allocation5 + $0x1e] sm:$0x1] %vm1664, %v2006
        %2009 = vst [vmem:[#allocation1] sm:$0xff] %v1660
        %s2010 = scalar_lea.vmem [#allocation1], 5
        %v2011 = vld [vmem:[%s2010] ss:$9 sm:$0xff]
        %2012 = vrot.lane.b32.xlu0 %v2011, 64
        %v2013 = vpop.permute.xlu0 %2012
        %2015 = vst.msk [vmem:[#allocation5 + $0x1e] sm:$0x1] %vm1675, %v2013
        %2016 = vst [vmem:[#allocation1] sm:$0xff] %v1660
        %s2017 = scalar_lea.vmem [#allocation1], 6
        %v2018 = vld [vmem:[%s2017] ss:$9 sm:$0xff]
        %2020 = vst.msk [vmem:[#allocation5 + $0x1f] sm:$0x1] %vm1664, %v2018
        %2021 = vst [vmem:[#allocation1] sm:$0xff] %v1660
        %s2022 = scalar_lea.vmem [#allocation1], 7
        %v2023 = vld [vmem:[%s2022] ss:$9 sm:$0xff]
        %2024 = vrot.lane.b32.xlu0 %v2023, 64
        %v2025 = vpop.permute.xlu0 %2024
        %2027 = vst.msk [vmem:[#allocation5 + $0x1f] sm:$0x1] %vm1675, %v2025
        %v2028 = vld [vmem:[#allocation5] sm:$0xff]
        %v2029 = vld [vmem:[#allocation5 + $0x8] sm:$0xff]
        %v2030 = vld [vmem:[#allocation5 + $0x10] sm:$0xff]
        %v2031 = vld [vmem:[#allocation5 + $0x18] sm:$0xff]
        %v2032 = vld [vmem:[#allocation13] sm:$0xff]
        %v2033 = vld [vmem:[#allocation13 + $0x8] sm:$0xff]
        %v2034 = vld [vmem:[#allocation13 + $0x10] sm:$0xff]
        %v2035 = vld [vmem:[#allocation13 + $0x18] sm:$0xff]
        %v2036 = vld [vmem:[#allocation13 + $0x20] sm:$0xff]
        %v2037 = vld [vmem:[#allocation13 + $0x28] sm:$0xff]
        %v2038 = vld [vmem:[#allocation13 + $0x30] sm:$0xff]
        %v2039 = vld [vmem:[#allocation13 + $0x38] sm:$0xff]
        %v2040 = vld [vmem:[#allocation13 + $0x40] sm:$0xff]
        %v2041 = vld [vmem:[#allocation13 + $0x48] sm:$0xff]
        %v2042 = vld [vmem:[#allocation13 + $0x50] sm:$0xff]
        %v2043 = vld [vmem:[#allocation13 + $0x58] sm:$0xff]
        %v2044 = vld [vmem:[#allocation13 + $0x60] sm:$0xff]
        %v2045 = vld [vmem:[#allocation13 + $0x68] sm:$0xff]
        %v2046 = vld [vmem:[#allocation13 + $0x70] sm:$0xff]
        %v2047 = vld [vmem:[#allocation13 + $0x78] sm:$0xff]
        %v2048 = vld [vmem:[#allocation13 + $0x80] sm:$0xff]
        %v2049 = vld [vmem:[#allocation13 + $0x88] sm:$0xff]
        %v2050 = vld [vmem:[#allocation13 + $0x90] sm:$0xff]
        %v2051 = vld [vmem:[#allocation13 + $0x98] sm:$0xff]
        %v2052 = vld [vmem:[#allocation13 + $0xa0] sm:$0xff]
        %v2053 = vld [vmem:[#allocation13 + $0xa8] sm:$0xff]
        %v2054 = vld [vmem:[#allocation13 + $0xb0] sm:$0xff]
        %v2055 = vld [vmem:[#allocation13 + $0xb8] sm:$0xff]
        %v2056 = vld [vmem:[#allocation13 + $0xc0] sm:$0xff]
        %v2057 = vld [vmem:[#allocation13 + $0xc8] sm:$0xff]
        %v2058 = vld [vmem:[#allocation13 + $0xd0] sm:$0xff]
        %v2059 = vld [vmem:[#allocation13 + $0xd8] sm:$0xff]
        %v2060 = vld [vmem:[#allocation13 + $0xe0] sm:$0xff]
        %v2061 = vld [vmem:[#allocation13 + $0xe8] sm:$0xff]
        %v2062 = vld [vmem:[#allocation13 + $0xf0] sm:$0xff]
        %v2063 = vld [vmem:[#allocation13 + $0xf8] sm:$0xff]
        %v2064 = vld [vmem:[#allocation13 + $0x100] sm:$0xff]
        %v2065 = vld [vmem:[#allocation13 + $0x108] sm:$0xff]
        %v2066 = vld [vmem:[#allocation13 + $0x110] sm:$0xff]
        %v2067 = vld [vmem:[#allocation13 + $0x118] sm:$0xff]
        %v2068 = vld [vmem:[#allocation13 + $0x120] sm:$0xff]
        %v2069 = vld [vmem:[#allocation13 + $0x128] sm:$0xff]
        %v2070 = vld [vmem:[#allocation13 + $0x130] sm:$0xff]
        %v2071 = vld [vmem:[#allocation13 + $0x138] sm:$0xff]
        %v2072 = vld [vmem:[#allocation13 + $0x140] sm:$0xff]
        %v2073 = vld [vmem:[#allocation13 + $0x148] sm:$0xff]
        %v2074 = vld [vmem:[#allocation13 + $0x150] sm:$0xff]
        %v2075 = vld [vmem:[#allocation13 + $0x158] sm:$0xff]
        %v2076 = vld [vmem:[#allocation13 + $0x160] sm:$0xff]
        %v2077 = vld [vmem:[#allocation13 + $0x168] sm:$0xff]
        %v2078 = vld [vmem:[#allocation13 + $0x170] sm:$0xff]
        %v2079 = vld [vmem:[#allocation13 + $0x178] sm:$0xff]
        %v2080 = vld [vmem:[#allocation13 + $0x180] sm:$0xff]
        %v2081 = vld [vmem:[#allocation13 + $0x188] sm:$0xff]
        %v2082 = vld [vmem:[#allocation13 + $0x190] sm:$0xff]
        %v2083 = vld [vmem:[#allocation13 + $0x198] sm:$0xff]
        %v2084 = vld [vmem:[#allocation13 + $0x1a0] sm:$0xff]
        %v2085 = vld [vmem:[#allocation13 + $0x1a8] sm:$0xff]
        %v2086 = vld [vmem:[#allocation13 + $0x1b0] sm:$0xff]
        %v2087 = vld [vmem:[#allocation13 + $0x1b8] sm:$0xff]
        %v2088 = vld [vmem:[#allocation13 + $0x1c0] sm:$0xff]
        %v2089 = vld [vmem:[#allocation13 + $0x1c8] sm:$0xff]
        %v2090 = vld [vmem:[#allocation13 + $0x1d0] sm:$0xff]
        %v2091 = vld [vmem:[#allocation13 + $0x1d8] sm:$0xff]
        %v2092 = vld [vmem:[#allocation13 + $0x1e0] sm:$0xff]
        %v2093 = vld [vmem:[#allocation13 + $0x1e8] sm:$0xff]
        %v2094 = vld [vmem:[#allocation13 + $0x1f0] sm:$0xff]
        %v2095 = vld [vmem:[#allocation13 + $0x1f8] sm:$0xff]
        %v2096 = vld [vmem:[#allocation13 + $0x200] sm:$0xff]
        %v2097 = vld [vmem:[#allocation13 + $0x208] sm:$0xff]
        %v2098 = vld [vmem:[#allocation13 + $0x210] sm:$0xff]
        %v2099 = vld [vmem:[#allocation13 + $0x218] sm:$0xff]
        %v2100 = vld [vmem:[#allocation13 + $0x220] sm:$0xff]
        %v2101 = vld [vmem:[#allocation13 + $0x228] sm:$0xff]
        %v2102 = vld [vmem:[#allocation13 + $0x230] sm:$0xff]
        %v2103 = vld [vmem:[#allocation13 + $0x238] sm:$0xff]
        %v2104 = vld [vmem:[#allocation13 + $0x240] sm:$0xff]
        %v2105 = vld [vmem:[#allocation13 + $0x248] sm:$0xff]
        %v2106 = vld [vmem:[#allocation13 + $0x250] sm:$0xff]
        %v2107 = vld [vmem:[#allocation13 + $0x258] sm:$0xff]
        %v2108 = vld [vmem:[#allocation13 + $0x260] sm:$0xff]
        %v2109 = vld [vmem:[#allocation13 + $0x268] sm:$0xff]
        %v2110 = vld [vmem:[#allocation13 + $0x270] sm:$0xff]
        %v2111 = vld [vmem:[#allocation13 + $0x278] sm:$0xff]
        %v2112 = vld [vmem:[#allocation13 + $0x280] sm:$0xff]
        %v2113 = vld [vmem:[#allocation13 + $0x288] sm:$0xff]
        %v2114 = vld [vmem:[#allocation13 + $0x290] sm:$0xff]
        %v2115 = vld [vmem:[#allocation13 + $0x298] sm:$0xff]
        %v2116 = vld [vmem:[#allocation13 + $0x2a0] sm:$0xff]
        %v2117 = vld [vmem:[#allocation13 + $0x2a8] sm:$0xff]
        %v2118 = vld [vmem:[#allocation13 + $0x2b0] sm:$0xff]
        %v2119 = vld [vmem:[#allocation13 + $0x2b8] sm:$0xff]
        %v2120 = vld [vmem:[#allocation13 + $0x2c0] sm:$0xff]
        %v2121 = vld [vmem:[#allocation13 + $0x2c8] sm:$0xff]
        %v2122 = vld [vmem:[#allocation13 + $0x2d0] sm:$0xff]
        %v2123 = vld [vmem:[#allocation13 + $0x2d8] sm:$0xff]
        %v2124 = vld [vmem:[#allocation13 + $0x2e0] sm:$0xff]
        %v2125 = vld [vmem:[#allocation13 + $0x2e8] sm:$0xff]
        %v2126 = vld [vmem:[#allocation13 + $0x2f0] sm:$0xff]
        %v2127 = vld [vmem:[#allocation13 + $0x2f8] sm:$0xff]
        %v2128 = vld [vmem:[#allocation13 + $0x300] sm:$0xff]
        %v2129 = vld [vmem:[#allocation13 + $0x308] sm:$0xff]
        %v2130 = vld [vmem:[#allocation13 + $0x310] sm:$0xff]
        %v2131 = vld [vmem:[#allocation13 + $0x318] sm:$0xff]
        %v2132 = vld [vmem:[#allocation13 + $0x320] sm:$0xff]
        %v2133 = vld [vmem:[#allocation13 + $0x328] sm:$0xff]
        %v2134 = vld [vmem:[#allocation13 + $0x330] sm:$0xff]
        %v2135 = vld [vmem:[#allocation13 + $0x338] sm:$0xff]
        %v2136 = vld [vmem:[#allocation13 + $0x340] sm:$0xff]
        %v2137 = vld [vmem:[#allocation13 + $0x348] sm:$0xff]
        %v2138 = vld [vmem:[#allocation13 + $0x350] sm:$0xff]
        %v2139 = vld [vmem:[#allocation13 + $0x358] sm:$0xff]
        %v2140 = vld [vmem:[#allocation13 + $0x360] sm:$0xff]
        %v2141 = vld [vmem:[#allocation13 + $0x368] sm:$0xff]
        %v2142 = vld [vmem:[#allocation13 + $0x370] sm:$0xff]
        %v2143 = vld [vmem:[#allocation13 + $0x378] sm:$0xff]
        %v2144 = vld [vmem:[#allocation13 + $0x380] sm:$0xff]
        %v2145 = vld [vmem:[#allocation13 + $0x388] sm:$0xff]
        %v2146 = vld [vmem:[#allocation13 + $0x390] sm:$0xff]
        %v2147 = vld [vmem:[#allocation13 + $0x398] sm:$0xff]
        %v2148 = vld [vmem:[#allocation13 + $0x3a0] sm:$0xff]
        %v2149 = vld [vmem:[#allocation13 + $0x3a8] sm:$0xff]
        %v2150 = vld [vmem:[#allocation13 + $0x3b0] sm:$0xff]
        %v2151 = vld [vmem:[#allocation13 + $0x3b8] sm:$0xff]
        %v2152 = vld [vmem:[#allocation13 + $0x3c0] sm:$0xff]
        %v2153 = vld [vmem:[#allocation13 + $0x3c8] sm:$0xff]
        %v2154 = vld [vmem:[#allocation13 + $0x3d0] sm:$0xff]
        %v2155 = vld [vmem:[#allocation13 + $0x3d8] sm:$0xff]
        %v2156 = vld [vmem:[#allocation13 + $0x3e0] sm:$0xff]
        %v2157 = vld [vmem:[#allocation13 + $0x3e8] sm:$0xff]
        %v2158 = vld [vmem:[#allocation13 + $0x3f0] sm:$0xff]
        %v2159 = vld [vmem:[#allocation13 + $0x3f8] sm:$0xff]
        %v2160 = vld [vmem:[#allocation13 + $0x400] sm:$0xff]
        %v2161 = vld [vmem:[#allocation13 + $0x408] sm:$0xff]
        %v2162 = vld [vmem:[#allocation13 + $0x410] sm:$0xff]
        %v2163 = vld [vmem:[#allocation13 + $0x418] sm:$0xff]
        %v2164 = vld [vmem:[#allocation13 + $0x420] sm:$0xff]
        %v2165 = vld [vmem:[#allocation13 + $0x428] sm:$0xff]
        %v2166 = vld [vmem:[#allocation13 + $0x430] sm:$0xff]
        %v2167 = vld [vmem:[#allocation13 + $0x438] sm:$0xff]
        %v2168 = vld [vmem:[#allocation13 + $0x440] sm:$0xff]
        %v2169 = vld [vmem:[#allocation13 + $0x448] sm:$0xff]
        %v2170 = vld [vmem:[#allocation13 + $0x450] sm:$0xff]
        %v2171 = vld [vmem:[#allocation13 + $0x458] sm:$0xff]
        %v2172 = vld [vmem:[#allocation13 + $0x460] sm:$0xff]
        %v2173 = vld [vmem:[#allocation13 + $0x468] sm:$0xff]
        %v2174 = vld [vmem:[#allocation13 + $0x470] sm:$0xff]
        %v2175 = vld [vmem:[#allocation13 + $0x478] sm:$0xff]
        %v2176 = vld [vmem:[#allocation13 + $0x480] sm:$0xff]
        %v2177 = vld [vmem:[#allocation13 + $0x488] sm:$0xff]
        %v2178 = vld [vmem:[#allocation13 + $0x490] sm:$0xff]
        %v2179 = vld [vmem:[#allocation13 + $0x498] sm:$0xff]
        %v2180 = vld [vmem:[#allocation13 + $0x4a0] sm:$0xff]
        %v2181 = vld [vmem:[#allocation13 + $0x4a8] sm:$0xff]
        %v2182 = vld [vmem:[#allocation13 + $0x4b0] sm:$0xff]
        %v2183 = vld [vmem:[#allocation13 + $0x4b8] sm:$0xff]
        %v2184 = vld [vmem:[#allocation13 + $0x4c0] sm:$0xff]
        %v2185 = vld [vmem:[#allocation13 + $0x4c8] sm:$0xff]
        %v2186 = vld [vmem:[#allocation13 + $0x4d0] sm:$0xff]
        %v2187 = vld [vmem:[#allocation13 + $0x4d8] sm:$0xff]
        %v2188 = vld [vmem:[#allocation13 + $0x4e0] sm:$0xff]
        %v2189 = vld [vmem:[#allocation13 + $0x4e8] sm:$0xff]
        %v2190 = vld [vmem:[#allocation13 + $0x4f0] sm:$0xff]
        %v2191 = vld [vmem:[#allocation13 + $0x4f8] sm:$0xff]
        %v2192 = vld [vmem:[#allocation13 + $0x500] sm:$0xff]
        %v2193 = vld [vmem:[#allocation13 + $0x508] sm:$0xff]
        %v2194 = vld [vmem:[#allocation13 + $0x510] sm:$0xff]
        %v2195 = vld [vmem:[#allocation13 + $0x518] sm:$0xff]
        %v2196 = vld [vmem:[#allocation13 + $0x520] sm:$0xff]
        %v2197 = vld [vmem:[#allocation13 + $0x528] sm:$0xff]
        %v2198 = vld [vmem:[#allocation13 + $0x530] sm:$0xff]
        %v2199 = vld [vmem:[#allocation13 + $0x538] sm:$0xff]
        %v2200 = vld [vmem:[#allocation13 + $0x540] sm:$0xff]
        %v2201 = vld [vmem:[#allocation13 + $0x548] sm:$0xff]
        %v2202 = vld [vmem:[#allocation13 + $0x550] sm:$0xff]
        %v2203 = vld [vmem:[#allocation13 + $0x558] sm:$0xff]
        %v2204 = vld [vmem:[#allocation13 + $0x560] sm:$0xff]
        %v2205 = vld [vmem:[#allocation13 + $0x568] sm:$0xff]
        %v2206 = vld [vmem:[#allocation13 + $0x570] sm:$0xff]
        %v2207 = vld [vmem:[#allocation13 + $0x578] sm:$0xff]
        %v2208 = vld [vmem:[#allocation13 + $0x580] sm:$0xff]
        %v2209 = vld [vmem:[#allocation13 + $0x588] sm:$0xff]
        %v2210 = vld [vmem:[#allocation13 + $0x590] sm:$0xff]
        %v2211 = vld [vmem:[#allocation13 + $0x598] sm:$0xff]
        %v2212 = vld [vmem:[#allocation13 + $0x5a0] sm:$0xff]
        %v2213 = vld [vmem:[#allocation13 + $0x5a8] sm:$0xff]
        %v2214 = vld [vmem:[#allocation13 + $0x5b0] sm:$0xff]
        %v2215 = vld [vmem:[#allocation13 + $0x5b8] sm:$0xff]
        %v2216 = vld [vmem:[#allocation13 + $0x5c0] sm:$0xff]
        %v2217 = vld [vmem:[#allocation13 + $0x5c8] sm:$0xff]
        %v2218 = vld [vmem:[#allocation13 + $0x5d0] sm:$0xff]
        %v2219 = vld [vmem:[#allocation13 + $0x5d8] sm:$0xff]
        %v2220 = vld [vmem:[#allocation13 + $0x5e0] sm:$0xff]
        %v2221 = vld [vmem:[#allocation13 + $0x5e8] sm:$0xff]
        %v2222 = vld [vmem:[#allocation13 + $0x5f0] sm:$0xff]
        %v2223 = vld [vmem:[#allocation13 + $0x5f8] sm:$0xff]
        %v2224 = vld [vmem:[#allocation13 + $0x600] sm:$0xff]
        %v2225 = vld [vmem:[#allocation13 + $0x608] sm:$0xff]
        %v2226 = vld [vmem:[#allocation13 + $0x610] sm:$0xff]
        %v2227 = vld [vmem:[#allocation13 + $0x618] sm:$0xff]
        %v2228 = vld [vmem:[#allocation13 + $0x620] sm:$0xff]
        %v2229 = vld [vmem:[#allocation13 + $0x628] sm:$0xff]
        %v2230 = vld [vmem:[#allocation13 + $0x630] sm:$0xff]
        %v2231 = vld [vmem:[#allocation13 + $0x638] sm:$0xff]
        %v2232 = vld [vmem:[#allocation13 + $0x640] sm:$0xff]
        %v2233 = vld [vmem:[#allocation13 + $0x648] sm:$0xff]
        %v2234 = vld [vmem:[#allocation13 + $0x650] sm:$0xff]
        %v2235 = vld [vmem:[#allocation13 + $0x658] sm:$0xff]
        %v2236 = vld [vmem:[#allocation13 + $0x660] sm:$0xff]
        %v2237 = vld [vmem:[#allocation13 + $0x668] sm:$0xff]
        %v2238 = vld [vmem:[#allocation13 + $0x670] sm:$0xff]
        %v2239 = vld [vmem:[#allocation13 + $0x678] sm:$0xff]
        %v2240 = vld [vmem:[#allocation13 + $0x680] sm:$0xff]
        %v2241 = vld [vmem:[#allocation13 + $0x688] sm:$0xff]
        %v2242 = vld [vmem:[#allocation13 + $0x690] sm:$0xff]
        %v2243 = vld [vmem:[#allocation13 + $0x698] sm:$0xff]
        %v2244 = vld [vmem:[#allocation13 + $0x6a0] sm:$0xff]
        %v2245 = vld [vmem:[#allocation13 + $0x6a8] sm:$0xff]
        %v2246 = vld [vmem:[#allocation13 + $0x6b0] sm:$0xff]
        %v2247 = vld [vmem:[#allocation13 + $0x6b8] sm:$0xff]
        %v2248 = vld [vmem:[#allocation13 + $0x6c0] sm:$0xff]
        %v2249 = vld [vmem:[#allocation13 + $0x6c8] sm:$0xff]
        %v2250 = vld [vmem:[#allocation13 + $0x6d0] sm:$0xff]
        %v2251 = vld [vmem:[#allocation13 + $0x6d8] sm:$0xff]
        %v2252 = vld [vmem:[#allocation13 + $0x6e0] sm:$0xff]
        %v2253 = vld [vmem:[#allocation13 + $0x6e8] sm:$0xff]
        %v2254 = vld [vmem:[#allocation13 + $0x6f0] sm:$0xff]
        %v2255 = vld [vmem:[#allocation13 + $0x6f8] sm:$0xff]
        %v2256 = vld [vmem:[#allocation13 + $0x700] sm:$0xff]
        %v2257 = vld [vmem:[#allocation13 + $0x708] sm:$0xff]
        %v2258 = vld [vmem:[#allocation13 + $0x710] sm:$0xff]
        %v2259 = vld [vmem:[#allocation13 + $0x718] sm:$0xff]
        %v2260 = vld [vmem:[#allocation13 + $0x720] sm:$0xff]
        %v2261 = vld [vmem:[#allocation13 + $0x728] sm:$0xff]
        %v2262 = vld [vmem:[#allocation13 + $0x730] sm:$0xff]
        %v2263 = vld [vmem:[#allocation13 + $0x738] sm:$0xff]
        %v2264 = vld [vmem:[#allocation13 + $0x740] sm:$0xff]
        %v2265 = vld [vmem:[#allocation13 + $0x748] sm:$0xff]
        %v2266 = vld [vmem:[#allocation13 + $0x750] sm:$0xff]
        %v2267 = vld [vmem:[#allocation13 + $0x758] sm:$0xff]
        %v2268 = vld [vmem:[#allocation13 + $0x760] sm:$0xff]
        %v2269 = vld [vmem:[#allocation13 + $0x768] sm:$0xff]
        %v2270 = vld [vmem:[#allocation13 + $0x770] sm:$0xff]
        %v2271 = vld [vmem:[#allocation13 + $0x778] sm:$0xff]
        %v2272 = vld [vmem:[#allocation13 + $0x780] sm:$0xff]
        %v2273 = vld [vmem:[#allocation13 + $0x788] sm:$0xff]
        %v2274 = vld [vmem:[#allocation13 + $0x790] sm:$0xff]
        %v2275 = vld [vmem:[#allocation13 + $0x798] sm:$0xff]
        %v2276 = vld [vmem:[#allocation13 + $0x7a0] sm:$0xff]
        %v2277 = vld [vmem:[#allocation13 + $0x7a8] sm:$0xff]
        %v2278 = vld [vmem:[#allocation13 + $0x7b0] sm:$0xff]
        %v2279 = vld [vmem:[#allocation13 + $0x7b8] sm:$0xff]
        %v2280 = vld [vmem:[#allocation13 + $0x7c0] sm:$0xff]
        %v2281 = vld [vmem:[#allocation13 + $0x7c8] sm:$0xff]
        %v2282 = vld [vmem:[#allocation13 + $0x7d0] sm:$0xff]
        %v2283 = vld [vmem:[#allocation13 + $0x7d8] sm:$0xff]
        %v2284 = vld [vmem:[#allocation13 + $0x7e0] sm:$0xff]
        %v2285 = vld [vmem:[#allocation13 + $0x7e8] sm:$0xff]
        %v2286 = vld [vmem:[#allocation13 + $0x7f0] sm:$0xff]
        %v2287 = vld [vmem:[#allocation13 + $0x7f8] sm:$0xff]
        %v2288 = vld [vmem:[#allocation13 + $0x800] sm:$0xff]
        %v2289 = vld [vmem:[#allocation13 + $0x808] sm:$0xff]
        %v2290 = vld [vmem:[#allocation13 + $0x810] sm:$0xff]
        %v2291 = vld [vmem:[#allocation13 + $0x818] sm:$0xff]
        %v2292 = vld [vmem:[#allocation13 + $0x820] sm:$0xff]
        %v2293 = vld [vmem:[#allocation13 + $0x828] sm:$0xff]
        %v2294 = vld [vmem:[#allocation13 + $0x830] sm:$0xff]
        %v2295 = vld [vmem:[#allocation13 + $0x838] sm:$0xff]
        %v2296 = vld [vmem:[#allocation13 + $0x840] sm:$0xff]
        %v2297 = vld [vmem:[#allocation13 + $0x848] sm:$0xff]
        %v2298 = vld [vmem:[#allocation13 + $0x850] sm:$0xff]
        %v2299 = vld [vmem:[#allocation13 + $0x858] sm:$0xff]
        %v2300 = vld [vmem:[#allocation13 + $0x860] sm:$0xff]
        %v2301 = vld [vmem:[#allocation13 + $0x868] sm:$0xff]
        %v2302 = vld [vmem:[#allocation13 + $0x870] sm:$0xff]
        %v2303 = vld [vmem:[#allocation13 + $0x878] sm:$0xff]
        %v2304 = vld [vmem:[#allocation13 + $0x880] sm:$0xff]
        %v2305 = vld [vmem:[#allocation13 + $0x888] sm:$0xff]
        %v2306 = vld [vmem:[#allocation13 + $0x890] sm:$0xff]
        %v2307 = vld [vmem:[#allocation13 + $0x898] sm:$0xff]
        %v2308 = vld [vmem:[#allocation13 + $0x8a0] sm:$0xff]
        %v2309 = vld [vmem:[#allocation13 + $0x8a8] sm:$0xff]
        %v2310 = vld [vmem:[#allocation13 + $0x8b0] sm:$0xff]
        %v2311 = vld [vmem:[#allocation13 + $0x8b8] sm:$0xff]
        %v2312 = vld [vmem:[#allocation13 + $0x8c0] sm:$0xff]
        %v2313 = vld [vmem:[#allocation13 + $0x8c8] sm:$0xff]
        %v2314 = vld [vmem:[#allocation13 + $0x8d0] sm:$0xff]
        %v2315 = vld [vmem:[#allocation13 + $0x8d8] sm:$0xff]
        %v2316 = vld [vmem:[#allocation13 + $0x8e0] sm:$0xff]
        %v2317 = vld [vmem:[#allocation13 + $0x8e8] sm:$0xff]
        %v2318 = vld [vmem:[#allocation13 + $0x8f0] sm:$0xff]
        %v2319 = vld [vmem:[#allocation13 + $0x8f8] sm:$0xff]
        %v2320 = vld [vmem:[#allocation13 + $0x900] sm:$0xff]
        %v2321 = vld [vmem:[#allocation13 + $0x908] sm:$0xff]
        %v2322 = vld [vmem:[#allocation13 + $0x910] sm:$0xff]
        %v2323 = vld [vmem:[#allocation13 + $0x918] sm:$0xff]
        %v2324 = vld [vmem:[#allocation13 + $0x920] sm:$0xff]
        %v2325 = vld [vmem:[#allocation13 + $0x928] sm:$0xff]
        %v2326 = vld [vmem:[#allocation13 + $0x930] sm:$0xff]
        %v2327 = vld [vmem:[#allocation13 + $0x938] sm:$0xff]
        %v2328 = vld [vmem:[#allocation13 + $0x940] sm:$0xff]
        %v2329 = vld [vmem:[#allocation13 + $0x948] sm:$0xff]
        %v2330 = vld [vmem:[#allocation13 + $0x950] sm:$0xff]
        %v2331 = vld [vmem:[#allocation13 + $0x958] sm:$0xff]
        %v2332 = vld [vmem:[#allocation13 + $0x960] sm:$0xff]
        %v2333 = vld [vmem:[#allocation13 + $0x968] sm:$0xff]
        %v2334 = vld [vmem:[#allocation13 + $0x970] sm:$0xff]
        %v2335 = vld [vmem:[#allocation13 + $0x978] sm:$0xff]
        %v2336 = vld [vmem:[#allocation13 + $0x980] sm:$0xff]
        %v2337 = vld [vmem:[#allocation13 + $0x988] sm:$0xff]
        %v2338 = vld [vmem:[#allocation13 + $0x990] sm:$0xff]
        %v2339 = vld [vmem:[#allocation13 + $0x998] sm:$0xff]
        %v2340 = vld [vmem:[#allocation13 + $0x9a0] sm:$0xff]
        %v2341 = vld [vmem:[#allocation13 + $0x9a8] sm:$0xff]
        %v2342 = vld [vmem:[#allocation13 + $0x9b0] sm:$0xff]
        %v2343 = vld [vmem:[#allocation13 + $0x9b8] sm:$0xff]
        %v2344 = vld [vmem:[#allocation13 + $0x9c0] sm:$0xff]
        %v2345 = vld [vmem:[#allocation13 + $0x9c8] sm:$0xff]
        %v2346 = vld [vmem:[#allocation13 + $0x9d0] sm:$0xff]
        %v2347 = vld [vmem:[#allocation13 + $0x9d8] sm:$0xff]
        %v2348 = vld [vmem:[#allocation13 + $0x9e0] sm:$0xff]
        %v2349 = vld [vmem:[#allocation13 + $0x9e8] sm:$0xff]
        %v2350 = vld [vmem:[#allocation13 + $0x9f0] sm:$0xff]
        %v2351 = vld [vmem:[#allocation13 + $0x9f8] sm:$0xff]
        %v2352 = vld [vmem:[#allocation13 + $0xa00] sm:$0xff]
        %v2353 = vld [vmem:[#allocation13 + $0xa08] sm:$0xff]
        %v2354 = vld [vmem:[#allocation13 + $0xa10] sm:$0xff]
        %v2355 = vld [vmem:[#allocation13 + $0xa18] sm:$0xff]
        %v2356 = vld [vmem:[#allocation13 + $0xa20] sm:$0xff]
        %v2357 = vld [vmem:[#allocation13 + $0xa28] sm:$0xff]
        %v2358 = vld [vmem:[#allocation13 + $0xa30] sm:$0xff]
        %v2359 = vld [vmem:[#allocation13 + $0xa38] sm:$0xff]
        %v2360 = vld [vmem:[#allocation13 + $0xa40] sm:$0xff]
        %v2361 = vld [vmem:[#allocation13 + $0xa48] sm:$0xff]
        %v2362 = vld [vmem:[#allocation13 + $0xa50] sm:$0xff]
        %v2363 = vld [vmem:[#allocation13 + $0xa58] sm:$0xff]
        %v2364 = vld [vmem:[#allocation13 + $0xa60] sm:$0xff]
        %v2365 = vld [vmem:[#allocation13 + $0xa68] sm:$0xff]
        %v2366 = vld [vmem:[#allocation13 + $0xa70] sm:$0xff]
        %v2367 = vld [vmem:[#allocation13 + $0xa78] sm:$0xff]
        %v2368 = vld [vmem:[#allocation13 + $0xa80] sm:$0xff]
        %v2369 = vld [vmem:[#allocation13 + $0xa88] sm:$0xff]
        %v2370 = vld [vmem:[#allocation13 + $0xa90] sm:$0xff]
        %v2371 = vld [vmem:[#allocation13 + $0xa98] sm:$0xff]
        %v2372 = vld [vmem:[#allocation13 + $0xaa0] sm:$0xff]
        %v2373 = vld [vmem:[#allocation13 + $0xaa8] sm:$0xff]
        %v2374 = vld [vmem:[#allocation13 + $0xab0] sm:$0xff]
        %v2375 = vld [vmem:[#allocation13 + $0xab8] sm:$0xff]
        %v2376 = vld [vmem:[#allocation13 + $0xac0] sm:$0xff]
        %v2377 = vld [vmem:[#allocation13 + $0xac8] sm:$0xff]
        %v2378 = vld [vmem:[#allocation13 + $0xad0] sm:$0xff]
        %v2379 = vld [vmem:[#allocation13 + $0xad8] sm:$0xff]
        %v2380 = vld [vmem:[#allocation13 + $0xae0] sm:$0xff]
        %v2381 = vld [vmem:[#allocation13 + $0xae8] sm:$0xff]
        %v2382 = vld [vmem:[#allocation13 + $0xaf0] sm:$0xff]
        %v2383 = vld [vmem:[#allocation13 + $0xaf8] sm:$0xff]
        %v2384 = vld [vmem:[#allocation13 + $0xb00] sm:$0xff]
        %v2385 = vld [vmem:[#allocation13 + $0xb08] sm:$0xff]
        %v2386 = vld [vmem:[#allocation13 + $0xb10] sm:$0xff]
        %v2387 = vld [vmem:[#allocation13 + $0xb18] sm:$0xff]
        %v2388 = vld [vmem:[#allocation13 + $0xb20] sm:$0xff]
        %v2389 = vld [vmem:[#allocation13 + $0xb28] sm:$0xff]
        %v2390 = vld [vmem:[#allocation13 + $0xb30] sm:$0xff]
        %v2391 = vld [vmem:[#allocation13 + $0xb38] sm:$0xff]
        %v2392 = vld [vmem:[#allocation13 + $0xb40] sm:$0xff]
        %v2393 = vld [vmem:[#allocation13 + $0xb48] sm:$0xff]
        %v2394 = vld [vmem:[#allocation13 + $0xb50] sm:$0xff]
        %v2395 = vld [vmem:[#allocation13 + $0xb58] sm:$0xff]
        %v2396 = vld [vmem:[#allocation13 + $0xb60] sm:$0xff]
        %v2397 = vld [vmem:[#allocation13 + $0xb68] sm:$0xff]
        %v2398 = vld [vmem:[#allocation13 + $0xb70] sm:$0xff]
        %v2399 = vld [vmem:[#allocation13 + $0xb78] sm:$0xff]
        %v2400 = vld [vmem:[#allocation13 + $0xb80] sm:$0xff]
        %v2401 = vld [vmem:[#allocation13 + $0xb88] sm:$0xff]
        %v2402 = vld [vmem:[#allocation13 + $0xb90] sm:$0xff]
        %v2403 = vld [vmem:[#allocation13 + $0xb98] sm:$0xff]
        %v2404 = vld [vmem:[#allocation13 + $0xba0] sm:$0xff]
        %v2405 = vld [vmem:[#allocation13 + $0xba8] sm:$0xff]
        %v2406 = vld [vmem:[#allocation13 + $0xbb0] sm:$0xff]
        %v2407 = vld [vmem:[#allocation13 + $0xbb8] sm:$0xff]
        %v2408 = vld [vmem:[#allocation13 + $0xbc0] sm:$0xff]
        %v2409 = vld [vmem:[#allocation13 + $0xbc8] sm:$0xff]
        %v2410 = vld [vmem:[#allocation13 + $0xbd0] sm:$0xff]
        %v2411 = vld [vmem:[#allocation13 + $0xbd8] sm:$0xff]
        %v2412 = vld [vmem:[#allocation13 + $0xbe0] sm:$0xff]
        %v2413 = vld [vmem:[#allocation13 + $0xbe8] sm:$0xff]
        %v2414 = vld [vmem:[#allocation13 + $0xbf0] sm:$0xff]
        %v2415 = vld [vmem:[#allocation13 + $0xbf8] sm:$0xff]
        %v2416 = vld [vmem:[#allocation13 + $0xc00] sm:$0xff]
        %v2417 = vld [vmem:[#allocation13 + $0xc08] sm:$0xff]
        %v2418 = vld [vmem:[#allocation13 + $0xc10] sm:$0xff]
        %v2419 = vld [vmem:[#allocation13 + $0xc18] sm:$0xff]
        %v2420 = vld [vmem:[#allocation13 + $0xc20] sm:$0xff]
        %v2421 = vld [vmem:[#allocation13 + $0xc28] sm:$0xff]
        %v2422 = vld [vmem:[#allocation13 + $0xc30] sm:$0xff]
        %v2423 = vld [vmem:[#allocation13 + $0xc38] sm:$0xff]
        %v2424 = vld [vmem:[#allocation13 + $0xc40] sm:$0xff]
        %v2425 = vld [vmem:[#allocation13 + $0xc48] sm:$0xff]
        %v2426 = vld [vmem:[#allocation13 + $0xc50] sm:$0xff]
        %v2427 = vld [vmem:[#allocation13 + $0xc58] sm:$0xff]
        %v2428 = vld [vmem:[#allocation13 + $0xc60] sm:$0xff]
        %v2429 = vld [vmem:[#allocation13 + $0xc68] sm:$0xff]
        %v2430 = vld [vmem:[#allocation13 + $0xc70] sm:$0xff]
        %v2431 = vld [vmem:[#allocation13 + $0xc78] sm:$0xff]
        %v2432 = vld [vmem:[#allocation13 + $0xc80] sm:$0xff]
        %v2433 = vld [vmem:[#allocation13 + $0xc88] sm:$0xff]
        %v2434 = vld [vmem:[#allocation13 + $0xc90] sm:$0xff]
        %v2435 = vld [vmem:[#allocation13 + $0xc98] sm:$0xff]
        %v2436 = vld [vmem:[#allocation13 + $0xca0] sm:$0xff]
        %v2437 = vld [vmem:[#allocation13 + $0xca8] sm:$0xff]
        %v2438 = vld [vmem:[#allocation13 + $0xcb0] sm:$0xff]
        %v2439 = vld [vmem:[#allocation13 + $0xcb8] sm:$0xff]
        %v2440 = vld [vmem:[#allocation13 + $0xcc0] sm:$0xff]
        %v2441 = vld [vmem:[#allocation13 + $0xcc8] sm:$0xff]
        %v2442 = vld [vmem:[#allocation13 + $0xcd0] sm:$0xff]
        %v2443 = vld [vmem:[#allocation13 + $0xcd8] sm:$0xff]
        %v2444 = vld [vmem:[#allocation13 + $0xce0] sm:$0xff]
        %v2445 = vld [vmem:[#allocation13 + $0xce8] sm:$0xff]
        %v2446 = vld [vmem:[#allocation13 + $0xcf0] sm:$0xff]
        %v2447 = vld [vmem:[#allocation13 + $0xcf8] sm:$0xff]
        %v2448 = vld [vmem:[#allocation13 + $0xd00] sm:$0xff]
        %v2449 = vld [vmem:[#allocation13 + $0xd08] sm:$0xff]
        %v2450 = vld [vmem:[#allocation13 + $0xd10] sm:$0xff]
        %v2451 = vld [vmem:[#allocation13 + $0xd18] sm:$0xff]
        %v2452 = vld [vmem:[#allocation13 + $0xd20] sm:$0xff]
        %v2453 = vld [vmem:[#allocation13 + $0xd28] sm:$0xff]
        %v2454 = vld [vmem:[#allocation13 + $0xd30] sm:$0xff]
        %v2455 = vld [vmem:[#allocation13 + $0xd38] sm:$0xff]
        %v2456 = vld [vmem:[#allocation13 + $0xd40] sm:$0xff]
        %v2457 = vld [vmem:[#allocation13 + $0xd48] sm:$0xff]
        %v2458 = vld [vmem:[#allocation13 + $0xd50] sm:$0xff]
        %v2459 = vld [vmem:[#allocation13 + $0xd58] sm:$0xff]
        %v2460 = vld [vmem:[#allocation13 + $0xd60] sm:$0xff]
        %v2461 = vld [vmem:[#allocation13 + $0xd68] sm:$0xff]
        %v2462 = vld [vmem:[#allocation13 + $0xd70] sm:$0xff]
        %v2463 = vld [vmem:[#allocation13 + $0xd78] sm:$0xff]
        %v2464 = vld [vmem:[#allocation13 + $0xd80] sm:$0xff]
        %v2465 = vld [vmem:[#allocation13 + $0xd88] sm:$0xff]
        %v2466 = vld [vmem:[#allocation13 + $0xd90] sm:$0xff]
        %v2467 = vld [vmem:[#allocation13 + $0xd98] sm:$0xff]
        %v2468 = vld [vmem:[#allocation13 + $0xda0] sm:$0xff]
        %v2469 = vld [vmem:[#allocation13 + $0xda8] sm:$0xff]
        %v2470 = vld [vmem:[#allocation13 + $0xdb0] sm:$0xff]
        %v2471 = vld [vmem:[#allocation13 + $0xdb8] sm:$0xff]
        %v2472 = vld [vmem:[#allocation13 + $0xdc0] sm:$0xff]
        %v2473 = vld [vmem:[#allocation13 + $0xdc8] sm:$0xff]
        %v2474 = vld [vmem:[#allocation13 + $0xdd0] sm:$0xff]
        %v2475 = vld [vmem:[#allocation13 + $0xdd8] sm:$0xff]
        %v2476 = vld [vmem:[#allocation13 + $0xde0] sm:$0xff]
        %v2477 = vld [vmem:[#allocation13 + $0xde8] sm:$0xff]
        %v2478 = vld [vmem:[#allocation13 + $0xdf0] sm:$0xff]
        %v2479 = vld [vmem:[#allocation13 + $0xdf8] sm:$0xff]
        %v2480 = vld [vmem:[#allocation13 + $0xe00] sm:$0xff]
        %v2481 = vld [vmem:[#allocation13 + $0xe08] sm:$0xff]
        %v2482 = vld [vmem:[#allocation13 + $0xe10] sm:$0xff]
        %v2483 = vld [vmem:[#allocation13 + $0xe18] sm:$0xff]
        %v2484 = vld [vmem:[#allocation13 + $0xe20] sm:$0xff]
        %v2485 = vld [vmem:[#allocation13 + $0xe28] sm:$0xff]
        %v2486 = vld [vmem:[#allocation13 + $0xe30] sm:$0xff]
        %v2487 = vld [vmem:[#allocation13 + $0xe38] sm:$0xff]
        %v2488 = vld [vmem:[#allocation13 + $0xe40] sm:$0xff]
        %v2489 = vld [vmem:[#allocation13 + $0xe48] sm:$0xff]
        %v2490 = vld [vmem:[#allocation13 + $0xe50] sm:$0xff]
        %v2491 = vld [vmem:[#allocation13 + $0xe58] sm:$0xff]
        %v2492 = vld [vmem:[#allocation13 + $0xe60] sm:$0xff]
        %v2493 = vld [vmem:[#allocation13 + $0xe68] sm:$0xff]
        %v2494 = vld [vmem:[#allocation13 + $0xe70] sm:$0xff]
        %v2495 = vld [vmem:[#allocation13 + $0xe78] sm:$0xff]
        %v2496 = vld [vmem:[#allocation13 + $0xe80] sm:$0xff]
        %v2497 = vld [vmem:[#allocation13 + $0xe88] sm:$0xff]
        %v2498 = vld [vmem:[#allocation13 + $0xe90] sm:$0xff]
        %v2499 = vld [vmem:[#allocation13 + $0xe98] sm:$0xff]
        %v2500 = vld [vmem:[#allocation13 + $0xea0] sm:$0xff]
        %v2501 = vld [vmem:[#allocation13 + $0xea8] sm:$0xff]
        %v2502 = vld [vmem:[#allocation13 + $0xeb0] sm:$0xff]
        %v2503 = vld [vmem:[#allocation13 + $0xeb8] sm:$0xff]
        %v2504 = vld [vmem:[#allocation13 + $0xec0] sm:$0xff]
        %v2505 = vld [vmem:[#allocation13 + $0xec8] sm:$0xff]
        %v2506 = vld [vmem:[#allocation13 + $0xed0] sm:$0xff]
        %v2507 = vld [vmem:[#allocation13 + $0xed8] sm:$0xff]
        %v2508 = vld [vmem:[#allocation13 + $0xee0] sm:$0xff]
        %v2509 = vld [vmem:[#allocation13 + $0xee8] sm:$0xff]
        %v2510 = vld [vmem:[#allocation13 + $0xef0] sm:$0xff]
        %v2511 = vld [vmem:[#allocation13 + $0xef8] sm:$0xff]
        %v2512 = vld [vmem:[#allocation13 + $0xf00] sm:$0xff]
        %v2513 = vld [vmem:[#allocation13 + $0xf08] sm:$0xff]
        %v2514 = vld [vmem:[#allocation13 + $0xf10] sm:$0xff]
        %v2515 = vld [vmem:[#allocation13 + $0xf18] sm:$0xff]
        %v2516 = vld [vmem:[#allocation13 + $0xf20] sm:$0xff]
        %v2517 = vld [vmem:[#allocation13 + $0xf28] sm:$0xff]
        %v2518 = vld [vmem:[#allocation13 + $0xf30] sm:$0xff]
        %v2519 = vld [vmem:[#allocation13 + $0xf38] sm:$0xff]
        %v2520 = vld [vmem:[#allocation13 + $0xf40] sm:$0xff]
        %v2521 = vld [vmem:[#allocation13 + $0xf48] sm:$0xff]
        %v2522 = vld [vmem:[#allocation13 + $0xf50] sm:$0xff]
        %v2523 = vld [vmem:[#allocation13 + $0xf58] sm:$0xff]
        %v2524 = vld [vmem:[#allocation13 + $0xf60] sm:$0xff]
        %v2525 = vld [vmem:[#allocation13 + $0xf68] sm:$0xff]
        %v2526 = vld [vmem:[#allocation13 + $0xf70] sm:$0xff]
        %v2527 = vld [vmem:[#allocation13 + $0xf78] sm:$0xff]
        %v2528 = vld [vmem:[#allocation13 + $0xf80] sm:$0xff]
        %v2529 = vld [vmem:[#allocation13 + $0xf88] sm:$0xff]
        %v2530 = vld [vmem:[#allocation13 + $0xf90] sm:$0xff]
        %v2531 = vld [vmem:[#allocation13 + $0xf98] sm:$0xff]
        %v2532 = vld [vmem:[#allocation13 + $0xfa0] sm:$0xff]
        %v2533 = vld [vmem:[#allocation13 + $0xfa8] sm:$0xff]
        %v2534 = vld [vmem:[#allocation13 + $0xfb0] sm:$0xff]
        %v2535 = vld [vmem:[#allocation13 + $0xfb8] sm:$0xff]
        %v2536 = vld [vmem:[#allocation13 + $0xfc0] sm:$0xff]
        %v2537 = vld [vmem:[#allocation13 + $0xfc8] sm:$0xff]
        %v2538 = vld [vmem:[#allocation13 + $0xfd0] sm:$0xff]
        %v2539 = vld [vmem:[#allocation13 + $0xfd8] sm:$0xff]
        %v2540 = vld [vmem:[#allocation13 + $0xfe0] sm:$0xff]
        %v2541 = vld [vmem:[#allocation13 + $0xfe8] sm:$0xff]
        %v2542 = vld [vmem:[#allocation13 + $0xff0] sm:$0xff]
        %v2543 = vld [vmem:[#allocation13 + $0xff8] sm:$0xff]
        %v2544 = vld [vmem:[#allocation15] sm:$0x1]
        %v2549 = vperm.slane %v2028, 0
        %v2550 = vperm.slane %v2028, 1
        %v2551 = vperm.slane %v2028, 2
        %v2552 = vperm.slane %v2028, 3
        %v2553 = vperm.slane %v2028, 4
        %v2554 = vperm.slane %v2028, 5
        %v2555 = vperm.slane %v2028, 6
        %v2556 = vperm.slane %v2028, 7
        %v2557 = vperm.slane %v2029, 0
        %v2558 = vperm.slane %v2029, 1
        %v2559 = vperm.slane %v2029, 2
        %v2560 = vperm.slane %v2029, 3
        %v2561 = vperm.slane %v2029, 4
        %v2562 = vperm.slane %v2029, 5
        %v2563 = vperm.slane %v2029, 6
        %v2564 = vperm.slane %v2029, 7
        %v2565 = vperm.slane %v2030, 0
        %v2566 = vperm.slane %v2030, 1
        %v2567 = vperm.slane %v2030, 2
        %v2568 = vperm.slane %v2030, 3
        %v2569 = vperm.slane %v2030, 4
        %v2570 = vperm.slane %v2030, 5
        %v2571 = vperm.slane %v2030, 6
        %v2572 = vperm.slane %v2030, 7
        %v2573 = vperm.slane %v2031, 0
        %v2574 = vperm.slane %v2031, 1
        %v2575 = vperm.slane %v2031, 2
        %v2576 = vperm.slane %v2031, 3
        %v2577 = vperm.slane %v2031, 4
        %v2578 = vperm.slane %v2031, 5
        %v2579 = vperm.slane %v2031, 6
        %v2580 = vperm.slane %v2031, 7
        %2613 = vmatpush.msra.mxu0 %v2047
        %2614 = vmatpush.msra.mxu0 %v2046
        %2615 = vmatpush.msra.mxu0 %v2045
        %2616 = vmatpush.msra.mxu0 %v2044
        %2617 = vmatpush.msra.mxu0 %v2043
        %2618 = vmatpush.msra.mxu0 %v2042
        %2619 = vmatpush.msra.mxu0 %v2041
        %2620 = vmatpush.msra.mxu0 %v2040
        %2621 = vmatpush.msra.mxu0 %v2039
        %2622 = vmatpush.msra.mxu0 %v2038
        %2623 = vmatpush.msra.mxu0 %v2037
        %2624 = vmatpush.msra.mxu0 %v2036
        %2625 = vmatpush.msra.mxu0 %v2035
        %2626 = vmatpush.msra.mxu0 %v2034
        %2627 = vmatpush.msra.mxu0 %v2033
        %2628 = vmatpush.msra.mxu0 %v2032
        %2629 = vmatmul.f32.gmra.mxu0 %v2549
        %v2630 = vpop.f32.mrf.mxu0
        %v2631 = vadd.f32 %v2544, %v2630
        %2632 = vdwg.mxu0
        %2633 = vmatpush.msra.mxu0 %v2063
        %2634 = vmatpush.msra.mxu0 %v2062
        %2635 = vmatpush.msra.mxu0 %v2061
        %2636 = vmatpush.msra.mxu0 %v2060
        %2637 = vmatpush.msra.mxu0 %v2059
        %2638 = vmatpush.msra.mxu0 %v2058
        %2639 = vmatpush.msra.mxu0 %v2057
        %2640 = vmatpush.msra.mxu0 %v2056
        %2641 = vmatpush.msra.mxu0 %v2055
        %2642 = vmatpush.msra.mxu0 %v2054
        %2643 = vmatpush.msra.mxu0 %v2053
        %2644 = vmatpush.msra.mxu0 %v2052
        %2645 = vmatpush.msra.mxu0 %v2051
        %2646 = vmatpush.msra.mxu0 %v2050
        %2647 = vmatpush.msra.mxu0 %v2049
        %2648 = vmatpush.msra.mxu0 %v2048
        %2649 = vmatmul.f32.gmra.mxu0 %v2550
        %v2650 = vpop.f32.mrf.mxu0
        %v2651 = vadd.f32 %v2631, %v2650
        %2652 = vdwg.mxu0
        %2653 = vmatpush.msra.mxu0 %v2079
        %2654 = vmatpush.msra.mxu0 %v2078
        %2655 = vmatpush.msra.mxu0 %v2077
        %2656 = vmatpush.msra.mxu0 %v2076
        %2657 = vmatpush.msra.mxu0 %v2075
        %2658 = vmatpush.msra.mxu0 %v2074
        %2659 = vmatpush.msra.mxu0 %v2073
        %2660 = vmatpush.msra.mxu0 %v2072
        %2661 = vmatpush.msra.mxu0 %v2071
        %2662 = vmatpush.msra.mxu0 %v2070
        %2663 = vmatpush.msra.mxu0 %v2069
        %2664 = vmatpush.msra.mxu0 %v2068
        %2665 = vmatpush.msra.mxu0 %v2067
        %2666 = vmatpush.msra.mxu0 %v2066
        %2667 = vmatpush.msra.mxu0 %v2065
        %2668 = vmatpush.msra.mxu0 %v2064
        %2669 = vmatmul.f32.gmra.mxu0 %v2551
        %v2670 = vpop.f32.mrf.mxu0
        %v2671 = vadd.f32 %v2651, %v2670
        %2672 = vdwg.mxu0
        %2673 = vmatpush.msra.mxu0 %v2095
        %2674 = vmatpush.msra.mxu0 %v2094
        %2675 = vmatpush.msra.mxu0 %v2093
        %2676 = vmatpush.msra.mxu0 %v2092
        %2677 = vmatpush.msra.mxu0 %v2091
        %2678 = vmatpush.msra.mxu0 %v2090
        %2679 = vmatpush.msra.mxu0 %v2089
        %2680 = vmatpush.msra.mxu0 %v2088
        %2681 = vmatpush.msra.mxu0 %v2087
        %2682 = vmatpush.msra.mxu0 %v2086
        %2683 = vmatpush.msra.mxu0 %v2085
        %2684 = vmatpush.msra.mxu0 %v2084
        %2685 = vmatpush.msra.mxu0 %v2083
        %2686 = vmatpush.msra.mxu0 %v2082
        %2687 = vmatpush.msra.mxu0 %v2081
        %2688 = vmatpush.msra.mxu0 %v2080
        %2689 = vmatmul.f32.gmra.mxu0 %v2552
        %v2690 = vpop.f32.mrf.mxu0
        %v2691 = vadd.f32 %v2671, %v2690
        %2692 = vdwg.mxu0
        %2693 = vmatpush.msra.mxu0 %v2111
        %2694 = vmatpush.msra.mxu0 %v2110
        %2695 = vmatpush.msra.mxu0 %v2109
        %2696 = vmatpush.msra.mxu0 %v2108
        %2697 = vmatpush.msra.mxu0 %v2107
        %2698 = vmatpush.msra.mxu0 %v2106
        %2699 = vmatpush.msra.mxu0 %v2105
        %2700 = vmatpush.msra.mxu0 %v2104
        %2701 = vmatpush.msra.mxu0 %v2103
        %2702 = vmatpush.msra.mxu0 %v2102
        %2703 = vmatpush.msra.mxu0 %v2101
        %2704 = vmatpush.msra.mxu0 %v2100
        %2705 = vmatpush.msra.mxu0 %v2099
        %2706 = vmatpush.msra.mxu0 %v2098
        %2707 = vmatpush.msra.mxu0 %v2097
        %2708 = vmatpush.msra.mxu0 %v2096
        %2709 = vmatmul.f32.gmra.mxu0 %v2553
        %v2710 = vpop.f32.mrf.mxu0
        %v2711 = vadd.f32 %v2691, %v2710
        %2712 = vdwg.mxu0
        %2713 = vmatpush.msra.mxu0 %v2127
        %2714 = vmatpush.msra.mxu0 %v2126
        %2715 = vmatpush.msra.mxu0 %v2125
        %2716 = vmatpush.msra.mxu0 %v2124
        %2717 = vmatpush.msra.mxu0 %v2123
        %2718 = vmatpush.msra.mxu0 %v2122
        %2719 = vmatpush.msra.mxu0 %v2121
        %2720 = vmatpush.msra.mxu0 %v2120
        %2721 = vmatpush.msra.mxu0 %v2119
        %2722 = vmatpush.msra.mxu0 %v2118
        %2723 = vmatpush.msra.mxu0 %v2117
        %2724 = vmatpush.msra.mxu0 %v2116
        %2725 = vmatpush.msra.mxu0 %v2115
        %2726 = vmatpush.msra.mxu0 %v2114
        %2727 = vmatpush.msra.mxu0 %v2113
        %2728 = vmatpush.msra.mxu0 %v2112
        %2729 = vmatmul.f32.gmra.mxu0 %v2554
        %v2730 = vpop.f32.mrf.mxu0
        %v2731 = vadd.f32 %v2711, %v2730
        %2732 = vdwg.mxu0
        %2733 = vmatpush.msra.mxu0 %v2143
        %2734 = vmatpush.msra.mxu0 %v2142
        %2735 = vmatpush.msra.mxu0 %v2141
        %2736 = vmatpush.msra.mxu0 %v2140
        %2737 = vmatpush.msra.mxu0 %v2139
        %2738 = vmatpush.msra.mxu0 %v2138
        %2739 = vmatpush.msra.mxu0 %v2137
        %2740 = vmatpush.msra.mxu0 %v2136
        %2741 = vmatpush.msra.mxu0 %v2135
        %2742 = vmatpush.msra.mxu0 %v2134
        %2743 = vmatpush.msra.mxu0 %v2133
        %2744 = vmatpush.msra.mxu0 %v2132
        %2745 = vmatpush.msra.mxu0 %v2131
        %2746 = vmatpush.msra.mxu0 %v2130
        %2747 = vmatpush.msra.mxu0 %v2129
        %2748 = vmatpush.msra.mxu0 %v2128
        %2749 = vmatmul.f32.gmra.mxu0 %v2555
        %v2750 = vpop.f32.mrf.mxu0
        %v2751 = vadd.f32 %v2731, %v2750
        %2752 = vdwg.mxu0
        %2753 = vmatpush.msra.mxu0 %v2159
        %2754 = vmatpush.msra.mxu0 %v2158
        %2755 = vmatpush.msra.mxu0 %v2157
        %2756 = vmatpush.msra.mxu0 %v2156
        %2757 = vmatpush.msra.mxu0 %v2155
        %2758 = vmatpush.msra.mxu0 %v2154
        %2759 = vmatpush.msra.mxu0 %v2153
        %2760 = vmatpush.msra.mxu0 %v2152
        %2761 = vmatpush.msra.mxu0 %v2151
        %2762 = vmatpush.msra.mxu0 %v2150
        %2763 = vmatpush.msra.mxu0 %v2149
        %2764 = vmatpush.msra.mxu0 %v2148
        %2765 = vmatpush.msra.mxu0 %v2147
        %2766 = vmatpush.msra.mxu0 %v2146
        %2767 = vmatpush.msra.mxu0 %v2145
        %2768 = vmatpush.msra.mxu0 %v2144
        %2769 = vmatmul.f32.gmra.mxu0 %v2556
        %v2770 = vpop.f32.mrf.mxu0
        %v2771 = vadd.f32 %v2751, %v2770
        %2772 = vdwg.mxu0
        %2773 = vmatpush.msra.mxu0 %v2175
        %2774 = vmatpush.msra.mxu0 %v2174
        %2775 = vmatpush.msra.mxu0 %v2173
        %2776 = vmatpush.msra.mxu0 %v2172
        %2777 = vmatpush.msra.mxu0 %v2171
        %2778 = vmatpush.msra.mxu0 %v2170
        %2779 = vmatpush.msra.mxu0 %v2169
        %2780 = vmatpush.msra.mxu0 %v2168
        %2781 = vmatpush.msra.mxu0 %v2167
        %2782 = vmatpush.msra.mxu0 %v2166
        %2783 = vmatpush.msra.mxu0 %v2165
        %2784 = vmatpush.msra.mxu0 %v2164
        %2785 = vmatpush.msra.mxu0 %v2163
        %2786 = vmatpush.msra.mxu0 %v2162
        %2787 = vmatpush.msra.mxu0 %v2161
        %2788 = vmatpush.msra.mxu0 %v2160
        %2789 = vmatmul.f32.gmra.mxu0 %v2557
        %v2790 = vpop.f32.mrf.mxu0
        %v2791 = vadd.f32 %v2771, %v2790
        %2792 = vdwg.mxu0
        %2793 = vmatpush.msra.mxu0 %v2191
        %2794 = vmatpush.msra.mxu0 %v2190
        %2795 = vmatpush.msra.mxu0 %v2189
        %2796 = vmatpush.msra.mxu0 %v2188
        %2797 = vmatpush.msra.mxu0 %v2187
        %2798 = vmatpush.msra.mxu0 %v2186
        %2799 = vmatpush.msra.mxu0 %v2185
        %2800 = vmatpush.msra.mxu0 %v2184
        %2801 = vmatpush.msra.mxu0 %v2183
        %2802 = vmatpush.msra.mxu0 %v2182
        %2803 = vmatpush.msra.mxu0 %v2181
        %2804 = vmatpush.msra.mxu0 %v2180
        %2805 = vmatpush.msra.mxu0 %v2179
        %2806 = vmatpush.msra.mxu0 %v2178
        %2807 = vmatpush.msra.mxu0 %v2177
        %2808 = vmatpush.msra.mxu0 %v2176
        %2809 = vmatmul.f32.gmra.mxu0 %v2558
        %v2810 = vpop.f32.mrf.mxu0
        %v2811 = vadd.f32 %v2791, %v2810
        %2812 = vdwg.mxu0
        %2813 = vmatpush.msra.mxu0 %v2207
        %2814 = vmatpush.msra.mxu0 %v2206
        %2815 = vmatpush.msra.mxu0 %v2205
        %2816 = vmatpush.msra.mxu0 %v2204
        %2817 = vmatpush.msra.mxu0 %v2203
        %2818 = vmatpush.msra.mxu0 %v2202
        %2819 = vmatpush.msra.mxu0 %v2201
        %2820 = vmatpush.msra.mxu0 %v2200
        %2821 = vmatpush.msra.mxu0 %v2199
        %2822 = vmatpush.msra.mxu0 %v2198
        %2823 = vmatpush.msra.mxu0 %v2197
        %2824 = vmatpush.msra.mxu0 %v2196
        %2825 = vmatpush.msra.mxu0 %v2195
        %2826 = vmatpush.msra.mxu0 %v2194
        %2827 = vmatpush.msra.mxu0 %v2193
        %2828 = vmatpush.msra.mxu0 %v2192
        %2829 = vmatmul.f32.gmra.mxu0 %v2559
        %v2830 = vpop.f32.mrf.mxu0
        %v2831 = vadd.f32 %v2811, %v2830
        %2832 = vdwg.mxu0
        %2833 = vmatpush.msra.mxu0 %v2223
        %2834 = vmatpush.msra.mxu0 %v2222
        %2835 = vmatpush.msra.mxu0 %v2221
        %2836 = vmatpush.msra.mxu0 %v2220
        %2837 = vmatpush.msra.mxu0 %v2219
        %2838 = vmatpush.msra.mxu0 %v2218
        %2839 = vmatpush.msra.mxu0 %v2217
        %2840 = vmatpush.msra.mxu0 %v2216
        %2841 = vmatpush.msra.mxu0 %v2215
        %2842 = vmatpush.msra.mxu0 %v2214
        %2843 = vmatpush.msra.mxu0 %v2213
        %2844 = vmatpush.msra.mxu0 %v2212
        %2845 = vmatpush.msra.mxu0 %v2211
        %2846 = vmatpush.msra.mxu0 %v2210
        %2847 = vmatpush.msra.mxu0 %v2209
        %2848 = vmatpush.msra.mxu0 %v2208
        %2849 = vmatmul.f32.gmra.mxu0 %v2560
        %v2850 = vpop.f32.mrf.mxu0
        %v2851 = vadd.f32 %v2831, %v2850
        %2852 = vdwg.mxu0
        %2853 = vmatpush.msra.mxu0 %v2239
        %2854 = vmatpush.msra.mxu0 %v2238
        %2855 = vmatpush.msra.mxu0 %v2237
        %2856 = vmatpush.msra.mxu0 %v2236
        %2857 = vmatpush.msra.mxu0 %v2235
        %2858 = vmatpush.msra.mxu0 %v2234
        %2859 = vmatpush.msra.mxu0 %v2233
        %2860 = vmatpush.msra.mxu0 %v2232
        %2861 = vmatpush.msra.mxu0 %v2231
        %2862 = vmatpush.msra.mxu0 %v2230
        %2863 = vmatpush.msra.mxu0 %v2229
        %2864 = vmatpush.msra.mxu0 %v2228
        %2865 = vmatpush.msra.mxu0 %v2227
        %2866 = vmatpush.msra.mxu0 %v2226
        %2867 = vmatpush.msra.mxu0 %v2225
        %2868 = vmatpush.msra.mxu0 %v2224
        %2869 = vmatmul.f32.gmra.mxu0 %v2561
        %v2870 = vpop.f32.mrf.mxu0
        %v2871 = vadd.f32 %v2851, %v2870
        %2872 = vdwg.mxu0
        %2873 = vmatpush.msra.mxu0 %v2255
        %2874 = vmatpush.msra.mxu0 %v2254
        %2875 = vmatpush.msra.mxu0 %v2253
        %2876 = vmatpush.msra.mxu0 %v2252
        %2877 = vmatpush.msra.mxu0 %v2251
        %2878 = vmatpush.msra.mxu0 %v2250
        %2879 = vmatpush.msra.mxu0 %v2249
        %2880 = vmatpush.msra.mxu0 %v2248
        %2881 = vmatpush.msra.mxu0 %v2247
        %2882 = vmatpush.msra.mxu0 %v2246
        %2883 = vmatpush.msra.mxu0 %v2245
        %2884 = vmatpush.msra.mxu0 %v2244
        %2885 = vmatpush.msra.mxu0 %v2243
        %2886 = vmatpush.msra.mxu0 %v2242
        %2887 = vmatpush.msra.mxu0 %v2241
        %2888 = vmatpush.msra.mxu0 %v2240
        %2889 = vmatmul.f32.gmra.mxu0 %v2562
        %v2890 = vpop.f32.mrf.mxu0
        %v2891 = vadd.f32 %v2871, %v2890
        %2892 = vdwg.mxu0
        %2893 = vmatpush.msra.mxu0 %v2271
        %2894 = vmatpush.msra.mxu0 %v2270
        %2895 = vmatpush.msra.mxu0 %v2269
        %2896 = vmatpush.msra.mxu0 %v2268
        %2897 = vmatpush.msra.mxu0 %v2267
        %2898 = vmatpush.msra.mxu0 %v2266
        %2899 = vmatpush.msra.mxu0 %v2265
        %2900 = vmatpush.msra.mxu0 %v2264
        %2901 = vmatpush.msra.mxu0 %v2263
        %2902 = vmatpush.msra.mxu0 %v2262
        %2903 = vmatpush.msra.mxu0 %v2261
        %2904 = vmatpush.msra.mxu0 %v2260
        %2905 = vmatpush.msra.mxu0 %v2259
        %2906 = vmatpush.msra.mxu0 %v2258
        %2907 = vmatpush.msra.mxu0 %v2257
        %2908 = vmatpush.msra.mxu0 %v2256
        %2909 = vmatmul.f32.gmra.mxu0 %v2563
        %v2910 = vpop.f32.mrf.mxu0
        %v2911 = vadd.f32 %v2891, %v2910
        %2912 = vdwg.mxu0
        %2913 = vmatpush.msra.mxu0 %v2287
        %2914 = vmatpush.msra.mxu0 %v2286
        %2915 = vmatpush.msra.mxu0 %v2285
        %2916 = vmatpush.msra.mxu0 %v2284
        %2917 = vmatpush.msra.mxu0 %v2283
        %2918 = vmatpush.msra.mxu0 %v2282
        %2919 = vmatpush.msra.mxu0 %v2281
        %2920 = vmatpush.msra.mxu0 %v2280
        %2921 = vmatpush.msra.mxu0 %v2279
        %2922 = vmatpush.msra.mxu0 %v2278
        %2923 = vmatpush.msra.mxu0 %v2277
        %2924 = vmatpush.msra.mxu0 %v2276
        %2925 = vmatpush.msra.mxu0 %v2275
        %2926 = vmatpush.msra.mxu0 %v2274
        %2927 = vmatpush.msra.mxu0 %v2273
        %2928 = vmatpush.msra.mxu0 %v2272
        %2929 = vmatmul.f32.gmra.mxu0 %v2564
        %v2930 = vpop.f32.mrf.mxu0
        %v2931 = vadd.f32 %v2911, %v2930
        %2932 = vdwg.mxu0
        %2933 = vmatpush.msra.mxu0 %v2303
        %2934 = vmatpush.msra.mxu0 %v2302
        %2935 = vmatpush.msra.mxu0 %v2301
        %2936 = vmatpush.msra.mxu0 %v2300
        %2937 = vmatpush.msra.mxu0 %v2299
        %2938 = vmatpush.msra.mxu0 %v2298
        %2939 = vmatpush.msra.mxu0 %v2297
        %2940 = vmatpush.msra.mxu0 %v2296
        %2941 = vmatpush.msra.mxu0 %v2295
        %2942 = vmatpush.msra.mxu0 %v2294
        %2943 = vmatpush.msra.mxu0 %v2293
        %2944 = vmatpush.msra.mxu0 %v2292
        %2945 = vmatpush.msra.mxu0 %v2291
        %2946 = vmatpush.msra.mxu0 %v2290
        %2947 = vmatpush.msra.mxu0 %v2289
        %2948 = vmatpush.msra.mxu0 %v2288
        %2949 = vmatmul.f32.gmra.mxu0 %v2565
        %v2950 = vpop.f32.mrf.mxu0
        %v2951 = vadd.f32 %v2931, %v2950
        %2952 = vdwg.mxu0
        %2953 = vmatpush.msra.mxu0 %v2319
        %2954 = vmatpush.msra.mxu0 %v2318
        %2955 = vmatpush.msra.mxu0 %v2317
        %2956 = vmatpush.msra.mxu0 %v2316
        %2957 = vmatpush.msra.mxu0 %v2315
        %2958 = vmatpush.msra.mxu0 %v2314
        %2959 = vmatpush.msra.mxu0 %v2313
        %2960 = vmatpush.msra.mxu0 %v2312
        %2961 = vmatpush.msra.mxu0 %v2311
        %2962 = vmatpush.msra.mxu0 %v2310
        %2963 = vmatpush.msra.mxu0 %v2309
        %2964 = vmatpush.msra.mxu0 %v2308
        %2965 = vmatpush.msra.mxu0 %v2307
        %2966 = vmatpush.msra.mxu0 %v2306
        %2967 = vmatpush.msra.mxu0 %v2305
        %2968 = vmatpush.msra.mxu0 %v2304
        %2969 = vmatmul.f32.gmra.mxu0 %v2566
        %v2970 = vpop.f32.mrf.mxu0
        %v2971 = vadd.f32 %v2951, %v2970
        %2972 = vdwg.mxu0
        %2973 = vmatpush.msra.mxu0 %v2335
        %2974 = vmatpush.msra.mxu0 %v2334
        %2975 = vmatpush.msra.mxu0 %v2333
        %2976 = vmatpush.msra.mxu0 %v2332
        %2977 = vmatpush.msra.mxu0 %v2331
        %2978 = vmatpush.msra.mxu0 %v2330
        %2979 = vmatpush.msra.mxu0 %v2329
        %2980 = vmatpush.msra.mxu0 %v2328
        %2981 = vmatpush.msra.mxu0 %v2327
        %2982 = vmatpush.msra.mxu0 %v2326
        %2983 = vmatpush.msra.mxu0 %v2325
        %2984 = vmatpush.msra.mxu0 %v2324
        %2985 = vmatpush.msra.mxu0 %v2323
        %2986 = vmatpush.msra.mxu0 %v2322
        %2987 = vmatpush.msra.mxu0 %v2321
        %2988 = vmatpush.msra.mxu0 %v2320
        %2989 = vmatmul.f32.gmra.mxu0 %v2567
        %v2990 = vpop.f32.mrf.mxu0
        %v2991 = vadd.f32 %v2971, %v2990
        %2992 = vdwg.mxu0
        %2993 = vmatpush.msra.mxu0 %v2351
        %2994 = vmatpush.msra.mxu0 %v2350
        %2995 = vmatpush.msra.mxu0 %v2349
        %2996 = vmatpush.msra.mxu0 %v2348
        %2997 = vmatpush.msra.mxu0 %v2347
        %2998 = vmatpush.msra.mxu0 %v2346
        %2999 = vmatpush.msra.mxu0 %v2345
        %3000 = vmatpush.msra.mxu0 %v2344
        %3001 = vmatpush.msra.mxu0 %v2343
        %3002 = vmatpush.msra.mxu0 %v2342
        %3003 = vmatpush.msra.mxu0 %v2341
        %3004 = vmatpush.msra.mxu0 %v2340
        %3005 = vmatpush.msra.mxu0 %v2339
        %3006 = vmatpush.msra.mxu0 %v2338
        %3007 = vmatpush.msra.mxu0 %v2337
        %3008 = vmatpush.msra.mxu0 %v2336
        %3009 = vmatmul.f32.gmra.mxu0 %v2568
        %v3010 = vpop.f32.mrf.mxu0
        %v3011 = vadd.f32 %v2991, %v3010
        %3012 = vdwg.mxu0
        %3013 = vmatpush.msra.mxu0 %v2367
        %3014 = vmatpush.msra.mxu0 %v2366
        %3015 = vmatpush.msra.mxu0 %v2365
        %3016 = vmatpush.msra.mxu0 %v2364
        %3017 = vmatpush.msra.mxu0 %v2363
        %3018 = vmatpush.msra.mxu0 %v2362
        %3019 = vmatpush.msra.mxu0 %v2361
        %3020 = vmatpush.msra.mxu0 %v2360
        %3021 = vmatpush.msra.mxu0 %v2359
        %3022 = vmatpush.msra.mxu0 %v2358
        %3023 = vmatpush.msra.mxu0 %v2357
        %3024 = vmatpush.msra.mxu0 %v2356
        %3025 = vmatpush.msra.mxu0 %v2355
        %3026 = vmatpush.msra.mxu0 %v2354
        %3027 = vmatpush.msra.mxu0 %v2353
        %3028 = vmatpush.msra.mxu0 %v2352
        %3029 = vmatmul.f32.gmra.mxu0 %v2569
        %v3030 = vpop.f32.mrf.mxu0
        %v3031 = vadd.f32 %v3011, %v3030
        %3032 = vdwg.mxu0
        %3033 = vmatpush.msra.mxu0 %v2383
        %3034 = vmatpush.msra.mxu0 %v2382
        %3035 = vmatpush.msra.mxu0 %v2381
        %3036 = vmatpush.msra.mxu0 %v2380
        %3037 = vmatpush.msra.mxu0 %v2379
        %3038 = vmatpush.msra.mxu0 %v2378
        %3039 = vmatpush.msra.mxu0 %v2377
        %3040 = vmatpush.msra.mxu0 %v2376
        %3041 = vmatpush.msra.mxu0 %v2375
        %3042 = vmatpush.msra.mxu0 %v2374
        %3043 = vmatpush.msra.mxu0 %v2373
        %3044 = vmatpush.msra.mxu0 %v2372
        %3045 = vmatpush.msra.mxu0 %v2371
        %3046 = vmatpush.msra.mxu0 %v2370
        %3047 = vmatpush.msra.mxu0 %v2369
        %3048 = vmatpush.msra.mxu0 %v2368
        %3049 = vmatmul.f32.gmra.mxu0 %v2570
        %v3050 = vpop.f32.mrf.mxu0
        %v3051 = vadd.f32 %v3031, %v3050
        %3052 = vdwg.mxu0
        %3053 = vmatpush.msra.mxu0 %v2399
        %3054 = vmatpush.msra.mxu0 %v2398
        %3055 = vmatpush.msra.mxu0 %v2397
        %3056 = vmatpush.msra.mxu0 %v2396
        %3057 = vmatpush.msra.mxu0 %v2395
        %3058 = vmatpush.msra.mxu0 %v2394
        %3059 = vmatpush.msra.mxu0 %v2393
        %3060 = vmatpush.msra.mxu0 %v2392
        %3061 = vmatpush.msra.mxu0 %v2391
        %3062 = vmatpush.msra.mxu0 %v2390
        %3063 = vmatpush.msra.mxu0 %v2389
        %3064 = vmatpush.msra.mxu0 %v2388
        %3065 = vmatpush.msra.mxu0 %v2387
        %3066 = vmatpush.msra.mxu0 %v2386
        %3067 = vmatpush.msra.mxu0 %v2385
        %3068 = vmatpush.msra.mxu0 %v2384
        %3069 = vmatmul.f32.gmra.mxu0 %v2571
        %v3070 = vpop.f32.mrf.mxu0
        %v3071 = vadd.f32 %v3051, %v3070
        %3072 = vdwg.mxu0
        %3073 = vmatpush.msra.mxu0 %v2415
        %3074 = vmatpush.msra.mxu0 %v2414
        %3075 = vmatpush.msra.mxu0 %v2413
        %3076 = vmatpush.msra.mxu0 %v2412
        %3077 = vmatpush.msra.mxu0 %v2411
        %3078 = vmatpush.msra.mxu0 %v2410
        %3079 = vmatpush.msra.mxu0 %v2409
        %3080 = vmatpush.msra.mxu0 %v2408
        %3081 = vmatpush.msra.mxu0 %v2407
        %3082 = vmatpush.msra.mxu0 %v2406
        %3083 = vmatpush.msra.mxu0 %v2405
        %3084 = vmatpush.msra.mxu0 %v2404
        %3085 = vmatpush.msra.mxu0 %v2403
        %3086 = vmatpush.msra.mxu0 %v2402
        %3087 = vmatpush.msra.mxu0 %v2401
        %3088 = vmatpush.msra.mxu0 %v2400
        %3089 = vmatmul.f32.gmra.mxu0 %v2572
        %v3090 = vpop.f32.mrf.mxu0
        %v3091 = vadd.f32 %v3071, %v3090
        %3092 = vdwg.mxu0
        %3093 = vmatpush.msra.mxu0 %v2431
        %3094 = vmatpush.msra.mxu0 %v2430
        %3095 = vmatpush.msra.mxu0 %v2429
        %3096 = vmatpush.msra.mxu0 %v2428
        %3097 = vmatpush.msra.mxu0 %v2427
        %3098 = vmatpush.msra.mxu0 %v2426
        %3099 = vmatpush.msra.mxu0 %v2425
        %3100 = vmatpush.msra.mxu0 %v2424
        %3101 = vmatpush.msra.mxu0 %v2423
        %3102 = vmatpush.msra.mxu0 %v2422
        %3103 = vmatpush.msra.mxu0 %v2421
        %3104 = vmatpush.msra.mxu0 %v2420
        %3105 = vmatpush.msra.mxu0 %v2419
        %3106 = vmatpush.msra.mxu0 %v2418
        %3107 = vmatpush.msra.mxu0 %v2417
        %3108 = vmatpush.msra.mxu0 %v2416
        %3109 = vmatmul.f32.gmra.mxu0 %v2573
        %v3110 = vpop.f32.mrf.mxu0
        %v3111 = vadd.f32 %v3091, %v3110
        %3112 = vdwg.mxu0
        %3113 = vmatpush.msra.mxu0 %v2447
        %3114 = vmatpush.msra.mxu0 %v2446
        %3115 = vmatpush.msra.mxu0 %v2445
        %3116 = vmatpush.msra.mxu0 %v2444
        %3117 = vmatpush.msra.mxu0 %v2443
        %3118 = vmatpush.msra.mxu0 %v2442
        %3119 = vmatpush.msra.mxu0 %v2441
        %3120 = vmatpush.msra.mxu0 %v2440
        %3121 = vmatpush.msra.mxu0 %v2439
        %3122 = vmatpush.msra.mxu0 %v2438
        %3123 = vmatpush.msra.mxu0 %v2437
        %3124 = vmatpush.msra.mxu0 %v2436
        %3125 = vmatpush.msra.mxu0 %v2435
        %3126 = vmatpush.msra.mxu0 %v2434
        %3127 = vmatpush.msra.mxu0 %v2433
        %3128 = vmatpush.msra.mxu0 %v2432
        %3129 = vmatmul.f32.gmra.mxu0 %v2574
        %v3130 = vpop.f32.mrf.mxu0
        %v3131 = vadd.f32 %v3111, %v3130
        %3132 = vdwg.mxu0
        %3133 = vmatpush.msra.mxu0 %v2463
        %3134 = vmatpush.msra.mxu0 %v2462
        %3135 = vmatpush.msra.mxu0 %v2461
        %3136 = vmatpush.msra.mxu0 %v2460
        %3137 = vmatpush.msra.mxu0 %v2459
        %3138 = vmatpush.msra.mxu0 %v2458
        %3139 = vmatpush.msra.mxu0 %v2457
        %3140 = vmatpush.msra.mxu0 %v2456
        %3141 = vmatpush.msra.mxu0 %v2455
        %3142 = vmatpush.msra.mxu0 %v2454
        %3143 = vmatpush.msra.mxu0 %v2453
        %3144 = vmatpush.msra.mxu0 %v2452
        %3145 = vmatpush.msra.mxu0 %v2451
        %3146 = vmatpush.msra.mxu0 %v2450
        %3147 = vmatpush.msra.mxu0 %v2449
        %3148 = vmatpush.msra.mxu0 %v2448
        %3149 = vmatmul.f32.gmra.mxu0 %v2575
        %v3150 = vpop.f32.mrf.mxu0
        %v3151 = vadd.f32 %v3131, %v3150
        %3152 = vdwg.mxu0
        %3153 = vmatpush.msra.mxu0 %v2479
        %3154 = vmatpush.msra.mxu0 %v2478
        %3155 = vmatpush.msra.mxu0 %v2477
        %3156 = vmatpush.msra.mxu0 %v2476
        %3157 = vmatpush.msra.mxu0 %v2475
        %3158 = vmatpush.msra.mxu0 %v2474
        %3159 = vmatpush.msra.mxu0 %v2473
        %3160 = vmatpush.msra.mxu0 %v2472
        %3161 = vmatpush.msra.mxu0 %v2471
        %3162 = vmatpush.msra.mxu0 %v2470
        %3163 = vmatpush.msra.mxu0 %v2469
        %3164 = vmatpush.msra.mxu0 %v2468
        %3165 = vmatpush.msra.mxu0 %v2467
        %3166 = vmatpush.msra.mxu0 %v2466
        %3167 = vmatpush.msra.mxu0 %v2465
        %3168 = vmatpush.msra.mxu0 %v2464
        %3169 = vmatmul.f32.gmra.mxu0 %v2576
        %v3170 = vpop.f32.mrf.mxu0
        %v3171 = vadd.f32 %v3151, %v3170
        %3172 = vdwg.mxu0
        %3173 = vmatpush.msra.mxu0 %v2495
        %3174 = vmatpush.msra.mxu0 %v2494
        %3175 = vmatpush.msra.mxu0 %v2493
        %3176 = vmatpush.msra.mxu0 %v2492
        %3177 = vmatpush.msra.mxu0 %v2491
        %3178 = vmatpush.msra.mxu0 %v2490
        %3179 = vmatpush.msra.mxu0 %v2489
        %3180 = vmatpush.msra.mxu0 %v2488
        %3181 = vmatpush.msra.mxu0 %v2487
        %3182 = vmatpush.msra.mxu0 %v2486
        %3183 = vmatpush.msra.mxu0 %v2485
        %3184 = vmatpush.msra.mxu0 %v2484
        %3185 = vmatpush.msra.mxu0 %v2483
        %3186 = vmatpush.msra.mxu0 %v2482
        %3187 = vmatpush.msra.mxu0 %v2481
        %3188 = vmatpush.msra.mxu0 %v2480
        %3189 = vmatmul.f32.gmra.mxu0 %v2577
        %v3190 = vpop.f32.mrf.mxu0
        %v3191 = vadd.f32 %v3171, %v3190
        %3192 = vdwg.mxu0
        %3193 = vmatpush.msra.mxu0 %v2511
        %3194 = vmatpush.msra.mxu0 %v2510
        %3195 = vmatpush.msra.mxu0 %v2509
        %3196 = vmatpush.msra.mxu0 %v2508
        %3197 = vmatpush.msra.mxu0 %v2507
        %3198 = vmatpush.msra.mxu0 %v2506
        %3199 = vmatpush.msra.mxu0 %v2505
        %3200 = vmatpush.msra.mxu0 %v2504
        %3201 = vmatpush.msra.mxu0 %v2503
        %3202 = vmatpush.msra.mxu0 %v2502
        %3203 = vmatpush.msra.mxu0 %v2501
        %3204 = vmatpush.msra.mxu0 %v2500
        %3205 = vmatpush.msra.mxu0 %v2499
        %3206 = vmatpush.msra.mxu0 %v2498
        %3207 = vmatpush.msra.mxu0 %v2497
        %3208 = vmatpush.msra.mxu0 %v2496
        %3209 = vmatmul.f32.gmra.mxu0 %v2578
        %v3210 = vpop.f32.mrf.mxu0
        %v3211 = vadd.f32 %v3191, %v3210
        %3212 = vdwg.mxu0
        %3213 = vmatpush.msra.mxu0 %v2527
        %3214 = vmatpush.msra.mxu0 %v2526
        %3215 = vmatpush.msra.mxu0 %v2525
        %3216 = vmatpush.msra.mxu0 %v2524
        %3217 = vmatpush.msra.mxu0 %v2523
        %3218 = vmatpush.msra.mxu0 %v2522
        %3219 = vmatpush.msra.mxu0 %v2521
        %3220 = vmatpush.msra.mxu0 %v2520
        %3221 = vmatpush.msra.mxu0 %v2519
        %3222 = vmatpush.msra.mxu0 %v2518
        %3223 = vmatpush.msra.mxu0 %v2517
        %3224 = vmatpush.msra.mxu0 %v2516
        %3225 = vmatpush.msra.mxu0 %v2515
        %3226 = vmatpush.msra.mxu0 %v2514
        %3227 = vmatpush.msra.mxu0 %v2513
        %3228 = vmatpush.msra.mxu0 %v2512
        %3229 = vmatmul.f32.gmra.mxu0 %v2579
        %v3230 = vpop.f32.mrf.mxu0
        %v3231 = vadd.f32 %v3211, %v3230
        %3232 = vdwg.mxu0
        %3233 = vmatpush.msra.mxu0 %v2543
        %3234 = vmatpush.msra.mxu0 %v2542
        %3235 = vmatpush.msra.mxu0 %v2541
        %3236 = vmatpush.msra.mxu0 %v2540
        %3237 = vmatpush.msra.mxu0 %v2539
        %3238 = vmatpush.msra.mxu0 %v2538
        %3239 = vmatpush.msra.mxu0 %v2537
        %3240 = vmatpush.msra.mxu0 %v2536
        %3241 = vmatpush.msra.mxu0 %v2535
        %3242 = vmatpush.msra.mxu0 %v2534
        %3243 = vmatpush.msra.mxu0 %v2533
        %3244 = vmatpush.msra.mxu0 %v2532
        %3245 = vmatpush.msra.mxu0 %v2531
        %3246 = vmatpush.msra.mxu0 %v2530
        %3247 = vmatpush.msra.mxu0 %v2529
        %3248 = vmatpush.msra.mxu0 %v2528
        %3249 = vmatmul.f32.gmra.mxu0 %v2580
        %v3250 = vpop.f32.mrf.mxu0
        %v3251 = vadd.f32 %v3231, %v3250
        %3252 = vdwg.mxu0
        %v3253 = vmax.f32 %v3251, 0.0
        %v3254 = vld [vmem:[#allocation16] sm:$0x1]
        %v3255 = vmul.f32 %v3253, %v3254
        %vm3256 = vcmask 1040384
        %v3257 = vsel %vm3256, %v3255, 0.0
        %3258 = vadd.xlane.f32.xlu0 %v3257
        %v3259 = vpop.xlane.xlu0 %3258
        %v3260 = vld [vmem:[#allocation6] sm:$0x1]
        %v3261 = vadd.f32 %v3259, %v3260
        %3263 = vset.pattern.permute.xlu0 0
        %3264 = vperm.xlu0 %3263, %v3261
        %v3265 = vpop.permute.xlu0 %3264
        %3267 = vst [vmem:[%s418] sm:$0x1] %v3265
        %s3268 = sand.u32 %s231, 1
        %s3269 = scalar_lea.sflag [#allocation9], %s3268
        %s3270 = sand.u32 %s231, 1
        %s3271 = scalar_lea.vmem [#allocation18], %s3270
        // Predicated region
        $region81: #{tpu_custom_call.1} parent=55 // pred_check
          %p3272 = pneg %p241
        $region82: #{tpu_custom_call.1} parent=55 // pred_check_branch
          %3274 = sbr.rel (%p3272) target = $region84
        $region83: #{tpu_custom_call.1} parent=55 // pred_region
          %3276 = vsyncadd %s3269, 0
          %s3277 = scalar_lea.hbm %s9, %s29
          %s3279 = sshll.u32 %s3271, 4
          %s3280 = int_to_ptr.vmem [resolvable:$true] %s3279
          %s3281 = sshll.u32 %s3277, 4
          %s3282 = int_to_ptr.hbm [resolvable:$true] %s3281
          %3284 = dma.vmem_to_hbm [thread:$0]  %s3280, 16, %s3282, %s3269
        $region84: #{tpu_custom_call.1} parent=55 // pred_fallthru
          _
      $region56: #{tpu_custom_call.1} parent=5 // pred_fallthru
        _
      %p3285 = scmp.le.s32.totalorder 2, %s24
      // Predicated region
      $region85: #{tpu_custom_call.1} parent=5 // pred_check
        %p3286 = pneg %p3285
      $region86: #{tpu_custom_call.1} parent=5 // pred_check_branch
        %3288 = sbr.rel (%p3286) target = $region88
      $region87: #{tpu_custom_call.1} parent=5 // pred_region
        %s3289 = ssub.s32 %s24, 2
        // Predicated region
        $region89: #{tpu_custom_call.1} parent=87 // pred_check
          %p3290 = pneg %p247
        $region90: #{tpu_custom_call.1} parent=87 // pred_check_branch
          %3292 = sbr.rel (%p3290) target = $region92
        $region91: #{tpu_custom_call.1} parent=87 // pred_region
          %s3293 = sand.u32 %s232, 1
          %s3294 = scalar_lea.sflag [#allocation9], %s3293
          %s3295 = sand.u32 %s232, 1
          %s3296 = scalar_lea.vmem [#allocation18], %s3295
          %3298 = dma.done %s3294, 16
        $region92: #{tpu_custom_call.1} parent=87 // pred_fallthru
          _
      $region88: #{tpu_custom_call.1} parent=5 // pred_fallthru
        _
    $region6: #{tpu_custom_call.1} parent=1 // loop_footer
      %s28 = sadd.s32 1, %s24
    $region7: #{tpu_custom_call.1} parent=1 // loop_footer_branch
      %23 = sbr.rel target = $region3
    $region8: #{tpu_custom_call.1} parent=1 // loop_exit
      _
    %3299 = vsyncpa [#allocation8], 1
    %s3300 = scalar_lea.sflag [#allocation8], 1
    %3301 = vsyncpa %s3300, 1
    %3302 = vsyncpa [#allocation11], 1
    %3303 = vsyncpa [#allocation14], 1
    %3304 = vsyncpa [#allocation17], 1
    %3305 = vsyncpa [#allocation9], 1
    %s3306 = scalar_lea.sflag [#allocation9], 1
    %3307 = vsyncpa %s3306, 1

</llo_original>
